<compile_context>
chip_gen: v6e
topology: v6e:2x2x1
jax: 0.10.0
libtpu: 0.0.40
codegen_flags: <defaults>
</compile_context>

<pallas_src>
import functools
import math

import jax
import jax.numpy as jnp
from jax.experimental import pallas as pl
from jax.experimental.pallas import tpu as pltpu

_COMPUTE_DTYPE = jnp.bfloat16
_LN_EPS = 1e-5
_LANE = 128


def _round_up(n, m):
    return ((n + m - 1) // m) * m


# ----------------------------- in-kernel helpers ----------------------------


def _layer_norm(z, g, b):
    """Channel LayerNorm in f32. z: [T, C] f32, g/b: [1, C] f32."""
    mu = jnp.mean(z, axis=-1, keepdims=True)
    var = jnp.mean(jnp.square(z - mu), axis=-1, keepdims=True)
    zn = (z - mu) * jax.lax.rsqrt(var + _LN_EPS)
    return zn * g + b


def _shift_rows(p, d):
    """Return s with s[t] = p[t + d], zero-filled outside [0, T). p: [T, C]."""
    if d == 0:
        return p
    t = p.shape[0]
    # pltpu.roll == np.roll:  rolled[i] = p[(i - shift) % T]; shift = (-d) % T
    rolled = pltpu.roll(p, shift=(-d) % t, axis=0)          # rolled[i] = p[(i+d) % T]
    ridx = jax.lax.broadcasted_iota(jnp.int32, (t, 1), 0)
    ok = jnp.logical_and(ridx + d >= 0, ridx + d < t)
    return jnp.where(ok, rolled, jnp.zeros((), p.dtype))


# ------------------------------ Pallas kernels ------------------------------


def _encoder_layer_kernel(len_ref, x_ref,
                          wqkv_ref, bqkv_ref, rk_ref, rv_ref, wo_ref, bo_ref,
                          g1_ref, be1_ref,
                          w1_ref, b1_ref, w2_ref, b2_ref,
                          g2_ref, be2_ref,
                          o_ref):
    """One full encoder layer (MHA block + FFN block) for one batch element."""
    T = x_ref.shape[1]
    H = x_ref.shape[2]
    nwin, dkp = rk_ref.shape                     # nwin = 2*window_size + 1
    nh = wo_ref.shape[0] // dkp
    win = (nwin - 1) // 2
    KH, F = w1_ref.shape                         # KH = K * H
    K = KH // H
    pad_l = (K - 1) // 2

    b = pl.program_id(0)
    L = len_ref[b]

    x = x_ref[0]                                 # [T, H] bf16
    cdt = x.dtype
    xf = x.astype(jnp.float32)

    # ---------------- multi-head attention with windowed rel-pos ----------------
    # Fused QKV projection; q columns are pre-scaled by 1/sqrt(dk) at pack time.
    qkv = jnp.dot(x, wqkv_ref[...], preferred_element_type=jnp.float32)
    qkv = (qkv + bqkv_ref[...]).astype(cdt)      # [T, nh*3*dkp], 128-lane aligned heads

    col = jax.lax.broadcasted_iota(jnp.int32, (T, T), 1)
    row = jax.lax.broadcasted_iota(jnp.int32, (T, T), 0)
    dmat = col - row                             # relative offset j - i
    key_valid = col < L                          # in-kernel key mask from x_lengths
    # band masks hoisted out of the head loop (identical for every head)
    band_masks = [dmat == (r - win) for r in range(nwin)]

    rk = rk_ref[...]                             # [nwin, dkp] bf16
    rv = rv_ref[...]                             # [nwin, dkp] bf16

    heads = []
    for h in range(nh):
        base = 3 * dkp * h                       # lane-aligned (multiple of 128)
        qh = qkv[:, base:base + dkp]
        kh = qkv[:, base + dkp:base + 2 * dkp]
        vh = qkv[:, base + 2 * dkp:base + 3 * dkp]

        # content scores (MXU, contraction dkp >= 128)
        scores = jax.lax.dot_general(qh, kh, (((1,), (1,)), ((), ())),
                                     preferred_element_type=jnp.float32)
        # windowed relative-key bias: small [T, dkp] @ [dkp, nwin] MXU matmul,
        # scattered onto diagonals (j - i == r - w) with hoisted masks.
        srel = jax.lax.dot_general(qh, rk, (((1,), (1,)), ((), ())),
                                   preferred_element_type=jnp.float32)   # [T, nwin]
        for r in range(nwin):
            scores = scores + jnp.where(band_masks[r], srel[:, r:r + 1], 0.0)

        scores = jnp.where(key_valid, scores, jnp.float32(-1e4))
        mx = jnp.max(scores, axis=-1, keepdims=True)
        e = jnp.exp(scores - mx)
        p = e * pl.reciprocal(jnp.sum(e, axis=-1, keepdims=True), approx=True)

        oh = jnp.dot(p.astype(cdt), vh, preferred_element_type=jnp.float32)  # [T, dkp]

        # relative-value contribution: extract the (2w+1) diagonals of p once,
        # then one [T, nwin] @ [nwin, dkp] MXU matmul.
        pband = jnp.concatenate(
            [jnp.sum(jnp.where(band_masks[r], p, 0.0), axis=-1, keepdims=True)
             for r in range(nwin)], axis=1)                                  # [T, nwin]
        oh = oh + jnp.dot(pband.astype(cdt), rv, preferred_element_type=jnp.float32)

        heads.append(oh.astype(cdt))

    # single output projection over all heads (zero-padded rows in wo absorb
    # the per-head lane padding exactly).
    ocat = jnp.concatenate(heads, axis=1)                        # [T, nh*dkp] bf16
    y = jnp.dot(ocat, wo_ref[...], preferred_element_type=jnp.float32) + bo_ref[...]

    # residual + LayerNorm 1 (f32)
    x1 = _layer_norm(xf + y, g1_ref[...], be1_ref[...])          # [T, H] f32

    # -------------------------------- FFN block --------------------------------
    ridx = jax.lax.broadcasted_iota(jnp.int32, (T, 1), 0)
    seq = ridx < L
    x1m = jnp.where(seq, x1, 0.0)                                # conv_1 input = x * mask

    # conv1 (same padding) as one [T, K*H] @ [K*H, F] matmul: shift the narrow
    # f32 input per tap (pltpu.roll along sublanes) and lane-concatenate.
    xcat = jnp.concatenate([_shift_rows(x1m, k - pad_l) for k in range(K)],
                           axis=1).astype(cdt)                   # [T, K*H] bf16
    hmid = jnp.dot(xcat, w1_ref[...], preferred_element_type=jnp.float32) + b1_ref[...]
    hmid = jnp.where(seq, jnp.maximum(hmid, 0.0), 0.0)           # ReLU, conv_2 input * mask

    # conv2 as one [T, K*F] @ [K*F, H] matmul
    hcat = jnp.concatenate([_shift_rows(hmid, k - pad_l) for k in range(K)],
                           axis=1).astype(cdt)                   # [T, K*F] bf16
    y2 = jnp.dot(hcat, w2_ref[...], preferred_element_type=jnp.float32) + b2_ref[...]
    y2 = jnp.where(seq, y2, 0.0)                                 # FFN returns y * mask

    # residual + LayerNorm 2 (f32)
    o_ref[0] = _layer_norm(x1 + y2, g2_ref[...], be2_ref[...]).astype(o_ref.dtype)


def _proj_kernel(len_ref, x_ref, w_ref, b_ref, xo_ref, so_ref):
    """Final mask, 1x1 projection to (m, logs) (lane-padded), output mask."""
    T = x_ref.shape[1]
    b = pl.program_id(0)
    L = len_ref[b]

    x = x_ref[0]                                                 # [T, H] bf16
    ridx = jax.lax.broadcasted_iota(jnp.int32, (T, 1), 0)
    seq = ridx < L
    xm = jnp.where(seq, x, jnp.zeros((), x.dtype))               # x = x * x_mask

    stats = jnp.dot(xm, w_ref[...], preferred_element_type=jnp.float32) + b_ref[...]
    stats = jnp.where(seq, stats, 0.0)                           # stats = proj(x) * x_mask

    xo_ref[0] = xm.astype(xo_ref.dtype)
    so_ref[0] = stats.astype(so_ref.dtype)


# ------------------------------ Pallas wrappers ------------------------------


def _resident(shape):
    """Full-block weight input that stays resident across the batch grid."""
    zeros = (0,) * len(shape)
    return pl.BlockSpec(shape, lambda b, lens, _z=zeros: _z)


def encoder_layer(x, lens, lw):
    B, T, H = x.shape
    nwin, dkp = lw["rk"].shape
    w3 = lw["wqkv"].shape[1]
    nhdkp = lw["wo"].shape[0]
    KH, F = lw["w1"].shape
    KF = lw["w2"].shape[0]
    return pl.pallas_call(
        _encoder_layer_kernel,
        out_shape=jax.ShapeDtypeStruct((B, T, H), x.dtype),
        grid_spec=pltpu.PrefetchScalarGridSpec(
            num_scalar_prefetch=1,
            grid=(B,),
            in_specs=[
                pl.BlockSpec((1, T, H), lambda b, lens: (b, 0, 0)),
                _resident((H, w3)), _resident((1, w3)),
                _resident((nwin, dkp)), _resident((nwin, dkp)),
                _resident((nhdkp, H)), _resident((1, H)),
                _resident((1, H)), _resident((1, H)),
                _resident((KH, F)), _resident((1, F)),
                _resident((KF, H)), _resident((1, H)),
                _resident((1, H)), _resident((1, H)),
            ],
            out_specs=pl.BlockSpec((1, T, H), lambda b, lens: (b, 0, 0)),
        ),
        compiler_params=pltpu.CompilerParams(
            dimension_semantics=("parallel",),
            vmem_limit_bytes=64 * 1024 * 1024),
    )(lens, x,
      lw["wqkv"], lw["bqkv"], lw["rk"], lw["rv"], lw["wo"], lw["bo"],
      lw["g1"], lw["be1"], lw["w1"], lw["b1"], lw["w2"], lw["b2"],
      lw["g2"], lw["be2"])


def final_proj(x, lens, w_p, b_p):
    B, T, H = x.shape
    Np = w_p.shape[1]
    return pl.pallas_call(
        _proj_kernel,
        out_shape=(jax.ShapeDtypeStruct((B, T, H), jnp.float32),
                   jax.ShapeDtypeStruct((B, T, Np), jnp.float32)),
        grid_spec=pltpu.PrefetchScalarGridSpec(
            num_scalar_prefetch=1,
            grid=(B,),
            in_specs=[
                pl.BlockSpec((1, T, H), lambda b, lens: (b, 0, 0)),
                _resident((H, Np)), _resident((1, Np)),
            ],
            out_specs=[pl.BlockSpec((1, T, H), lambda b, lens: (b, 0, 0)),
                       pl.BlockSpec((1, T, Np), lambda b, lens: (b, 0, 0))],
        ),
        compiler_params=pltpu.CompilerParams(
            dimension_semantics=("parallel",),
            vmem_limit_bytes=64 * 1024 * 1024),
    )(lens, x, w_p, b_p)


# -------------------------------- parameters --------------------------------


def init_params(key, cfg):
    """Parameters in the PyTorch module's layout (f32)."""
    V = cfg["n_vocab"]
    H = cfg["hidden_channels"]
    F = cfg["filter_channels"]
    nh = cfg["n_heads"]
    nl = cfg["n_layers"]
    K = cfg["kernel_size"]
    w = cfg["window_size"]
    out_c = cfg["out_channels"]
    dk = H // nh

    keys = iter(jax.random.split(key, 64))

    def nrm(shape, std=0.02):
        return std * jax.random.normal(next(keys), shape, jnp.float32)

    params = {
        # nn.Embedding(n_vocab, hidden), init N(0, hidden^-0.5)
        "emb": (H ** -0.5) * jax.random.normal(next(keys), (V, H), jnp.float32),
        # nn.Conv1d(hidden, 2*out, 1)
        "proj_w": nrm((2 * out_c, H)),
        "proj_b": jnp.zeros((2 * out_c,), jnp.float32),
        "layers": [],
    }
    for _ in range(nl):
        lp = {
            "wq": nrm((H, H)), "bq": jnp.zeros((H,), jnp.float32),
            "wk": nrm((H, H)), "bk": jnp.zeros((H,), jnp.float32),
            "wv": nrm((H, H)), "bv": jnp.zeros((H,), jnp.float32),
            "wo": nrm((H, H)), "bo": jnp.zeros((H,), jnp.float32),
            "rel_k": (dk ** -0.5) * jax.random.normal(next(keys), (2 * w + 1, dk), jnp.float32),
            "rel_v": (dk ** -0.5) * jax.random.normal(next(keys), (2 * w + 1, dk), jnp.float32),
            "ln1_g": jnp.ones((H,), jnp.float32), "ln1_b": jnp.zeros((H,), jnp.float32),
            "w1": nrm((F, H, K)), "b1": jnp.zeros((F,), jnp.float32),
            "w2": nrm((H, F, K)), "b2": jnp.zeros((H,), jnp.float32),
            "ln2_g": jnp.ones((H,), jnp.float32), "ln2_b": jnp.zeros((H,), jnp.float32),
        }
        params["layers"].append(lp)
    return params


def pack_params(params, cfg):
    """One-time packing into kernel-friendly layouts (run once, not per call).

    - QKV fused per head, each head padded to a 128-lane boundary; 1/sqrt(dk)
      folded into W_q / b_q.
    - W_o packed head-major with zero rows for the lane padding.
    - rel_k / rel_v lane-padded, bf16.
    - conv weights reshaped to [K*C_in, C_out] for the im2col matmul.
    - final projection lane-padded to a multiple of 128 output channels.
    """
    H = cfg["hidden_channels"]
    F = cfg["filter_channels"]
    nh = cfg["n_heads"]
    K = cfg["kernel_size"]
    out_c = cfg["out_channels"]
    dk = H // nh
    dkp = _round_up(dk, _LANE)
    scale = 1.0 / math.sqrt(dk)
    cdt = _COMPUTE_DTYPE

    def pad_cols(a, w):
        return jnp.pad(a, ((0, 0), (0, w - a.shape[1])))

    def pad_rows(a, r):
        return jnp.pad(a, ((0, r - a.shape[0]), (0, 0)))

    Np = _round_up(2 * out_c, _LANE)
    packed = {
        "emb": params["emb"],
        "proj_w": pad_cols(params["proj_w"].T, Np).astype(cdt),          # [H, Np]
        "proj_b": pad_cols(params["proj_b"].reshape(1, -1), Np),         # [1, Np] f32
        "layers": [],
    }

    for lp in params["layers"]:
        qkv_blocks, bias_blocks = [], []
        for h in range(nh):
            sl = slice(h * dk, (h + 1) * dk)
            qkv_blocks += [pad_cols(lp["wq"].T[:, sl] * scale, dkp),
                           pad_cols(lp["wk"].T[:, sl], dkp),
                           pad_cols(lp["wv"].T[:, sl], dkp)]
            bias_blocks += [pad_cols(lp["bq"][sl].reshape(1, -1) * scale, dkp),
                            pad_cols(lp["bk"][sl].reshape(1, -1), dkp),
                            pad_cols(lp["bv"][sl].reshape(1, -1), dkp)]
        wqkv = jnp.concatenate(qkv_blocks, axis=1).astype(cdt)           # [H, nh*3*dkp]
        bqkv = jnp.concatenate(bias_blocks, axis=1)                      # [1, nh*3*dkp] f32
        wo = jnp.concatenate(
            [pad_rows(lp["wo"].T[h * dk:(h + 1) * dk, :], dkp) for h in range(nh)],
            axis=0).astype(cdt)                                          # [nh*dkp, H]

        lw = {
            "wqkv": wqkv, "bqkv": bqkv,
            "rk": pad_cols(lp["rel_k"], dkp).astype(cdt),                # [2w+1, dkp]
            "rv": pad_cols(lp["rel_v"], dkp).astype(cdt),
            "wo": wo, "bo": lp["bo"].reshape(1, -1),
            "g1": lp["ln1_g"].reshape(1, -1), "be1": lp["ln1_b"].reshape(1, -1),
            # conv1d weight [C_out, C_in, K] -> [K*C_in, C_out]
            "w1": jnp.transpose(lp["w1"], (2, 1, 0)).reshape(K * H, F).astype(cdt),
            "b1": lp["b1"].reshape(1, -1),
            "w2": jnp.transpose(lp["w2"], (2, 1, 0)).reshape(K * F, H).astype(cdt),
            "b2": lp["b2"].reshape(1, -1),
            "g2": lp["ln2_g"].reshape(1, -1), "be2": lp["ln2_b"].reshape(1, -1),
        }
        packed["layers"].append(lw)
    return packed


# ---------------------------------- forward ----------------------------------


def text_encoder_forward(packed, tokens, x_lengths, cfg):
    H = cfg["hidden_channels"]
    out_c = cfg["out_channels"]
    B, T = tokens.shape
    cdt = _COMPUTE_DTYPE

    lens = x_lengths.astype(jnp.int32)
    x_mask = (jnp.arange(T)[None, :] < lens[:, None]).astype(jnp.float32)   # [B, T]

    # ---- token embedding: gather + sqrt(H) scale + mask (wrapper-side) ----
    x = jnp.take(packed["emb"], tokens, axis=0) * jnp.float32(math.sqrt(H))
    x = (x * x_mask[:, :, None]).astype(cdt)                                # [B, T, H]

    # ---- fused encoder layers (MHA + FFN per kernel) ----
    for lw in packed["layers"]:
        x = encoder_layer(x, lens, lw)

    # ---- final mask + 1x1 projection into (m, logs), masked ----
    x_out, stats = final_proj(x, lens, packed["proj_w"], packed["proj_b"])
    stats = stats[..., :2 * out_c]                                          # drop lane pad
    m_, logs = stats[..., :out_c], stats[..., out_c:]

    # return in PyTorch layout: x [B, H, T], m/logs [B, out, T], x_mask [B, 1, T]
    return (x_out.transpose(0, 2, 1), m_.transpose(0, 2, 1),
            logs.transpose(0, 2, 1), x_mask[:, None, :])


if __name__ == "__main__":
    cfg = dict(
        n_vocab=50, out_channels=16, hidden_channels=32, filter_channels=64,
        n_heads=2, n_layers=2, kernel_size=3, p_dropout=0.1, window_size=4,
    )
    key = jax.random.PRNGKey(0)
    pkey, tkey = jax.random.split(key)
    params = init_params(pkey, cfg)
    packed = pack_params(params, cfg)          # one-time weight packing

    B, T = 2, 16
    tokens = jax.random.randint(tkey, (B, T), 0, cfg["n_vocab"], dtype=jnp.int32)
    x_lengths = jnp.array([16, 11], dtype=jnp.int32)

    fwd = jax.jit(functools.partial(text_encoder_forward, cfg=cfg))
    x, m, logs, x_mask = fwd(packed, tokens, x_lengths)
    jax.block_until_ready((x, m, logs, x_mask))

    assert x.shape == (B, cfg["hidden_channels"], T)
    assert m.shape == (B, cfg["out_channels"], T)
    assert logs.shape == (B, cfg["out_channels"], T)
    assert x_mask.shape == (B, 1, T)
    assert bool(jnp.all(jnp.isfinite(x))) and bool(jnp.all(jnp.isfinite(m)))
    assert bool(jnp.all(jnp.isfinite(logs)))
    print("KERNEL_OK")
</pallas_src>

<mosaic_0001>
module attributes {stable_mosaic.version = 11 : i64} {
  func.func @_proj_kernel(%arg0: i32, %arg1: memref<2xi32, #tpu.memory_space<smem>>, %arg2: memref<1x16x32xbf16, #tpu.memory_space<vmem>>, %arg3: memref<32x128xbf16, #tpu.memory_space<vmem>>, %arg4: memref<1x128xf32, #tpu.memory_space<vmem>>, %arg5: memref<1x16x32xf32, #tpu.memory_space<vmem>>, %arg6: memref<1x16x128xf32, #tpu.memory_space<vmem>>) attributes {dimension_semantics = [#tpu.dimension_semantics<parallel>], iteration_bounds = array<i64: 2>, scalar_prefetch = 1 : i64, scratch_operands = 0 : i64, tpu.core_type = #tpu.core_type<tc>, window_params = [{transform_indices = @transform_0, window_bounds = array<i64: 1, 16, 32>}, {pipeline_mode = #tpu.pipeline_mode<synchronous>, transform_indices = @transform_1, window_bounds = array<i64: 32, 128>}, {pipeline_mode = #tpu.pipeline_mode<synchronous>, transform_indices = @transform_2, window_bounds = array<i64: 1, 128>}, {transform_indices = @transform_3, window_bounds = array<i64: 1, 16, 32>}, {transform_indices = @transform_4, window_bounds = array<i64: 1, 16, 128>}]} {
    %0 = arith.index_cast %arg0 : i32 to index
    %1 = memref.load %arg1[%0] : memref<2xi32, #tpu.memory_space<smem>>
    %c0 = arith.constant 0 : index
    %c0_0 = arith.constant 0 : index
    %c0_1 = arith.constant 0 : index
    %2 = vector.load %arg2[%c0, %c0_0, %c0_1] : memref<1x16x32xbf16, #tpu.memory_space<vmem>>, vector<1x16x32xbf16>
    %3 = vector.shape_cast %2 : vector<1x16x32xbf16> to vector<16x32xbf16>
    %4 = tpu.iota {dimensions = array<i32: 0>} : vector<16x1xi32>
    %5 = vector.broadcast %1 : i32 to vector<16x1xi32>
    %6 = arith.cmpi slt, %4, %5 : vector<16x1xi32>
    %cst = arith.constant 0.000000e+00 : bf16
    %7 = vector.shape_cast %6 : vector<16x1xi1> to vector<16x1xi1>
    %8 = vector.broadcast %7 : vector<16x1xi1> to vector<16x32xi1>
    %9 = vector.broadcast %cst : bf16 to vector<16x32xbf16>
    %10 = arith.select %8, %3, %9 : vector<16x32xi1>, vector<16x32xbf16>
    %c0_2 = arith.constant 0 : index
    %c0_3 = arith.constant 0 : index
    %11 = vector.load %arg3[%c0_2, %c0_3] : memref<32x128xbf16, #tpu.memory_space<vmem>>, vector<32x128xbf16>
    %cst_4 = arith.constant dense<0.000000e+00> : vector<16x128xf32>
    %12 = tpu.matmul %10, %11, %cst_4 {dimension_numbers = #tpu.dot_dimension_numbers<[1], [0], [0], [1], [0, 0, 1, 1], [], []>} : vector<16x32xbf16>, vector<32x128xbf16>, vector<16x128xf32> -> vector<16x128xf32>
    %c0_5 = arith.constant 0 : index
    %c0_6 = arith.constant 0 : index
    %13 = vector.load %arg4[%c0_5, %c0_6] : memref<1x128xf32, #tpu.memory_space<vmem>>, vector<1x128xf32>
    %14 = vector.broadcast %13 : vector<1x128xf32> to vector<16x128xf32>
    %15 = arith.addf %12, %14 : vector<16x128xf32>
    %cst_7 = arith.constant 0.000000e+00 : f32
    %16 = vector.shape_cast %6 : vector<16x1xi1> to vector<16x1xi1>
    %17 = vector.broadcast %16 : vector<16x1xi1> to vector<16x128xi1>
    %18 = vector.broadcast %cst_7 : f32 to vector<16x128xf32>
    %19 = arith.select %17, %15, %18 : vector<16x128xi1>, vector<16x128xf32>
    %20 = arith.extf %10 : vector<16x32xbf16> to vector<16x32xf32>
    %c0_8 = arith.constant 0 : index
    %c0_9 = arith.constant 0 : index
    %c0_10 = arith.constant 0 : index
    %21 = vector.load %arg5[%c0_8, %c0_9, %c0_10] : memref<1x16x32xf32, #tpu.memory_space<vmem>>, vector<1x16x32xf32>
    %22 = vector.shape_cast %21 : vector<1x16x32xf32> to vector<16x32xf32>
    %23 = vector.shape_cast %20 : vector<16x32xf32> to vector<1x16x32xf32>
    tpu.vector_store %arg5[%c0_8, %c0_9, %c0_10], %23 {strides = array<i32>} : memref<1x16x32xf32, #tpu.memory_space<vmem>>, vector<1x16x32xf32>,
    %c0_11 = arith.constant 0 : index
    %c0_12 = arith.constant 0 : index
    %c0_13 = arith.constant 0 : index
    %24 = vector.load %arg6[%c0_11, %c0_12, %c0_13] : memref<1x16x128xf32, #tpu.memory_space<vmem>>, vector<1x16x128xf32>
    %25 = vector.shape_cast %24 : vector<1x16x128xf32> to vector<16x128xf32>
    %26 = vector.shape_cast %19 : vector<16x128xf32> to vector<1x16x128xf32>
    tpu.vector_store %arg6[%c0_11, %c0_12, %c0_13], %26 {strides = array<i32>} : memref<1x16x128xf32, #tpu.memory_space<vmem>>, vector<1x16x128xf32>,
    return
  }
  func.func @transform_0(%arg0: i32, %arg1: memref<2xi32, #tpu.memory_space<smem>>) -> (i32, i32, i32) {
    %c0_i32 = arith.constant 0 : i32
    %c0_i32_0 = arith.constant 0 : i32
    %c0_i32_1 = arith.constant 0 : i32
    return %arg0, %c0_i32, %c0_i32_0 : i32, i32, i32
  }
  func.func @transform_1(%arg0: i32, %arg1: memref<2xi32, #tpu.memory_space<smem>>) -> (i32, i32) {
    %c0_i32 = arith.constant 0 : i32
    %c0_i32_0 = arith.constant 0 : i32
    %c0_i32_1 = arith.constant 0 : i32
    return %c0_i32, %c0_i32_0 : i32, i32
  }
  func.func @transform_2(%arg0: i32, %arg1: memref<2xi32, #tpu.memory_space<smem>>) -> (i32, i32) {
    %c0_i32 = arith.constant 0 : i32
    %c0_i32_0 = arith.constant 0 : i32
    %c0_i32_1 = arith.constant 0 : i32
    return %c0_i32, %c0_i32_0 : i32, i32
  }
  func.func @transform_3(%arg0: i32, %arg1: memref<2xi32, #tpu.memory_space<smem>>) -> (i32, i32, i32) {
    %c0_i32 = arith.constant 0 : i32
    %c0_i32_0 = arith.constant 0 : i32
    %c0_i32_1 = arith.constant 0 : i32
    return %arg0, %c0_i32, %c0_i32_0 : i32, i32, i32
  }
  func.func @transform_4(%arg0: i32, %arg1: memref<2xi32, #tpu.memory_space<smem>>) -> (i32, i32, i32) {
    %c0_i32 = arith.constant 0 : i32
    %c0_i32_0 = arith.constant 0 : i32
    %c0_i32_1 = arith.constant 0 : i32
    return %arg0, %c0_i32, %c0_i32_0 : i32, i32, i32
  }
}

module attributes {stable_mosaic.version = 11 : i64} {
  func.func @_encoder_layer_kernel(%arg0: i32, %arg1: memref<2xi32, #tpu.memory_space<smem>>, %arg2: memref<1x16x32xbf16, #tpu.memory_space<vmem>>, %arg3: memref<32x768xbf16, #tpu.memory_space<vmem>>, %arg4: memref<1x768xf32, #tpu.memory_space<vmem>>, %arg5: memref<9x128xbf16, #tpu.memory_space<vmem>>, %arg6: memref<9x128xbf16, #tpu.memory_space<vmem>>, %arg7: memref<256x32xbf16, #tpu.memory_space<vmem>>, %arg8: memref<1x32xf32, #tpu.memory_space<vmem>>, %arg9: memref<1x32xf32, #tpu.memory_space<vmem>>, %arg10: memref<1x32xf32, #tpu.memory_space<vmem>>, %arg11: memref<96x64xbf16, #tpu.memory_space<vmem>>, %arg12: memref<1x64xf32, #tpu.memory_space<vmem>>, %arg13: memref<192x32xbf16, #tpu.memory_space<vmem>>, %arg14: memref<1x32xf32, #tpu.memory_space<vmem>>, %arg15: memref<1x32xf32, #tpu.memory_space<vmem>>, %arg16: memref<1x32xf32, #tpu.memory_space<vmem>>, %arg17: memref<1x16x32xbf16, #tpu.memory_space<vmem>>) attributes {dimension_semantics = [#tpu.dimension_semantics<parallel>], iteration_bounds = array<i64: 2>, scalar_prefetch = 1 : i64, scratch_operands = 0 : i64, tpu.core_type = #tpu.core_type<tc>, window_params = [{transform_indices = @transform_0, window_bounds = array<i64: 1, 16, 32>}, {pipeline_mode = #tpu.pipeline_mode<synchronous>, transform_indices = @transform_1, window_bounds = array<i64: 32, 768>}, {pipeline_mode = #tpu.pipeline_mode<synchronous>, transform_indices = @transform_2, window_bounds = array<i64: 1, 768>}, {pipeline_mode = #tpu.pipeline_mode<synchronous>, transform_indices = @transform_3, window_bounds = array<i64: 9, 128>}, {pipeline_mode = #tpu.pipeline_mode<synchronous>, transform_indices = @transform_4, window_bounds = array<i64: 9, 128>}, {pipeline_mode = #tpu.pipeline_mode<synchronous>, transform_indices = @transform_5, window_bounds = array<i64: 256, 32>}, {pipeline_mode = #tpu.pipeline_mode<synchronous>, transform_indices = @transform_6, window_bounds = array<i64: 1, 32>}, {pipeline_mode = #tpu.pipeline_mode<synchronous>, transform_indices = @transform_7, window_bounds = array<i64: 1, 32>}, {pipeline_mode = #tpu.pipeline_mode<synchronous>, transform_indices = @transform_8, window_bounds = array<i64: 1, 32>}, {pipeline_mode = #tpu.pipeline_mode<synchronous>, transform_indices = @transform_9, window_bounds = array<i64: 96, 64>}, {pipeline_mode = #tpu.pipeline_mode<synchronous>, transform_indices = @transform_10, window_bounds = array<i64: 1, 64>}, {pipeline_mode = #tpu.pipeline_mode<synchronous>, transform_indices = @transform_11, window_bounds = array<i64: 192, 32>}, {pipeline_mode = #tpu.pipeline_mode<synchronous>, transform_indices = @transform_12, window_bounds = array<i64: 1, 32>}, {pipeline_mode = #tpu.pipeline_mode<synchronous>, transform_indices = @transform_13, window_bounds = array<i64: 1, 32>}, {pipeline_mode = #tpu.pipeline_mode<synchronous>, transform_indices = @transform_14, window_bounds = array<i64: 1, 32>}, {transform_indices = @transform_15, window_bounds = array<i64: 1, 16, 32>}]} {
    %0 = arith.index_cast %arg0 : i32 to index
    %1 = memref.load %arg1[%0] : memref<2xi32, #tpu.memory_space<smem>>
    %c0 = arith.constant 0 : index
    %c0_0 = arith.constant 0 : index
    %c0_1 = arith.constant 0 : index
    %2 = vector.load %arg2[%c0, %c0_0, %c0_1] : memref<1x16x32xbf16, #tpu.memory_space<vmem>>, vector<1x16x32xbf16>
    %3 = vector.shape_cast %2 : vector<1x16x32xbf16> to vector<16x32xbf16>
    %4 = arith.extf %3 : vector<16x32xbf16> to vector<16x32xf32>
    %c0_2 = arith.constant 0 : index
    %c0_3 = arith.constant 0 : index
    %5 = vector.load %arg3[%c0_2, %c0_3] : memref<32x768xbf16, #tpu.memory_space<vmem>>, vector<32x768xbf16>
    %cst = arith.constant dense<0.000000e+00> : vector<16x768xf32>
    %6 = tpu.matmul %3, %5, %cst {dimension_numbers = #tpu.dot_dimension_numbers<[1], [0], [0], [1], [0, 0, 1, 1], [], []>} : vector<16x32xbf16>, vector<32x768xbf16>, vector<16x768xf32> -> vector<16x768xf32>
    %c0_4 = arith.constant 0 : index
    %c0_5 = arith.constant 0 : index
    %7 = vector.load %arg4[%c0_4, %c0_5] : memref<1x768xf32, #tpu.memory_space<vmem>>, vector<1x768xf32>
    %8 = vector.broadcast %7 : vector<1x768xf32> to vector<16x768xf32>
    %9 = arith.addf %6, %8 : vector<16x768xf32>
    %10 = arith.truncf %9 : vector<16x768xf32> to vector<16x768xbf16>
    %11 = tpu.iota {dimensions = array<i32: 1>} : vector<16x16xi32>
    %12 = tpu.iota {dimensions = array<i32: 0>} : vector<16x16xi32>
    %13 = arith.subi %11, %12 : vector<16x16xi32>
    %14 = vector.broadcast %1 : i32 to vector<16x16xi32>
    %15 = arith.cmpi slt, %11, %14 : vector<16x16xi32>
    %c-4_i32 = arith.constant -4 : i32
    %16 = vector.broadcast %c-4_i32 : i32 to vector<16x16xi32>
    %17 = arith.cmpi eq, %13, %16 : vector<16x16xi32>
    %c-3_i32 = arith.constant -3 : i32
    %18 = vector.broadcast %c-3_i32 : i32 to vector<16x16xi32>
    %19 = arith.cmpi eq, %13, %18 : vector<16x16xi32>
    %c-2_i32 = arith.constant -2 : i32
    %20 = vector.broadcast %c-2_i32 : i32 to vector<16x16xi32>
    %21 = arith.cmpi eq, %13, %20 : vector<16x16xi32>
    %c-1_i32 = arith.constant -1 : i32
    %22 = vector.broadcast %c-1_i32 : i32 to vector<16x16xi32>
    %23 = arith.cmpi eq, %13, %22 : vector<16x16xi32>
    %c0_i32 = arith.constant 0 : i32
    %24 = vector.broadcast %c0_i32 : i32 to vector<16x16xi32>
    %25 = arith.cmpi eq, %13, %24 : vector<16x16xi32>
    %c1_i32 = arith.constant 1 : i32
    %26 = vector.broadcast %c1_i32 : i32 to vector<16x16xi32>
    %27 = arith.cmpi eq, %13, %26 : vector<16x16xi32>
    %c2_i32 = arith.constant 2 : i32
    %28 = vector.broadcast %c2_i32 : i32 to vector<16x16xi32>
    %29 = arith.cmpi eq, %13, %28 : vector<16x16xi32>
    %c3_i32 = arith.constant 3 : i32
    %30 = vector.broadcast %c3_i32 : i32 to vector<16x16xi32>
    %31 = arith.cmpi eq, %13, %30 : vector<16x16xi32>
    %c4_i32 = arith.constant 4 : i32
    %32 = vector.broadcast %c4_i32 : i32 to vector<16x16xi32>
    %33 = arith.cmpi eq, %13, %32 : vector<16x16xi32>
    %c0_6 = arith.constant 0 : index
    %c0_7 = arith.constant 0 : index
    %34 = vector.load %arg5[%c0_6, %c0_7] : memref<9x128xbf16, #tpu.memory_space<vmem>>, vector<9x128xbf16>
    %c0_8 = arith.constant 0 : index
    %c0_9 = arith.constant 0 : index
    %35 = vector.load %arg6[%c0_8, %c0_9] : memref<9x128xbf16, #tpu.memory_space<vmem>>, vector<9x128xbf16>
    %36 = vector.extract_strided_slice %10 {offsets = [0, 0], sizes = [16, 128], strides = [1, 1]} : vector<16x768xbf16> to vector<16x128xbf16>
    %37 = vector.extract_strided_slice %10 {offsets = [0, 128], sizes = [16, 128], strides = [1, 1]} : vector<16x768xbf16> to vector<16x128xbf16>
    %38 = vector.extract_strided_slice %10 {offsets = [0, 256], sizes = [16, 128], strides = [1, 1]} : vector<16x768xbf16> to vector<16x128xbf16>
    %cst_10 = arith.constant dense<0.000000e+00> : vector<16x16xf32>
    %39 = tpu.matmul %36, %37, %cst_10 {dimension_numbers = #tpu.dot_dimension_numbers<[1], [1], [0], [0], [0, 0, 1, 0], [], []>} : vector<16x128xbf16>, vector<16x128xbf16>, vector<16x16xf32> -> vector<16x16xf32>
    %cst_11 = arith.constant dense<0.000000e+00> : vector<16x9xf32>
    %40 = tpu.matmul %36, %34, %cst_11 {dimension_numbers = #tpu.dot_dimension_numbers<[1], [1], [0], [0], [0, 0, 1, 0], [], []>} : vector<16x128xbf16>, vector<9x128xbf16>, vector<16x9xf32> -> vector<16x9xf32>
    %41 = vector.extract_strided_slice %40 {offsets = [0, 0], sizes = [16, 1], strides = [1, 1]} : vector<16x9xf32> to vector<16x1xf32>
    %cst_12 = arith.constant 0.000000e+00 : f32
    %42 = vector.shape_cast %41 : vector<16x1xf32> to vector<16x1xf32>
    %43 = vector.broadcast %42 : vector<16x1xf32> to vector<16x16xf32>
    %44 = vector.broadcast %cst_12 : f32 to vector<16x16xf32>
    %45 = arith.select %17, %43, %44 : vector<16x16xi1>, vector<16x16xf32>
    %46 = arith.addf %39, %45 : vector<16x16xf32>
    %47 = vector.extract_strided_slice %40 {offsets = [0, 1], sizes = [16, 1], strides = [1, 1]} : vector<16x9xf32> to vector<16x1xf32>
    %cst_13 = arith.constant 0.000000e+00 : f32
    %48 = vector.shape_cast %47 : vector<16x1xf32> to vector<16x1xf32>
    %49 = vector.broadcast %48 : vector<16x1xf32> to vector<16x16xf32>
    %50 = vector.broadcast %cst_13 : f32 to vector<16x16xf32>
    %51 = arith.select %19, %49, %50 : vector<16x16xi1>, vector<16x16xf32>
    %52 = arith.addf %46, %51 : vector<16x16xf32>
    %53 = vector.extract_strided_slice %40 {offsets = [0, 2], sizes = [16, 1], strides = [1, 1]} : vector<16x9xf32> to vector<16x1xf32>
    %cst_14 = arith.constant 0.000000e+00 : f32
    %54 = vector.shape_cast %53 : vector<16x1xf32> to vector<16x1xf32>
    %55 = vector.broadcast %54 : vector<16x1xf32> to vector<16x16xf32>
    %56 = vector.broadcast %cst_14 : f32 to vector<16x16xf32>
    %57 = arith.select %21, %55, %56 : vector<16x16xi1>, vector<16x16xf32>
    %58 = arith.addf %52, %57 : vector<16x16xf32>
    %59 = vector.extract_strided_slice %40 {offsets = [0, 3], sizes = [16, 1], strides = [1, 1]} : vector<16x9xf32> to vector<16x1xf32>
    %cst_15 = arith.constant 0.000000e+00 : f32
    %60 = vector.shape_cast %59 : vector<16x1xf32> to vector<16x1xf32>
    %61 = vector.broadcast %60 : vector<16x1xf32> to vector<16x16xf32>
    %62 = vector.broadcast %cst_15 : f32 to vector<16x16xf32>
    %63 = arith.select %23, %61, %62 : vector<16x16xi1>, vector<16x16xf32>
    %64 = arith.addf %58, %63 : vector<16x16xf32>
    %65 = vector.extract_strided_slice %40 {offsets = [0, 4], sizes = [16, 1], strides = [1, 1]} : vector<16x9xf32> to vector<16x1xf32>
    %cst_16 = arith.constant 0.000000e+00 : f32
    %66 = vector.shape_cast %65 : vector<16x1xf32> to vector<16x1xf32>
    %67 = vector.broadcast %66 : vector<16x1xf32> to vector<16x16xf32>
    %68 = vector.broadcast %cst_16 : f32 to vector<16x16xf32>
    %69 = arith.select %25, %67, %68 : vector<16x16xi1>, vector<16x16xf32>
    %70 = arith.addf %64, %69 : vector<16x16xf32>
    %71 = vector.extract_strided_slice %40 {offsets = [0, 5], sizes = [16, 1], strides = [1, 1]} : vector<16x9xf32> to vector<16x1xf32>
    %cst_17 = arith.constant 0.000000e+00 : f32
    %72 = vector.shape_cast %71 : vector<16x1xf32> to vector<16x1xf32>
    %73 = vector.broadcast %72 : vector<16x1xf32> to vector<16x16xf32>
    %74 = vector.broadcast %cst_17 : f32 to vector<16x16xf32>
    %75 = arith.select %27, %73, %74 : vector<16x16xi1>, vector<16x16xf32>
    %76 = arith.addf %70, %75 : vector<16x16xf32>
    %77 = vector.extract_strided_slice %40 {offsets = [0, 6], sizes = [16, 1], strides = [1, 1]} : vector<16x9xf32> to vector<16x1xf32>
    %cst_18 = arith.constant 0.000000e+00 : f32
    %78 = vector.shape_cast %77 : vector<16x1xf32> to vector<16x1xf32>
    %79 = vector.broadcast %78 : vector<16x1xf32> to vector<16x16xf32>
    %80 = vector.broadcast %cst_18 : f32 to vector<16x16xf32>
    %81 = arith.select %29, %79, %80 : vector<16x16xi1>, vector<16x16xf32>
    %82 = arith.addf %76, %81 : vector<16x16xf32>
    %83 = vector.extract_strided_slice %40 {offsets = [0, 7], sizes = [16, 1], strides = [1, 1]} : vector<16x9xf32> to vector<16x1xf32>
    %cst_19 = arith.constant 0.000000e+00 : f32
    %84 = vector.shape_cast %83 : vector<16x1xf32> to vector<16x1xf32>
    %85 = vector.broadcast %84 : vector<16x1xf32> to vector<16x16xf32>
    %86 = vector.broadcast %cst_19 : f32 to vector<16x16xf32>
    %87 = arith.select %31, %85, %86 : vector<16x16xi1>, vector<16x16xf32>
    %88 = arith.addf %82, %87 : vector<16x16xf32>
    %89 = vector.extract_strided_slice %40 {offsets = [0, 8], sizes = [16, 1], strides = [1, 1]} : vector<16x9xf32> to vector<16x1xf32>
    %cst_20 = arith.constant 0.000000e+00 : f32
    %90 = vector.shape_cast %89 : vector<16x1xf32> to vector<16x1xf32>
    %91 = vector.broadcast %90 : vector<16x1xf32> to vector<16x16xf32>
    %92 = vector.broadcast %cst_20 : f32 to vector<16x16xf32>
    %93 = arith.select %33, %91, %92 : vector<16x16xi1>, vector<16x16xf32>
    %94 = arith.addf %88, %93 : vector<16x16xf32>
    %cst_21 = arith.constant -1.000000e+04 : f32
    %95 = vector.broadcast %cst_21 : f32 to vector<16x16xf32>
    %96 = arith.select %15, %94, %95 : vector<16x16xi1>, vector<16x16xf32>
    %cst_22 = arith.constant dense<0xFF800000> : vector<16xf32>
    %97 = vector.multi_reduction <maximumf>, %96, %cst_22 [1] : vector<16x16xf32> to vector<16xf32>
    %98 = vector.shape_cast %97 : vector<16xf32> to vector<16x1xf32>
    %99 = vector.broadcast %98 : vector<16x1xf32> to vector<16x16xf32>
    %100 = arith.subf %96, %99 : vector<16x16xf32>
    %101 = math.exp %100 : vector<16x16xf32>
    %cst_23 = arith.constant dense<0.000000e+00> : vector<16xf32>
    %102 = vector.multi_reduction <add>, %101, %cst_23 [1] : vector<16x16xf32> to vector<16xf32>
    %103 = vector.shape_cast %102 : vector<16xf32> to vector<16x1xf32>
    %104 = tpu.reciprocal %103 {approx = true} : vector<16x1xf32> -> vector<16x1xf32>
    %105 = vector.broadcast %104 : vector<16x1xf32> to vector<16x16xf32>
    %106 = arith.mulf %101, %105 : vector<16x16xf32>
    %107 = arith.truncf %106 : vector<16x16xf32> to vector<16x16xbf16>
    %cst_24 = arith.constant dense<0.000000e+00> : vector<16x128xf32>
    %108 = tpu.matmul %107, %38, %cst_24 {dimension_numbers = #tpu.dot_dimension_numbers<[1], [0], [0], [1], [0, 0, 1, 1], [], []>} : vector<16x16xbf16>, vector<16x128xbf16>, vector<16x128xf32> -> vector<16x128xf32>
    %cst_25 = arith.constant 0.000000e+00 : f32
    %109 = vector.broadcast %cst_25 : f32 to vector<16x16xf32>
    %110 = arith.select %17, %106, %109 : vector<16x16xi1>, vector<16x16xf32>
    %cst_26 = arith.constant dense<0.000000e+00> : vector<16xf32>
    %111 = vector.multi_reduction <add>, %110, %cst_26 [1] : vector<16x16xf32> to vector<16xf32>
    %112 = vector.shape_cast %111 : vector<16xf32> to vector<16x1xf32>
    %cst_27 = arith.constant 0.000000e+00 : f32
    %113 = vector.broadcast %cst_27 : f32 to vector<16x16xf32>
    %114 = arith.select %19, %106, %113 : vector<16x16xi1>, vector<16x16xf32>
    %cst_28 = arith.constant dense<0.000000e+00> : vector<16xf32>
    %115 = vector.multi_reduction <add>, %114, %cst_28 [1] : vector<16x16xf32> to vector<16xf32>
    %116 = vector.shape_cast %115 : vector<16xf32> to vector<16x1xf32>
    %cst_29 = arith.constant 0.000000e+00 : f32
    %117 = vector.broadcast %cst_29 : f32 to vector<16x16xf32>
    %118 = arith.select %21, %106, %117 : vector<16x16xi1>, vector<16x16xf32>
    %cst_30 = arith.constant dense<0.000000e+00> : vector<16xf32>
    %119 = vector.multi_reduction <add>, %118, %cst_30 [1] : vector<16x16xf32> to vector<16xf32>
    %120 = vector.shape_cast %119 : vector<16xf32> to vector<16x1xf32>
    %cst_31 = arith.constant 0.000000e+00 : f32
    %121 = vector.broadcast %cst_31 : f32 to vector<16x16xf32>
    %122 = arith.select %23, %106, %121 : vector<16x16xi1>, vector<16x16xf32>
    %cst_32 = arith.constant dense<0.000000e+00> : vector<16xf32>
    %123 = vector.multi_reduction <add>, %122, %cst_32 [1] : vector<16x16xf32> to vector<16xf32>
    %124 = vector.shape_cast %123 : vector<16xf32> to vector<16x1xf32>
    %cst_33 = arith.constant 0.000000e+00 : f32
    %125 = vector.broadcast %cst_33 : f32 to vector<16x16xf32>
    %126 = arith.select %25, %106, %125 : vector<16x16xi1>, vector<16x16xf32>
    %cst_34 = arith.constant dense<0.000000e+00> : vector<16xf32>
    %127 = vector.multi_reduction <add>, %126, %cst_34 [1] : vector<16x16xf32> to vector<16xf32>
    %128 = vector.shape_cast %127 : vector<16xf32> to vector<16x1xf32>
    %cst_35 = arith.constant 0.000000e+00 : f32
    %129 = vector.broadcast %cst_35 : f32 to vector<16x16xf32>
    %130 = arith.select %27, %106, %129 : vector<16x16xi1>, vector<16x16xf32>
    %cst_36 = arith.constant dense<0.000000e+00> : vector<16xf32>
    %131 = vector.multi_reduction <add>, %130, %cst_36 [1] : vector<16x16xf32> to vector<16xf32>
    %132 = vector.shape_cast %131 : vector<16xf32> to vector<16x1xf32>
    %cst_37 = arith.constant 0.000000e+00 : f32
    %133 = vector.broadcast %cst_37 : f32 to vector<16x16xf32>
    %134 = arith.select %29, %106, %133 : vector<16x16xi1>, vector<16x16xf32>
    %cst_38 = arith.constant dense<0.000000e+00> : vector<16xf32>
    %135 = vector.multi_reduction <add>, %134, %cst_38 [1] : vector<16x16xf32> to vector<16xf32>
    %136 = vector.shape_cast %135 : vector<16xf32> to vector<16x1xf32>
    %cst_39 = arith.constant 0.000000e+00 : f32
    %137 = vector.broadcast %cst_39 : f32 to vector<16x16xf32>
    %138 = arith.select %31, %106, %137 : vector<16x16xi1>, vector<16x16xf32>
    %cst_40 = arith.constant dense<0.000000e+00> : vector<16xf32>
    %139 = vector.multi_reduction <add>, %138, %cst_40 [1] : vector<16x16xf32> to vector<16xf32>
    %140 = vector.shape_cast %139 : vector<16xf32> to vector<16x1xf32>
    %cst_41 = arith.constant 0.000000e+00 : f32
    %141 = vector.broadcast %cst_41 : f32 to vector<16x16xf32>
    %142 = arith.select %33, %106, %141 : vector<16x16xi1>, vector<16x16xf32>
    %cst_42 = arith.constant dense<0.000000e+00> : vector<16xf32>
    %143 = vector.multi_reduction <add>, %142, %cst_42 [1] : vector<16x16xf32> to vector<16xf32>
    %144 = vector.shape_cast %143 : vector<16xf32> to vector<16x1xf32>
    %145 = tpu.concatenate %112, %116, %120, %124, %128, %132, %136, %140, %144 in 1 : vector<16x1xf32>, vector<16x1xf32>, vector<16x1xf32>, vector<16x1xf32>, vector<16x1xf32>, vector<16x1xf32>, vector<16x1xf32>, vector<16x1xf32>, vector<16x1xf32> -> vector<16x9xf32>
    %146 = arith.truncf %145 : vector<16x9xf32> to vector<16x9xbf16>
    %cst_43 = arith.constant dense<0.000000e+00> : vector<16x128xf32>
    %147 = tpu.matmul %146, %35, %cst_43 {dimension_numbers = #tpu.dot_dimension_numbers<[1], [0], [0], [1], [0, 0, 1, 1], [], []>} : vector<16x9xbf16>, vector<9x128xbf16>, vector<16x128xf32> -> vector<16x128xf32>
    %148 = arith.addf %108, %147 : vector<16x128xf32>
    %149 = arith.truncf %148 : vector<16x128xf32> to vector<16x128xbf16>
    %150 = vector.extract_strided_slice %10 {offsets = [0, 384], sizes = [16, 128], strides = [1, 1]} : vector<16x768xbf16> to vector<16x128xbf16>
    %151 = vector.extract_strided_slice %10 {offsets = [0, 512], sizes = [16, 128], strides = [1, 1]} : vector<16x768xbf16> to vector<16x128xbf16>
    %152 = vector.extract_strided_slice %10 {offsets = [0, 640], sizes = [16, 128], strides = [1, 1]} : vector<16x768xbf16> to vector<16x128xbf16>
    %cst_44 = arith.constant dense<0.000000e+00> : vector<16x16xf32>
    %153 = tpu.matmul %150, %151, %cst_44 {dimension_numbers = #tpu.dot_dimension_numbers<[1], [1], [0], [0], [0, 0, 1, 0], [], []>} : vector<16x128xbf16>, vector<16x128xbf16>, vector<16x16xf32> -> vector<16x16xf32>
    %cst_45 = arith.constant dense<0.000000e+00> : vector<16x9xf32>
    %154 = tpu.matmul %150, %34, %cst_45 {dimension_numbers = #tpu.dot_dimension_numbers<[1], [1], [0], [0], [0, 0, 1, 0], [], []>} : vector<16x128xbf16>, vector<9x128xbf16>, vector<16x9xf32> -> vector<16x9xf32>
    %155 = vector.extract_strided_slice %154 {offsets = [0, 0], sizes = [16, 1], strides = [1, 1]} : vector<16x9xf32> to vector<16x1xf32>
    %cst_46 = arith.constant 0.000000e+00 : f32
    %156 = vector.shape_cast %155 : vector<16x1xf32> to vector<16x1xf32>
    %157 = vector.broadcast %156 : vector<16x1xf32> to vector<16x16xf32>
    %158 = vector.broadcast %cst_46 : f32 to vector<16x16xf32>
    %159 = arith.select %17, %157, %158 : vector<16x16xi1>, vector<16x16xf32>
    %160 = arith.addf %153, %159 : vector<16x16xf32>
    %161 = vector.extract_strided_slice %154 {offsets = [0, 1], sizes = [16, 1], strides = [1, 1]} : vector<16x9xf32> to vector<16x1xf32>
    %cst_47 = arith.constant 0.000000e+00 : f32
    %162 = vector.shape_cast %161 : vector<16x1xf32> to vector<16x1xf32>
    %163 = vector.broadcast %162 : vector<16x1xf32> to vector<16x16xf32>
    %164 = vector.broadcast %cst_47 : f32 to vector<16x16xf32>
    %165 = arith.select %19, %163, %164 : vector<16x16xi1>, vector<16x16xf32>
    %166 = arith.addf %160, %165 : vector<16x16xf32>
    %167 = vector.extract_strided_slice %154 {offsets = [0, 2], sizes = [16, 1], strides = [1, 1]} : vector<16x9xf32> to vector<16x1xf32>
    %cst_48 = arith.constant 0.000000e+00 : f32
    %168 = vector.shape_cast %167 : vector<16x1xf32> to vector<16x1xf32>
    %169 = vector.broadcast %168 : vector<16x1xf32> to vector<16x16xf32>
    %170 = vector.broadcast %cst_48 : f32 to vector<16x16xf32>
    %171 = arith.select %21, %169, %170 : vector<16x16xi1>, vector<16x16xf32>
    %172 = arith.addf %166, %171 : vector<16x16xf32>
    %173 = vector.extract_strided_slice %154 {offsets = [0, 3], sizes = [16, 1], strides = [1, 1]} : vector<16x9xf32> to vector<16x1xf32>
    %cst_49 = arith.constant 0.000000e+00 : f32
    %174 = vector.shape_cast %173 : vector<16x1xf32> to vector<16x1xf32>
    %175 = vector.broadcast %174 : vector<16x1xf32> to vector<16x16xf32>
    %176 = vector.broadcast %cst_49 : f32 to vector<16x16xf32>
    %177 = arith.select %23, %175, %176 : vector<16x16xi1>, vector<16x16xf32>
    %178 = arith.addf %172, %177 : vector<16x16xf32>
    %179 = vector.extract_strided_slice %154 {offsets = [0, 4], sizes = [16, 1], strides = [1, 1]} : vector<16x9xf32> to vector<16x1xf32>
    %cst_50 = arith.constant 0.000000e+00 : f32
    %180 = vector.shape_cast %179 : vector<16x1xf32> to vector<16x1xf32>
    %181 = vector.broadcast %180 : vector<16x1xf32> to vector<16x16xf32>
    %182 = vector.broadcast %cst_50 : f32 to vector<16x16xf32>
    %183 = arith.select %25, %181, %182 : vector<16x16xi1>, vector<16x16xf32>
    %184 = arith.addf %178, %183 : vector<16x16xf32>
    %185 = vector.extract_strided_slice %154 {offsets = [0, 5], sizes = [16, 1], strides = [1, 1]} : vector<16x9xf32> to vector<16x1xf32>
    %cst_51 = arith.constant 0.000000e+00 : f32
    %186 = vector.shape_cast %185 : vector<16x1xf32> to vector<16x1xf32>
    %187 = vector.broadcast %186 : vector<16x1xf32> to vector<16x16xf32>
    %188 = vector.broadcast %cst_51 : f32 to vector<16x16xf32>
    %189 = arith.select %27, %187, %188 : vector<16x16xi1>, vector<16x16xf32>
    %190 = arith.addf %184, %189 : vector<16x16xf32>
    %191 = vector.extract_strided_slice %154 {offsets = [0, 6], sizes = [16, 1], strides = [1, 1]} : vector<16x9xf32> to vector<16x1xf32>
    %cst_52 = arith.constant 0.000000e+00 : f32
    %192 = vector.shape_cast %191 : vector<16x1xf32> to vector<16x1xf32>
    %193 = vector.broadcast %192 : vector<16x1xf32> to vector<16x16xf32>
    %194 = vector.broadcast %cst_52 : f32 to vector<16x16xf32>
    %195 = arith.select %29, %193, %194 : vector<16x16xi1>, vector<16x16xf32>
    %196 = arith.addf %190, %195 : vector<16x16xf32>
    %197 = vector.extract_strided_slice %154 {offsets = [0, 7], sizes = [16, 1], strides = [1, 1]} : vector<16x9xf32> to vector<16x1xf32>
    %cst_53 = arith.constant 0.000000e+00 : f32
    %198 = vector.shape_cast %197 : vector<16x1xf32> to vector<16x1xf32>
    %199 = vector.broadcast %198 : vector<16x1xf32> to vector<16x16xf32>
    %200 = vector.broadcast %cst_53 : f32 to vector<16x16xf32>
    %201 = arith.select %31, %199, %200 : vector<16x16xi1>, vector<16x16xf32>
    %202 = arith.addf %196, %201 : vector<16x16xf32>
    %203 = vector.extract_strided_slice %154 {offsets = [0, 8], sizes = [16, 1], strides = [1, 1]} : vector<16x9xf32> to vector<16x1xf32>
    %cst_54 = arith.constant 0.000000e+00 : f32
    %204 = vector.shape_cast %203 : vector<16x1xf32> to vector<16x1xf32>
    %205 = vector.broadcast %204 : vector<16x1xf32> to vector<16x16xf32>
    %206 = vector.broadcast %cst_54 : f32 to vector<16x16xf32>
    %207 = arith.select %33, %205, %206 : vector<16x16xi1>, vector<16x16xf32>
    %208 = arith.addf %202, %207 : vector<16x16xf32>
    %cst_55 = arith.constant -1.000000e+04 : f32
    %209 = vector.broadcast %cst_55 : f32 to vector<16x16xf32>
    %210 = arith.select %15, %208, %209 : vector<16x16xi1>, vector<16x16xf32>
    %cst_56 = arith.constant dense<0xFF800000> : vector<16xf32>
    %211 = vector.multi_reduction <maximumf>, %210, %cst_56 [1] : vector<16x16xf32> to vector<16xf32>
    %212 = vector.shape_cast %211 : vector<16xf32> to vector<16x1xf32>
    %213 = vector.broadcast %212 : vector<16x1xf32> to vector<16x16xf32>
    %214 = arith.subf %210, %213 : vector<16x16xf32>
    %215 = math.exp %214 : vector<16x16xf32>
    %cst_57 = arith.constant dense<0.000000e+00> : vector<16xf32>
    %216 = vector.multi_reduction <add>, %215, %cst_57 [1] : vector<16x16xf32> to vector<16xf32>
    %217 = vector.shape_cast %216 : vector<16xf32> to vector<16x1xf32>
    %218 = tpu.reciprocal %217 {approx = true} : vector<16x1xf32> -> vector<16x1xf32>
    %219 = vector.broadcast %218 : vector<16x1xf32> to vector<16x16xf32>
    %220 = arith.mulf %215, %219 : vector<16x16xf32>
    %221 = arith.truncf %220 : vector<16x16xf32> to vector<16x16xbf16>
    %cst_58 = arith.constant dense<0.000000e+00> : vector<16x128xf32>
    %222 = tpu.matmul %221, %152, %cst_58 {dimension_numbers = #tpu.dot_dimension_numbers<[1], [0], [0], [1], [0, 0, 1, 1], [], []>} : vector<16x16xbf16>, vector<16x128xbf16>, vector<16x128xf32> -> vector<16x128xf32>
    %cst_59 = arith.constant 0.000000e+00 : f32
    %223 = vector.broadcast %cst_59 : f32 to vector<16x16xf32>
    %224 = arith.select %17, %220, %223 : vector<16x16xi1>, vector<16x16xf32>
    %cst_60 = arith.constant dense<0.000000e+00> : vector<16xf32>
    %225 = vector.multi_reduction <add>, %224, %cst_60 [1] : vector<16x16xf32> to vector<16xf32>
    %226 = vector.shape_cast %225 : vector<16xf32> to vector<16x1xf32>
    %cst_61 = arith.constant 0.000000e+00 : f32
    %227 = vector.broadcast %cst_61 : f32 to vector<16x16xf32>
    %228 = arith.select %19, %220, %227 : vector<16x16xi1>, vector<16x16xf32>
    %cst_62 = arith.constant dense<0.000000e+00> : vector<16xf32>
    %229 = vector.multi_reduction <add>, %228, %cst_62 [1] : vector<16x16xf32> to vector<16xf32>
    %230 = vector.shape_cast %229 : vector<16xf32> to vector<16x1xf32>
    %cst_63 = arith.constant 0.000000e+00 : f32
    %231 = vector.broadcast %cst_63 : f32 to vector<16x16xf32>
    %232 = arith.select %21, %220, %231 : vector<16x16xi1>, vector<16x16xf32>
    %cst_64 = arith.constant dense<0.000000e+00> : vector<16xf32>
    %233 = vector.multi_reduction <add>, %232, %cst_64 [1] : vector<16x16xf32> to vector<16xf32>
    %234 = vector.shape_cast %233 : vector<16xf32> to vector<16x1xf32>
    %cst_65 = arith.constant 0.000000e+00 : f32
    %235 = vector.broadcast %cst_65 : f32 to vector<16x16xf32>
    %236 = arith.select %23, %220, %235 : vector<16x16xi1>, vector<16x16xf32>
    %cst_66 = arith.constant dense<0.000000e+00> : vector<16xf32>
    %237 = vector.multi_reduction <add>, %236, %cst_66 [1] : vector<16x16xf32> to vector<16xf32>
    %238 = vector.shape_cast %237 : vector<16xf32> to vector<16x1xf32>
    %cst_67 = arith.constant 0.000000e+00 : f32
    %239 = vector.broadcast %cst_67 : f32 to vector<16x16xf32>
    %240 = arith.select %25, %220, %239 : vector<16x16xi1>, vector<16x16xf32>
    %cst_68 = arith.constant dense<0.000000e+00> : vector<16xf32>
    %241 = vector.multi_reduction <add>, %240, %cst_68 [1] : vector<16x16xf32> to vector<16xf32>
    %242 = vector.shape_cast %241 : vector<16xf32> to vector<16x1xf32>
    %cst_69 = arith.constant 0.000000e+00 : f32
    %243 = vector.broadcast %cst_69 : f32 to vector<16x16xf32>
    %244 = arith.select %27, %220, %243 : vector<16x16xi1>, vector<16x16xf32>
    %cst_70 = arith.constant dense<0.000000e+00> : vector<16xf32>
    %245 = vector.multi_reduction <add>, %244, %cst_70 [1] : vector<16x16xf32> to vector<16xf32>
    %246 = vector.shape_cast %245 : vector<16xf32> to vector<16x1xf32>
    %cst_71 = arith.constant 0.000000e+00 : f32
    %247 = vector.broadcast %cst_71 : f32 to vector<16x16xf32>
    %248 = arith.select %29, %220, %247 : vector<16x16xi1>, vector<16x16xf32>
    %cst_72 = arith.constant dense<0.000000e+00> : vector<16xf32>
    %249 = vector.multi_reduction <add>, %248, %cst_72 [1] : vector<16x16xf32> to vector<16xf32>
    %250 = vector.shape_cast %249 : vector<16xf32> to vector<16x1xf32>
    %cst_73 = arith.constant 0.000000e+00 : f32
    %251 = vector.broadcast %cst_73 : f32 to vector<16x16xf32>
    %252 = arith.select %31, %220, %251 : vector<16x16xi1>, vector<16x16xf32>
    %cst_74 = arith.constant dense<0.000000e+00> : vector<16xf32>
    %253 = vector.multi_reduction <add>, %252, %cst_74 [1] : vector<16x16xf32> to vector<16xf32>
    %254 = vector.shape_cast %253 : vector<16xf32> to vector<16x1xf32>
    %cst_75 = arith.constant 0.000000e+00 : f32
    %255 = vector.broadcast %cst_75 : f32 to vector<16x16xf32>
    %256 = arith.select %33, %220, %255 : vector<16x16xi1>, vector<16x16xf32>
    %cst_76 = arith.constant dense<0.000000e+00> : vector<16xf32>
    %257 = vector.multi_reduction <add>, %256, %cst_76 [1] : vector<16x16xf32> to vector<16xf32>
    %258 = vector.shape_cast %257 : vector<16xf32> to vector<16x1xf32>
    %259 = tpu.concatenate %226, %230, %234, %238, %242, %246, %250, %254, %258 in 1 : vector<16x1xf32>, vector<16x1xf32>, vector<16x1xf32>, vector<16x1xf32>, vector<16x1xf32>, vector<16x1xf32>, vector<16x1xf32>, vector<16x1xf32>, vector<16x1xf32> -> vector<16x9xf32>
    %260 = arith.truncf %259 : vector<16x9xf32> to vector<16x9xbf16>
    %cst_77 = arith.constant dense<0.000000e+00> : vector<16x128xf32>
    %261 = tpu.matmul %260, %35, %cst_77 {dimension_numbers = #tpu.dot_dimension_numbers<[1], [0], [0], [1], [0, 0, 1, 1], [], []>} : vector<16x9xbf16>, vector<9x128xbf16>, vector<16x128xf32> -> vector<16x128xf32>
    %262 = arith.addf %222, %261 : vector<16x128xf32>
    %263 = arith.truncf %262 : vector<16x128xf32> to vector<16x128xbf16>
    %264 = tpu.concatenate %149, %263 in 1 : vector<16x128xbf16>, vector<16x128xbf16> -> vector<16x256xbf16>
    %c0_78 = arith.constant 0 : index
    %c0_79 = arith.constant 0 : index
    %265 = vector.load %arg7[%c0_78, %c0_79] : memref<256x32xbf16, #tpu.memory_space<vmem>>, vector<256x32xbf16>
    %cst_80 = arith.constant dense<0.000000e+00> : vector<16x32xf32>
    %266 = tpu.matmul %264, %265, %cst_80 {dimension_numbers = #tpu.dot_dimension_numbers<[1], [0], [0], [1], [0, 0, 1, 1], [], []>} : vector<16x256xbf16>, vector<256x32xbf16>, vector<16x32xf32> -> vector<16x32xf32>
    %c0_81 = arith.constant 0 : index
    %c0_82 = arith.constant 0 : index
    %267 = vector.load %arg8[%c0_81, %c0_82] : memref<1x32xf32, #tpu.memory_space<vmem>>, vector<1x32xf32>
    %268 = vector.broadcast %267 : vector<1x32xf32> to vector<16x32xf32>
    %269 = arith.addf %266, %268 : vector<16x32xf32>
    %270 = arith.addf %4, %269 : vector<16x32xf32>
    %c0_83 = arith.constant 0 : index
    %c0_84 = arith.constant 0 : index
    %271 = vector.load %arg9[%c0_83, %c0_84] : memref<1x32xf32, #tpu.memory_space<vmem>>, vector<1x32xf32>
    %c0_85 = arith.constant 0 : index
    %c0_86 = arith.constant 0 : index
    %272 = vector.load %arg10[%c0_85, %c0_86] : memref<1x32xf32, #tpu.memory_space<vmem>>, vector<1x32xf32>
    %cst_87 = arith.constant dense<0.000000e+00> : vector<16xf32>
    %273 = vector.multi_reduction <add>, %270, %cst_87 [1] : vector<16x32xf32> to vector<16xf32>
    %274 = vector.shape_cast %273 : vector<16xf32> to vector<16x1xf32>
    %cst_88 = arith.constant 3.200000e+01 : f32
    %275 = vector.broadcast %cst_88 : f32 to vector<16x1xf32>
    %276 = arith.divf %274, %275 : vector<16x1xf32>
    %277 = vector.broadcast %276 : vector<16x1xf32> to vector<16x32xf32>
    %278 = arith.subf %270, %277 : vector<16x32xf32>
    %279 = arith.mulf %278, %278 : vector<16x32xf32>
    %cst_89 = arith.constant dense<0.000000e+00> : vector<16xf32>
    %280 = vector.multi_reduction <add>, %279, %cst_89 [1] : vector<16x32xf32> to vector<16xf32>
    %281 = vector.shape_cast %280 : vector<16xf32> to vector<16x1xf32>
    %cst_90 = arith.constant 3.200000e+01 : f32
    %282 = vector.broadcast %cst_90 : f32 to vector<16x1xf32>
    %283 = arith.divf %281, %282 : vector<16x1xf32>
    %284 = vector.broadcast %276 : vector<16x1xf32> to vector<16x32xf32>
    %285 = arith.subf %270, %284 : vector<16x32xf32>
    %cst_91 = arith.constant 9.99999974E-6 : f32
    %286 = vector.broadcast %cst_91 : f32 to vector<16x1xf32>
    %287 = arith.addf %283, %286 : vector<16x1xf32>
    %288 = math.rsqrt %287 : vector<16x1xf32>
    %289 = vector.broadcast %288 : vector<16x1xf32> to vector<16x32xf32>
    %290 = arith.mulf %285, %289 : vector<16x32xf32>
    %291 = vector.broadcast %271 : vector<1x32xf32> to vector<16x32xf32>
    %292 = arith.mulf %290, %291 : vector<16x32xf32>
    %293 = vector.broadcast %272 : vector<1x32xf32> to vector<16x32xf32>
    %294 = arith.addf %292, %293 : vector<16x32xf32>
    %295 = tpu.iota {dimensions = array<i32: 0>} : vector<16x1xi32>
    %296 = vector.broadcast %1 : i32 to vector<16x1xi32>
    %297 = arith.cmpi slt, %295, %296 : vector<16x1xi32>
    %cst_92 = arith.constant 0.000000e+00 : f32
    %298 = vector.shape_cast %297 : vector<16x1xi1> to vector<16x1xi1>
    %299 = vector.broadcast %298 : vector<16x1xi1> to vector<16x32xi1>
    %300 = vector.broadcast %cst_92 : f32 to vector<16x32xf32>
    %301 = arith.select %299, %294, %300 : vector<16x32xi1>, vector<16x32xf32>
    %c1_i32_93 = arith.constant 1 : i32
    %302 = tpu.dynamic_rotate %301 by %c1_i32_93 dim 0 : vector<16x32xf32>, i32 -> vector<16x32xf32>
    %303 = tpu.iota {dimensions = array<i32: 0>} : vector<16x1xi32>
    %c-1_i32_94 = arith.constant -1 : i32
    %304 = vector.broadcast %c-1_i32_94 : i32 to vector<16x1xi32>
    %305 = arith.addi %303, %304 : vector<16x1xi32>
    %c0_i32_95 = arith.constant 0 : i32
    %306 = vector.broadcast %c0_i32_95 : i32 to vector<16x1xi32>
    %307 = arith.cmpi sge, %305, %306 : vector<16x1xi32>
    %c-1_i32_96 = arith.constant -1 : i32
    %308 = vector.broadcast %c-1_i32_96 : i32 to vector<16x1xi32>
    %309 = arith.addi %303, %308 : vector<16x1xi32>
    %c16_i32 = arith.constant 16 : i32
    %310 = vector.broadcast %c16_i32 : i32 to vector<16x1xi32>
    %311 = arith.cmpi slt, %309, %310 : vector<16x1xi32>
    %312 = arith.andi %307, %311 : vector<16x1xi1>
    %cst_97 = arith.constant 0.000000e+00 : f32
    %313 = vector.shape_cast %312 : vector<16x1xi1> to vector<16x1xi1>
    %314 = vector.broadcast %313 : vector<16x1xi1> to vector<16x32xi1>
    %315 = vector.broadcast %cst_97 : f32 to vector<16x32xf32>
    %316 = arith.select %314, %302, %315 : vector<16x32xi1>, vector<16x32xf32>
    %c15_i32 = arith.constant 15 : i32
    %317 = tpu.dynamic_rotate %301 by %c15_i32 dim 0 : vector<16x32xf32>, i32 -> vector<16x32xf32>
    %318 = tpu.iota {dimensions = array<i32: 0>} : vector<16x1xi32>
    %c1_i32_98 = arith.constant 1 : i32
    %319 = vector.broadcast %c1_i32_98 : i32 to vector<16x1xi32>
    %320 = arith.addi %318, %319 : vector<16x1xi32>
    %c0_i32_99 = arith.constant 0 : i32
    %321 = vector.broadcast %c0_i32_99 : i32 to vector<16x1xi32>
    %322 = arith.cmpi sge, %320, %321 : vector<16x1xi32>
    %c1_i32_100 = arith.constant 1 : i32
    %323 = vector.broadcast %c1_i32_100 : i32 to vector<16x1xi32>
    %324 = arith.addi %318, %323 : vector<16x1xi32>
    %c16_i32_101 = arith.constant 16 : i32
    %325 = vector.broadcast %c16_i32_101 : i32 to vector<16x1xi32>
    %326 = arith.cmpi slt, %324, %325 : vector<16x1xi32>
    %327 = arith.andi %322, %326 : vector<16x1xi1>
    %cst_102 = arith.constant 0.000000e+00 : f32
    %328 = vector.shape_cast %327 : vector<16x1xi1> to vector<16x1xi1>
    %329 = vector.broadcast %328 : vector<16x1xi1> to vector<16x32xi1>
    %330 = vector.broadcast %cst_102 : f32 to vector<16x32xf32>
    %331 = arith.select %329, %317, %330 : vector<16x32xi1>, vector<16x32xf32>
    %332 = tpu.concatenate %316, %301, %331 in 1 : vector<16x32xf32>, vector<16x32xf32>, vector<16x32xf32> -> vector<16x96xf32>
    %333 = arith.truncf %332 : vector<16x96xf32> to vector<16x96xbf16>
    %c0_103 = arith.constant 0 : index
    %c0_104 = arith.constant 0 : index
    %334 = vector.load %arg11[%c0_103, %c0_104] : memref<96x64xbf16, #tpu.memory_space<vmem>>, vector<96x64xbf16>
    %cst_105 = arith.constant dense<0.000000e+00> : vector<16x64xf32>
    %335 = tpu.matmul %333, %334, %cst_105 {dimension_numbers = #tpu.dot_dimension_numbers<[1], [0], [0], [1], [0, 0, 1, 1], [], []>} : vector<16x96xbf16>, vector<96x64xbf16>, vector<16x64xf32> -> vector<16x64xf32>
    %c0_106 = arith.constant 0 : index
    %c0_107 = arith.constant 0 : index
    %336 = vector.load %arg12[%c0_106, %c0_107] : memref<1x64xf32, #tpu.memory_space<vmem>>, vector<1x64xf32>
    %337 = vector.broadcast %336 : vector<1x64xf32> to vector<16x64xf32>
    %338 = arith.addf %335, %337 : vector<16x64xf32>
    %cst_108 = arith.constant 0.000000e+00 : f32
    %339 = vector.broadcast %cst_108 : f32 to vector<16x64xf32>
    %340 = arith.maximumf %338, %339 : vector<16x64xf32>
    %cst_109 = arith.constant 0.000000e+00 : f32
    %341 = vector.shape_cast %297 : vector<16x1xi1> to vector<16x1xi1>
    %342 = vector.broadcast %341 : vector<16x1xi1> to vector<16x64xi1>
    %343 = vector.broadcast %cst_109 : f32 to vector<16x64xf32>
    %344 = arith.select %342, %340, %343 : vector<16x64xi1>, vector<16x64xf32>
    %c1_i32_110 = arith.constant 1 : i32
    %345 = tpu.dynamic_rotate %344 by %c1_i32_110 dim 0 : vector<16x64xf32>, i32 -> vector<16x64xf32>
    %346 = tpu.iota {dimensions = array<i32: 0>} : vector<16x1xi32>
    %c-1_i32_111 = arith.constant -1 : i32
    %347 = vector.broadcast %c-1_i32_111 : i32 to vector<16x1xi32>
    %348 = arith.addi %346, %347 : vector<16x1xi32>
    %c0_i32_112 = arith.constant 0 : i32
    %349 = vector.broadcast %c0_i32_112 : i32 to vector<16x1xi32>
    %350 = arith.cmpi sge, %348, %349 : vector<16x1xi32>
    %c-1_i32_113 = arith.constant -1 : i32
    %351 = vector.broadcast %c-1_i32_113 : i32 to vector<16x1xi32>
    %352 = arith.addi %346, %351 : vector<16x1xi32>
    %c16_i32_114 = arith.constant 16 : i32
    %353 = vector.broadcast %c16_i32_114 : i32 to vector<16x1xi32>
    %354 = arith.cmpi slt, %352, %353 : vector<16x1xi32>
    %355 = arith.andi %350, %354 : vector<16x1xi1>
    %cst_115 = arith.constant 0.000000e+00 : f32
    %356 = vector.shape_cast %355 : vector<16x1xi1> to vector<16x1xi1>
    %357 = vector.broadcast %356 : vector<16x1xi1> to vector<16x64xi1>
    %358 = vector.broadcast %cst_115 : f32 to vector<16x64xf32>
    %359 = arith.select %357, %345, %358 : vector<16x64xi1>, vector<16x64xf32>
    %c15_i32_116 = arith.constant 15 : i32
    %360 = tpu.dynamic_rotate %344 by %c15_i32_116 dim 0 : vector<16x64xf32>, i32 -> vector<16x64xf32>
    %361 = tpu.iota {dimensions = array<i32: 0>} : vector<16x1xi32>
    %c1_i32_117 = arith.constant 1 : i32
    %362 = vector.broadcast %c1_i32_117 : i32 to vector<16x1xi32>
    %363 = arith.addi %361, %362 : vector<16x1xi32>
    %c0_i32_118 = arith.constant 0 : i32
    %364 = vector.broadcast %c0_i32_118 : i32 to vector<16x1xi32>
    %365 = arith.cmpi sge, %363, %364 : vector<16x1xi32>
    %c1_i32_119 = arith.constant 1 : i32
    %366 = vector.broadcast %c1_i32_119 : i32 to vector<16x1xi32>
    %367 = arith.addi %361, %366 : vector<16x1xi32>
    %c16_i32_120 = arith.constant 16 : i32
    %368 = vector.broadcast %c16_i32_120 : i32 to vector<16x1xi32>
    %369 = arith.cmpi slt, %367, %368 : vector<16x1xi32>
    %370 = arith.andi %365, %369 : vector<16x1xi1>
    %cst_121 = arith.constant 0.000000e+00 : f32
    %371 = vector.shape_cast %370 : vector<16x1xi1> to vector<16x1xi1>
    %372 = vector.broadcast %371 : vector<16x1xi1> to vector<16x64xi1>
    %373 = vector.broadcast %cst_121 : f32 to vector<16x64xf32>
    %374 = arith.select %372, %360, %373 : vector<16x64xi1>, vector<16x64xf32>
    %375 = tpu.concatenate %359, %344, %374 in 1 : vector<16x64xf32>, vector<16x64xf32>, vector<16x64xf32> -> vector<16x192xf32>
    %376 = arith.truncf %375 : vector<16x192xf32> to vector<16x192xbf16>
    %c0_122 = arith.constant 0 : index
    %c0_123 = arith.constant 0 : index
    %377 = vector.load %arg13[%c0_122, %c0_123] : memref<192x32xbf16, #tpu.memory_space<vmem>>, vector<192x32xbf16>
    %cst_124 = arith.constant dense<0.000000e+00> : vector<16x32xf32>
    %378 = tpu.matmul %376, %377, %cst_124 {dimension_numbers = #tpu.dot_dimension_numbers<[1], [0], [0], [1], [0, 0, 1, 1], [], []>} : vector<16x192xbf16>, vector<192x32xbf16>, vector<16x32xf32> -> vector<16x32xf32>
    %c0_125 = arith.constant 0 : index
    %c0_126 = arith.constant 0 : index
    %379 = vector.load %arg14[%c0_125, %c0_126] : memref<1x32xf32, #tpu.memory_space<vmem>>, vector<1x32xf32>
    %380 = vector.broadcast %379 : vector<1x32xf32> to vector<16x32xf32>
    %381 = arith.addf %378, %380 : vector<16x32xf32>
    %cst_127 = arith.constant 0.000000e+00 : f32
    %382 = vector.shape_cast %297 : vector<16x1xi1> to vector<16x1xi1>
    %383 = vector.broadcast %382 : vector<16x1xi1> to vector<16x32xi1>
    %384 = vector.broadcast %cst_127 : f32 to vector<16x32xf32>
    %385 = arith.select %383, %381, %384 : vector<16x32xi1>, vector<16x32xf32>
    %386 = arith.addf %294, %385 : vector<16x32xf32>
    %c0_128 = arith.constant 0 : index
    %c0_129 = arith.constant 0 : index
    %387 = vector.load %arg15[%c0_128, %c0_129] : memref<1x32xf32, #tpu.memory_space<vmem>>, vector<1x32xf32>
    %c0_130 = arith.constant 0 : index
    %c0_131 = arith.constant 0 : index
    %388 = vector.load %arg16[%c0_130, %c0_131] : memref<1x32xf32, #tpu.memory_space<vmem>>, vector<1x32xf32>
    %cst_132 = arith.constant dense<0.000000e+00> : vector<16xf32>
    %389 = vector.multi_reduction <add>, %386, %cst_132 [1] : vector<16x32xf32> to vector<16xf32>
    %390 = vector.shape_cast %389 : vector<16xf32> to vector<16x1xf32>
    %cst_133 = arith.constant 3.200000e+01 : f32
    %391 = vector.broadcast %cst_133 : f32 to vector<16x1xf32>
    %392 = arith.divf %390, %391 : vector<16x1xf32>
    %393 = vector.broadcast %392 : vector<16x1xf32> to vector<16x32xf32>
    %394 = arith.subf %386, %393 : vector<16x32xf32>
    %395 = arith.mulf %394, %394 : vector<16x32xf32>
    %cst_134 = arith.constant dense<0.000000e+00> : vector<16xf32>
    %396 = vector.multi_reduction <add>, %395, %cst_134 [1] : vector<16x32xf32> to vector<16xf32>
    %397 = vector.shape_cast %396 : vector<16xf32> to vector<16x1xf32>
    %cst_135 = arith.constant 3.200000e+01 : f32
    %398 = vector.broadcast %cst_135 : f32 to vector<16x1xf32>
    %399 = arith.divf %397, %398 : vector<16x1xf32>
    %400 = vector.broadcast %392 : vector<16x1xf32> to vector<16x32xf32>
    %401 = arith.subf %386, %400 : vector<16x32xf32>
    %cst_136 = arith.constant 9.99999974E-6 : f32
    %402 = vector.broadcast %cst_136 : f32 to vector<16x1xf32>
    %403 = arith.addf %399, %402 : vector<16x1xf32>
    %404 = math.rsqrt %403 : vector<16x1xf32>
    %405 = vector.broadcast %404 : vector<16x1xf32> to vector<16x32xf32>
    %406 = arith.mulf %401, %405 : vector<16x32xf32>
    %407 = vector.broadcast %387 : vector<1x32xf32> to vector<16x32xf32>
    %408 = arith.mulf %406, %407 : vector<16x32xf32>
    %409 = vector.broadcast %388 : vector<1x32xf32> to vector<16x32xf32>
    %410 = arith.addf %408, %409 : vector<16x32xf32>
    %411 = arith.truncf %410 : vector<16x32xf32> to vector<16x32xbf16>
    %c0_137 = arith.constant 0 : index
    %c0_138 = arith.constant 0 : index
    %c0_139 = arith.constant 0 : index
    %412 = vector.load %arg17[%c0_137, %c0_138, %c0_139] : memref<1x16x32xbf16, #tpu.memory_space<vmem>>, vector<1x16x32xbf16>
    %413 = vector.shape_cast %412 : vector<1x16x32xbf16> to vector<16x32xbf16>
    %414 = vector.shape_cast %411 : vector<16x32xbf16> to vector<1x16x32xbf16>
    tpu.vector_store %arg17[%c0_137, %c0_138, %c0_139], %414 {strides = array<i32>} : memref<1x16x32xbf16, #tpu.memory_space<vmem>>, vector<1x16x32xbf16>,
    return
  }
  func.func @transform_0(%arg0: i32, %arg1: memref<2xi32, #tpu.memory_space<smem>>) -> (i32, i32, i32) {
    %c0_i32 = arith.constant 0 : i32
    %c0_i32_0 = arith.constant 0 : i32
    %c0_i32_1 = arith.constant 0 : i32
    return %arg0, %c0_i32, %c0_i32_0 : i32, i32, i32
  }
  func.func @transform_1(%arg0: i32, %arg1: memref<2xi32, #tpu.memory_space<smem>>) -> (i32, i32) {
    %c0_i32 = arith.constant 0 : i32
    %c0_i32_0 = arith.constant 0 : i32
    %c0_i32_1 = arith.constant 0 : i32
    return %c0_i32, %c0_i32_0 : i32, i32
  }
  func.func @transform_2(%arg0: i32, %arg1: memref<2xi32, #tpu.memory_space<smem>>) -> (i32, i32) {
    %c0_i32 = arith.constant 0 : i32
    %c0_i32_0 = arith.constant 0 : i32
    %c0_i32_1 = arith.constant 0 : i32
    return %c0_i32, %c0_i32_0 : i32, i32
  }
  func.func @transform_3(%arg0: i32, %arg1: memref<2xi32, #tpu.memory_space<smem>>) -> (i32, i32) {
    %c0_i32 = arith.constant 0 : i32
    %c0_i32_0 = arith.constant 0 : i32
    %c0_i32_1 = arith.constant 0 : i32
    return %c0_i32, %c0_i32_0 : i32, i32
  }
  func.func @transform_4(%arg0: i32, %arg1: memref<2xi32, #tpu.memory_space<smem>>) -> (i32, i32) {
    %c0_i32 = arith.constant 0 : i32
    %c0_i32_0 = arith.constant 0 : i32
    %c0_i32_1 = arith.constant 0 : i32
    return %c0_i32, %c0_i32_0 : i32, i32
  }
  func.func @transform_5(%arg0: i32, %arg1: memref<2xi32, #tpu.memory_space<smem>>) -> (i32, i32) {
    %c0_i32 = arith.constant 0 : i32
    %c0_i32_0 = arith.constant 0 : i32
    %c0_i32_1 = arith.constant 0 : i32
    return %c0_i32, %c0_i32_0 : i32, i32
  }
  func.func @transform_6(%arg0: i32, %arg1: memref<2xi32, #tpu.memory_space<smem>>) -> (i32, i32) {
    %c0_i32 = arith.constant 0 : i32
    %c0_i32_0 = arith.constant 0 : i32
    %c0_i32_1 = arith.constant 0 : i32
    return %c0_i32, %c0_i32_0 : i32, i32
  }
  func.func @transform_7(%arg0: i32, %arg1: memref<2xi32, #tpu.memory_space<smem>>) -> (i32, i32) {
    %c0_i32 = arith.constant 0 : i32
    %c0_i32_0 = arith.constant 0 : i32
    %c0_i32_1 = arith.constant 0 : i32
    return %c0_i32, %c0_i32_0 : i32, i32
  }
  func.func @transform_8(%arg0: i32, %arg1: memref<2xi32, #tpu.memory_space<smem>>) -> (i32, i32) {
    %c0_i32 = arith.constant 0 : i32
    %c0_i32_0 = arith.constant 0 : i32
    %c0_i32_1 = arith.constant 0 : i32
    return %c0_i32, %c0_i32_0 : i32, i32
  }
  func.func @transform_9(%arg0: i32, %arg1: memref<2xi32, #tpu.memory_space<smem>>) -> (i32, i32) {
    %c0_i32 = arith.constant 0 : i32
    %c0_i32_0 = arith.constant 0 : i32
    %c0_i32_1 = arith.constant 0 : i32
    return %c0_i32, %c0_i32_0 : i32, i32
  }
  func.func @transform_10(%arg0: i32, %arg1: memref<2xi32, #tpu.memory_space<smem>>) -> (i32, i32) {
    %c0_i32 = arith.constant 0 : i32
    %c0_i32_0 = arith.constant 0 : i32
    %c0_i32_1 = arith.constant 0 : i32
    return %c0_i32, %c0_i32_0 : i32, i32
  }
  func.func @transform_11(%arg0: i32, %arg1: memref<2xi32, #tpu.memory_space<smem>>) -> (i32, i32) {
    %c0_i32 = arith.constant 0 : i32
    %c0_i32_0 = arith.constant 0 : i32
    %c0_i32_1 = arith.constant 0 : i32
    return %c0_i32, %c0_i32_0 : i32, i32
  }
  func.func @transform_12(%arg0: i32, %arg1: memref<2xi32, #tpu.memory_space<smem>>) -> (i32, i32) {
    %c0_i32 = arith.constant 0 : i32
    %c0_i32_0 = arith.constant 0 : i32
    %c0_i32_1 = arith.constant 0 : i32
    return %c0_i32, %c0_i32_0 : i32, i32
  }
  func.func @transform_13(%arg0: i32, %arg1: memref<2xi32, #tpu.memory_space<smem>>) -> (i32, i32) {
    %c0_i32 = arith.constant 0 : i32
    %c0_i32_0 = arith.constant 0 : i32
    %c0_i32_1 = arith.constant 0 : i32
    return %c0_i32, %c0_i32_0 : i32, i32
  }
  func.func @transform_14(%arg0: i32, %arg1: memref<2xi32, #tpu.memory_space<smem>>) -> (i32, i32) {
    %c0_i32 = arith.constant 0 : i32
    %c0_i32_0 = arith.constant 0 : i32
    %c0_i32_1 = arith.constant 0 : i32
    return %c0_i32, %c0_i32_0 : i32, i32
  }
  func.func @transform_15(%arg0: i32, %arg1: memref<2xi32, #tpu.memory_space<smem>>) -> (i32, i32, i32) {
    %c0_i32 = arith.constant 0 : i32
    %c0_i32_0 = arith.constant 0 : i32
    %c0_i32_1 = arith.constant 0 : i32
    return %arg0, %c0_i32, %c0_i32_0 : i32, i32, i32
  }
}

</mosaic_0001>

<llo_original>
// kernel: text_encoder_forward.5
$region0: #{text_encoder_forward.5}
  #allocation0 [shape = 'u32[]', space=smem, size = 0x4, offset = 0x4, fixed_abs, tag = 'smem constant byte address 0x4 - core index']
  #allocation1 [shape = 'u32[144,128]{1,0:T(1,128)}', space=vmem, size = 0x12000, scoped, tag = 'internal scratch']
  #allocation2 [shape = 's32[1]{0}', space=sflag, size = 0x4, scoped, tag = 'scoped memory for text_encoder_forward.5']
  #allocation3 [shape = 'u8[512]{0}', space=smem, size = 0x200, scoped, tag = 'prefetched SMEM operand 0']
  %s0 = inlined_call_operand.vmem [shape: s32[2], index: 0, kind: input, shape index: {}]
  %s1 = inlined_call_operand.vmem [shape: bf16[2,16,32], index: 1, kind: input, shape index: {}]
  %s2 = inlined_call_operand.vmem [shape: bf16[32,128], index: 2, kind: input, shape index: {}]
  %s3 = inlined_call_operand.vmem [shape: f32[1,128], index: 3, kind: input, shape index: {}]
  %s4 = inlined_call_operand.hbm [shape: f32[2,16,32], index: 4, kind: output, shape index: {0}]
  %s5 = inlined_call_operand.vmem [shape: f32[2,16,128], index: 5, kind: output, shape index: {1}]
  %6 = xla_tuple %s4, %s5
  %s7 = sld [smem:[#allocation0]]
  $region53: #{text_encoder_forward.5} parent=0
    _
  %s9 = ssub.s32 1, %s7
  %s10 = scalar_select 0, %s9, %s7
  %s11 = sshll.u32 %s0, 4
  %s12 = int_to_ptr.vmem [resolvable:$true] %s11
  %14 = dma.vmem_to_smem %s12, 16, [#allocation3], [#allocation2]
  %15 = dma.done [#allocation2], 16
  %16 = sfence
  $region1: #{text_encoder_forward.5} parent=0
    #allocation4 [shape = 'u8[16384]{0}', space=vmem, size = 0x4000, scoped, tag = 'output window, operand 0']
    #allocation5 [shape = 's32[2]{0}', space=sflag, size = 0x8, scoped, tag = 'scoped memory for text_encoder_forward.5']
    %17 = vsyncpa [#allocation5], 0
    %s18 = scalar_lea.sflag [#allocation5], 1
    %19 = vsyncpa %s18, 0
    loop: start=0, step=1, limit=4
    $region2: #{text_encoder_forward.5} parent=1 // loop_pre_header
      _
    $region3: #{text_encoder_forward.5} parent=1 // loop_header
      %s21 = sphi 0, %s25
      %p22 = scmp.ge.s32.totalorder %s21, 4
      %s31 = sphi 0, %s33
      %s34 = sphi 0, %s31
      %s35 = sphi 0, %s34
      %s51 = sphi 0, %s35
      %s55 = sphi 0, %s55
      %s57 = sphi 0, %s55
      %s58 = sphi 0, %s57
      %s72 = sphi 0, %s58
      %s76 = sphi 0, %s76
      %s78 = sphi 0, %s76
      %s79 = sphi 0, %s78
      %s93 = sphi 0, %s79
      %s99 = sphi 0, %s101
      %s102 = sphi 0, %s99
      %s103 = sphi 0, %s102
      %s119 = sphi 0, %s103
      %s125 = sphi 0, %s127
      %s128 = sphi 0, %s125
      %s129 = sphi 0, %s128
      %s145 = sphi 0, %s129
    $region4: #{text_encoder_forward.5} parent=1 // loop_header_branch
      %24 = sbr.rel (%p22) target = $region8
    $region5: #{text_encoder_forward.5} parent=1 // loop_body
      %s26 = ssub.s32 %s21, 1
      %s27 = ssub.s32 %s21, 2
      %s28 = sadd.s32 %s21, 1
      %s29 = ssub.s32 %s21, %s28
      %p30 = scmp.eq.s32.totalorder %s29, 0
      %s32 = sadd.s32 %s31, 1
      %s33 = scalar_select %p30, %s31, %s32
      %p36 = pneg %p30
      %p37 = scmp.eq.s32.totalorder %s21, 1
      %p38 = por %p36, %p37
      %p39 = scmp.ne.s32.totalorder %s31, %s34
      %p40 = scmp.eq.s32.totalorder %s21, 0
      %p41 = por %p39, %p40
      %p42 = scmp.ne.s32.totalorder %s31, %s34
      %p43 = scmp.eq.s32.totalorder %s26, 1
      %p44 = por %p42, %p43
      %p45 = scmp.ne.s32.totalorder %s34, %s35
      %p46 = scmp.eq.s32.totalorder %s26, 0
      %p47 = por %p45, %p46
      %p48 = scmp.ne.s32.totalorder %s34, %s35
      %p49 = scmp.eq.s32.totalorder %s27, 1
      %p50 = por %p48, %p49
      %p52 = scmp.ne.s32.totalorder %s35, %s51
      %p53 = scmp.eq.s32.totalorder %s27, 0
      %p54 = por %p52, %p53
      %s56 = sadd.s32 %s55, 1
      %p59 = scmp.eq.s32.totalorder %s21, 1
      %p60 = scmp.ne.s32.totalorder %s55, %s57
      %p61 = scmp.eq.s32.totalorder %s21, 0
      %p62 = por %p60, %p61
      %p63 = scmp.ne.s32.totalorder %s55, %s57
      %p64 = scmp.eq.s32.totalorder %s26, 1
      %p65 = por %p63, %p64
      %p66 = scmp.ne.s32.totalorder %s57, %s58
      %p67 = scmp.eq.s32.totalorder %s26, 0
      %p68 = por %p66, %p67
      %p69 = scmp.ne.s32.totalorder %s57, %s58
      %p70 = scmp.eq.s32.totalorder %s27, 1
      %p71 = por %p69, %p70
      %p73 = scmp.ne.s32.totalorder %s58, %s72
      %p74 = scmp.eq.s32.totalorder %s27, 0
      %p75 = por %p73, %p74
      %s77 = sadd.s32 %s76, 1
      %p80 = scmp.eq.s32.totalorder %s21, 1
      %p81 = scmp.ne.s32.totalorder %s76, %s78
      %p82 = scmp.eq.s32.totalorder %s21, 0
      %p83 = por %p81, %p82
      %p84 = scmp.ne.s32.totalorder %s76, %s78
      %p85 = scmp.eq.s32.totalorder %s26, 1
      %p86 = por %p84, %p85
      %p87 = scmp.ne.s32.totalorder %s78, %s79
      %p88 = scmp.eq.s32.totalorder %s26, 0
      %p89 = por %p87, %p88
      %p90 = scmp.ne.s32.totalorder %s78, %s79
      %p91 = scmp.eq.s32.totalorder %s27, 1
      %p92 = por %p90, %p91
      %p94 = scmp.ne.s32.totalorder %s79, %s93
      %p95 = scmp.eq.s32.totalorder %s27, 0
      %p96 = por %p94, %p95
      %s97 = ssub.s32 %s21, %s28
      %p98 = scmp.eq.s32.totalorder %s97, 0
      %s100 = sadd.s32 %s99, 1
      %s101 = scalar_select %p98, %s99, %s100
      %p104 = pneg %p98
      %p105 = scmp.eq.s32.totalorder %s21, 1
      %p106 = por %p104, %p105
      %p107 = scmp.ne.s32.totalorder %s99, %s102
      %p108 = scmp.eq.s32.totalorder %s21, 0
      %p109 = por %p107, %p108
      %p110 = scmp.ne.s32.totalorder %s99, %s102
      %p111 = scmp.eq.s32.totalorder %s26, 1
      %p112 = por %p110, %p111
      %p113 = scmp.ne.s32.totalorder %s102, %s103
      %p114 = scmp.eq.s32.totalorder %s26, 0
      %p115 = por %p113, %p114
      %p116 = scmp.ne.s32.totalorder %s102, %s103
      %p117 = scmp.eq.s32.totalorder %s27, 1
      %p118 = por %p116, %p117
      %p120 = scmp.ne.s32.totalorder %s103, %s119
      %p121 = scmp.eq.s32.totalorder %s27, 0
      %p122 = por %p120, %p121
      %s123 = ssub.s32 %s21, %s28
      %p124 = scmp.eq.s32.totalorder %s123, 0
      %s126 = sadd.s32 %s125, 1
      %s127 = scalar_select %p124, %s125, %s126
      %p130 = pneg %p124
      %p131 = scmp.eq.s32.totalorder %s21, 1
      %p132 = por %p130, %p131
      %p133 = scmp.ne.s32.totalorder %s125, %s128
      %p134 = scmp.eq.s32.totalorder %s21, 0
      %p135 = por %p133, %p134
      %p136 = scmp.ne.s32.totalorder %s125, %s128
      %p137 = scmp.eq.s32.totalorder %s26, 1
      %p138 = por %p136, %p137
      %p139 = scmp.ne.s32.totalorder %s128, %s129
      %p140 = scmp.eq.s32.totalorder %s26, 0
      %p141 = por %p139, %p140
      %p142 = scmp.ne.s32.totalorder %s128, %s129
      %p143 = scmp.eq.s32.totalorder %s27, 1
      %p144 = por %p142, %p143
      %p146 = scmp.ne.s32.totalorder %s129, %s145
      %p147 = scmp.eq.s32.totalorder %s27, 0
      %p148 = por %p146, %p147
      %p149 = scmp.le.s32.totalorder 1, %s21
      %p150 = scmp.lt.s32.totalorder %s21, 3
      %p151 = pnand %p149, %p150
      %p152 = pneg %p151
      // Predicated region
      $region9: #{text_encoder_forward.5} parent=5 // pred_check
        _
      $region10: #{text_encoder_forward.5} parent=5 // pred_check_branch
        %154 = sbr.rel (%p151) target = $region12
      $region11: #{text_encoder_forward.5} parent=5 // pred_region
        %s155 = ssub.s32 %s21, 1
        // Predicated region
        $region13: #{text_encoder_forward.5} parent=11 // pred_check
          %p156 = pneg %p68
        $region14: #{text_encoder_forward.5} parent=11 // pred_check_branch
          %158 = sbr.rel (%p156) target = $region16
        $region15: #{text_encoder_forward.5} parent=11 // pred_region
          _
        $region16: #{text_encoder_forward.5} parent=11 // pred_fallthru
          _
        // Predicated region
        $region17: #{text_encoder_forward.5} parent=11 // pred_check
          %p159 = pneg %p89
        $region18: #{text_encoder_forward.5} parent=11 // pred_check_branch
          %161 = sbr.rel (%p159) target = $region20
        $region19: #{text_encoder_forward.5} parent=11 // pred_region
          _
        $region20: #{text_encoder_forward.5} parent=11 // pred_fallthru
          _
      $region12: #{text_encoder_forward.5} parent=5 // pred_fallthru
        _
      %p162 = scmp.lt.s32.totalorder %s21, 2
      // Predicated region
      $region21: #{text_encoder_forward.5} parent=5 // pred_check
        %p163 = pneg %p162
      $region22: #{text_encoder_forward.5} parent=5 // pred_check_branch
        %165 = sbr.rel (%p163) target = $region24
      $region23: #{text_encoder_forward.5} parent=5 // pred_region
        // Predicated region
        $region25: #{text_encoder_forward.5} parent=23 // pred_check
          %p166 = pneg %p41
        $region26: #{text_encoder_forward.5} parent=23 // pred_check_branch
          %168 = sbr.rel (%p166) target = $region28
        $region27: #{text_encoder_forward.5} parent=23 // pred_region
          %p169 = scmp.lt.s32.totalorder %s21, 1
          %s170 = scalar_select %p169, %s21, 1
          %s171 = smul.addr %s170, 2
          %s172 = smul.addr %s171, 4
          %s173 = scalar_lea.vmem %s1, %s172
        $region28: #{text_encoder_forward.5} parent=23 // pred_fallthru
          _
      $region24: #{text_encoder_forward.5} parent=5 // pred_fallthru
        _
      %p174 = scmp.le.s32.totalorder 1, %s21
      %p175 = scmp.lt.s32.totalorder %s21, 3
      %p176 = pnand %p174, %p175
      %p177 = pneg %p176
      // Predicated region
      $region29: #{text_encoder_forward.5} parent=5 // pred_check
        _
      $region30: #{text_encoder_forward.5} parent=5 // pred_check_branch
        %179 = sbr.rel (%p176) target = $region32
      $region31: #{text_encoder_forward.5} parent=5 // pred_region
        %s180 = ssub.s32 %s21, 1
        %p181 = scmp.lt.s32.totalorder %s26, 1
        %s182 = scalar_select %p181, %s26, 1
        %s183 = smul.addr %s182, 2
        %s184 = smul.addr %s183, 4
        %s185 = scalar_lea.vmem %s1, %s184
        %p186 = pneg %p47
        %p187 = pneg %p44
        %p188 = pneg %p68
        %p189 = pneg %p65
        %p190 = pneg %p89
        %p191 = pneg %p86
        %p192 = pneg %p115
        %p193 = pneg %p112
        %s194 = sand.u32 %s102, 1
        %s195 = scalar_lea.sflag [#allocation5], %s194
        %s196 = sand.u32 %s102, 1
        %s197 = smul.addr %s196, 16
        %s198 = scalar_lea.vmem [#allocation4], %s197
        %p199 = pneg %p141
        %p200 = pneg %p138
        %p201 = scmp.lt.s32.totalorder %s26, 1
        %s202 = scalar_select %p201, %s26, 1
        %s203 = smul.addr %s202, 2
        %s204 = smul.addr %s203, 8
        %s205 = scalar_lea.vmem %s5, %s204
        %p206 = scmp.lt.s32.totalorder %s26, 1
        %s207 = scalar_select %p206, %s26, 1
        %s208 = smul.addr %s207, 2
        %s209 = smul.addr %s208, 4
        %s210 = scalar_lea.vmem %s1, %s209
        %p211 = scmp.lt.s32.totalorder %s26, 1
        %s212 = scalar_select %p211, %s26, 1
        %s213 = smul.addr %s212, 2
        %s214 = smul.addr %s213, 8
        %s215 = scalar_lea.vmem %s5, %s214
        %s217 = sld [smem:[#allocation3 + %s26]]
        %v218 = vld [vmem:[%s210] sm:$0xf]
        %v219 = vld [vmem:[%s210 + $0x4] sm:$0xf]
        %v220 = vlaneseq
        %v221 = vshrl.u32 %v220, 7
        %v222 = vadd.s32 %v221, 8
        %v223 = vstv %s217
        %vm224 = vcmp.lt.s32.totalorder %v221, %v223
        %vm225 = vcmp.lt.s32.totalorder %v222, %v223
        %v226 = vsel %vm224, 1, 0
        %v227 = vsel %vm225, 1, 0
        %vm228 = vcmp.eq.s32.totalorder %v226, 1
        %vm229 = vcmp.eq.s32.totalorder %v227, 1
        %vm230 = vmpackc.low %vm228, %vm228
        %vm231 = vmpackc.low %vm229, %vm229
        %v232 = vsel %vm230, %v218, 0
        %v233 = vsel %vm231, %v219, 0
        %v234 = vld [vmem:[%s2] sm:$0xf]
        %v235 = vld [vmem:[%s2 + $0x4] sm:$0xf]
        %v236 = vld [vmem:[%s2 + $0x8] sm:$0xf]
        %v237 = vld [vmem:[%s2 + $0xc] sm:$0xf]
        %v238 = vld [vmem:[%s3] sm:$0x1]
        %v240 = vlaneseq
        %v241 = vshrl.u32 %v240, 7
        %v242 = vsub.s32 0, %v241
        %v243 = vrot.slane %v238, %v242
        %v247 = vunpack.c.l.b16 %v232
        %v248 = vunpack.c.l.b16 %v233
        %v249 = vpack.c.b16 %v248, %v247
        %v254 = vunpack.c.l.b16 %v234
        %v255 = vunpack.c.l.b16 %v235
        %v256 = vunpack.c.l.b16 %v236
        %v257 = vunpack.c.l.b16 %v237
        %v258 = vpack.c.b16 %v255, %v254
        %v259 = vpack.c.b16 %v257, %v256
        %vm262 = vcmask 261120
        %v264 = vsel %vm262, %v249, 0
        %266 = vmatprep.subr.bf16.mxu0 0
        %267 = vmatpush1.bf16.msra.mxu0 0
        %268 = vmatprep.subr.bf16.mxu0 0
        %269 = vmatpush1.bf16.msra.mxu0 0
        %270 = vmatprep.subr.bf16.mxu0 0
        %271 = vmatpush1.bf16.msra.mxu0 0
        %272 = vmatprep.subr.bf16.mxu0 0
        %273 = vmatpush1.bf16.msra.mxu0 0
        %274 = vmatprep.subr.bf16.mxu0 0
        %275 = vmatpush1.bf16.msra.mxu0 0
        %276 = vmatprep.subr.bf16.mxu0 0
        %277 = vmatpush1.bf16.msra.mxu0 0
        %278 = vmatprep.subr.bf16.mxu0 0
        %279 = vmatpush1.bf16.msra.mxu0 %v259
        %280 = vmatprep.subr.bf16.mxu0 0
        %281 = vmatpush1.bf16.msra.mxu0 %v258
        %282 = vmatprep.subr.bf16.mxu0 0
        %283 = vmatpush2.bf16.msra.mxu0 0
        %284 = vmatprep.subr.bf16.mxu0 0
        %285 = vmatpush2.bf16.msra.mxu0 0
        %286 = vmatprep.subr.bf16.mxu0 0
        %287 = vmatpush2.bf16.msra.mxu0 0
        %288 = vmatprep.subr.bf16.mxu0 0
        %289 = vmatpush2.bf16.msra.mxu0 0
        %290 = vmatprep.subr.bf16.mxu0 0
        %291 = vmatpush2.bf16.msra.mxu0 0
        %292 = vmatprep.subr.bf16.mxu0 0
        %293 = vmatpush2.bf16.msra.mxu0 0
        %294 = vmatprep.subr.bf16.mxu0 0
        %295 = vmatpush2.bf16.msra.mxu0 0
        %296 = vmatprep.subr.bf16.mxu0 0
        %297 = vmatpush2.bf16.msra.mxu0 0
        %298 = vmatprep.mubr.bf16.mxu0 0
        %299 = vmatmul.mubr.bf16.gmra.mxu0 %v264
        %v300 = vpop.f32.mrf.mxu0
        %v301 = vadd.f32 %v243, %v300
        %v302 = vpop.f32.mrf.mxu0
        %v303 = vpop.f32.mrf.mxu0
        %v304 = vadd.f32 %v243, %v303
        %v305 = vpop.f32.mrf.mxu0
        %306 = vdwg.mxu0
        %v307 = vsel %vm228, %v301, 0.0
        %v308 = vsel %vm229, %v304, 0.0
        %v309 = vunpack.c.l.bf16 %v232
        %v310 = vunpack.c.l.bf16 %v233
        %311 = vst.msk [vmem:[%s198] sm:$0xff] %vm262, %v309
        %312 = vst.msk [vmem:[%s198 + $0x8] sm:$0xff] %vm262, %v310
        %313 = vst [vmem:[%s215] sm:$0xff] %v307
        %314 = vst [vmem:[%s215 + $0x8] sm:$0xff] %v308
        %s315 = sand.u32 %s102, 1
        %s316 = scalar_lea.sflag [#allocation5], %s315
        %s317 = sand.u32 %s102, 1
        %s318 = smul.addr %s317, 16
        %s319 = scalar_lea.vmem [#allocation4], %s318
        %p320 = scmp.lt.s32.totalorder %s26, 1
        %s321 = scalar_select %p320, %s26, 1
        %s322 = smul.addr %s321, 2
        %s323 = smul.addr %s322, 8
        %s324 = scalar_lea.vmem %s5, %s323
        // Predicated region
        $region33: #{text_encoder_forward.5} parent=31 // pred_check
          %p325 = pneg %p112
        $region34: #{text_encoder_forward.5} parent=31 // pred_check_branch
          %327 = sbr.rel (%p325) target = $region36
        $region35: #{text_encoder_forward.5} parent=31 // pred_region
          %s329 = ssub.s32 256, 256
          %330 = vsyncadd %s316, %s329
          %s331 = smul.addr %s26, 2
          %s332 = smul.addr %s331, 128
          %s333 = scalar_lea.hbm %s4, %s332
          %s334 = sshll.u32 %s319, 4
          %s335 = int_to_ptr.vmem [resolvable:$true] %s334
          %340 = dma.vmem_to_hbm [thread:$0]  %s335, 256, %s333, %s316, 128, 128, 8
        $region36: #{text_encoder_forward.5} parent=31 // pred_fallthru
          _
        // Predicated region
        $region37: #{text_encoder_forward.5} parent=31 // pred_check
          %p341 = pneg %p138
        $region38: #{text_encoder_forward.5} parent=31 // pred_check_branch
          %343 = sbr.rel (%p341) target = $region40
        $region39: #{text_encoder_forward.5} parent=31 // pred_region
          _
        $region40: #{text_encoder_forward.5} parent=31 // pred_fallthru
          _
      $region32: #{text_encoder_forward.5} parent=5 // pred_fallthru
        _
      %p344 = scmp.le.s32.totalorder 2, %s21
      // Predicated region
      $region41: #{text_encoder_forward.5} parent=5 // pred_check
        %p345 = pneg %p344
      $region42: #{text_encoder_forward.5} parent=5 // pred_check_branch
        %347 = sbr.rel (%p345) target = $region44
      $region43: #{text_encoder_forward.5} parent=5 // pred_region
        %s348 = ssub.s32 %s21, 2
        // Predicated region
        $region45: #{text_encoder_forward.5} parent=43 // pred_check
          %p349 = pneg %p118
        $region46: #{text_encoder_forward.5} parent=43 // pred_check_branch
          %351 = sbr.rel (%p349) target = $region48
        $region47: #{text_encoder_forward.5} parent=43 // pred_region
          %s352 = sand.u32 %s103, 1
          %s353 = scalar_lea.sflag [#allocation5], %s352
          %s354 = sand.u32 %s103, 1
          %s355 = smul.addr %s354, 16
          %s356 = scalar_lea.vmem [#allocation4], %s355
          %357 = dma.done %s353, 256
        $region48: #{text_encoder_forward.5} parent=43 // pred_fallthru
          _
        // Predicated region
        $region49: #{text_encoder_forward.5} parent=43 // pred_check
          %p358 = pneg %p144
        $region50: #{text_encoder_forward.5} parent=43 // pred_check_branch
          %360 = sbr.rel (%p358) target = $region52
        $region51: #{text_encoder_forward.5} parent=43 // pred_region
          %p361 = scmp.lt.s32.totalorder %s27, 1
          %s362 = scalar_select %p361, %s27, 1
          %s363 = smul.addr %s362, 2
          %s364 = smul.addr %s363, 8
          %s365 = scalar_lea.vmem %s5, %s364
        $region52: #{text_encoder_forward.5} parent=43 // pred_fallthru
          _
      $region44: #{text_encoder_forward.5} parent=5 // pred_fallthru
        _
    $region6: #{text_encoder_forward.5} parent=1 // loop_footer
      %s25 = sadd.s32 1, %s21
    $region7: #{text_encoder_forward.5} parent=1 // loop_footer_branch
      %20 = sbr.rel target = $region3
    $region8: #{text_encoder_forward.5} parent=1 // loop_exit
      _
    %366 = vsyncpa [#allocation5], 1
    %s367 = scalar_lea.sflag [#allocation5], 1
    %368 = vsyncpa %s367, 1

// kernel: text_encoder_forward.3
$region0: #{text_encoder_forward.3}
  #allocation0 [shape = 'u32[]', space=smem, size = 0x4, offset = 0x4, fixed_abs, tag = 'smem constant byte address 0x4 - core index']
  #allocation1 [shape = 'u32[144,128]{1,0:T(1,128)}', space=vmem, size = 0x12000, scoped, tag = 'internal scratch']
  #allocation2 [shape = 's32[1]{0}', space=sflag, size = 0x4, scoped, tag = 'scoped memory for text_encoder_forward.3']
  #allocation3 [shape = 'u8[512]{0}', space=smem, size = 0x200, scoped, tag = 'prefetched SMEM operand 0']
  %s0 = inlined_call_operand.vmem [shape: s32[2], index: 0, kind: input, shape index: {}]
  %s1 = inlined_call_operand.vmem [shape: bf16[2,16,32], index: 1, kind: input, shape index: {}]
  %s2 = inlined_call_operand.vmem [shape: bf16[32,768], index: 2, kind: input, shape index: {}]
  %s3 = inlined_call_operand.vmem [shape: f32[1,768], index: 3, kind: input, shape index: {}]
  %s4 = inlined_call_operand.vmem [shape: bf16[9,128], index: 4, kind: input, shape index: {}]
  %s5 = inlined_call_operand.vmem [shape: bf16[9,128], index: 5, kind: input, shape index: {}]
  %s6 = inlined_call_operand.vmem [shape: bf16[256,32], index: 6, kind: input, shape index: {}]
  %s7 = inlined_call_operand.vmem [shape: f32[1,32], index: 7, kind: input, shape index: {}]
  %s8 = inlined_call_operand.vmem [shape: f32[1,32], index: 8, kind: input, shape index: {}]
  %s9 = inlined_call_operand.vmem [shape: f32[1,32], index: 9, kind: input, shape index: {}]
  %s10 = inlined_call_operand.vmem [shape: bf16[96,64], index: 10, kind: input, shape index: {}]
  %s11 = inlined_call_operand.vmem [shape: f32[1,64], index: 11, kind: input, shape index: {}]
  %s12 = inlined_call_operand.vmem [shape: bf16[192,32], index: 12, kind: input, shape index: {}]
  %s13 = inlined_call_operand.vmem [shape: f32[1,32], index: 13, kind: input, shape index: {}]
  %s14 = inlined_call_operand.vmem [shape: f32[1,32], index: 14, kind: input, shape index: {}]
  %s15 = inlined_call_operand.vmem [shape: f32[1,32], index: 15, kind: input, shape index: {}]
  %s16 = inlined_call_operand.vmem [shape: bf16[2,16,32], index: 16, kind: output, shape index: {}]
  %s17 = sld [smem:[#allocation0]]
  $region93: #{text_encoder_forward.3} parent=0
    _
  %s19 = ssub.s32 1, %s17
  %s20 = scalar_select 0, %s19, %s17
  %s21 = sshll.u32 %s0, 4
  %s22 = int_to_ptr.vmem [resolvable:$true] %s21
  %24 = dma.vmem_to_smem %s22, 16, [#allocation3], [#allocation2]
  %25 = dma.done [#allocation2], 16
  %26 = sfence
  loop: start=0, step=1, limit=4
  $region2: #{text_encoder_forward.3} parent=0 // loop_pre_header
    _
  $region3: #{text_encoder_forward.3} parent=0 // loop_header
    %s28 = sphi 0, %s32
    %p29 = scmp.ge.s32.totalorder %s28, 4
    %s38 = sphi 0, %s40
    %s41 = sphi 0, %s38
    %s42 = sphi 0, %s41
    %s58 = sphi 0, %s42
    %s62 = sphi 0, %s62
    %s64 = sphi 0, %s62
    %s65 = sphi 0, %s64
    %s79 = sphi 0, %s65
    %s83 = sphi 0, %s83
    %s85 = sphi 0, %s83
    %s86 = sphi 0, %s85
    %s100 = sphi 0, %s86
    %s104 = sphi 0, %s104
    %s106 = sphi 0, %s104
    %s107 = sphi 0, %s106
    %s121 = sphi 0, %s107
    %s125 = sphi 0, %s125
    %s127 = sphi 0, %s125
    %s128 = sphi 0, %s127
    %s142 = sphi 0, %s128
    %s146 = sphi 0, %s146
    %s148 = sphi 0, %s146
    %s149 = sphi 0, %s148
    %s163 = sphi 0, %s149
    %s167 = sphi 0, %s167
    %s169 = sphi 0, %s167
    %s170 = sphi 0, %s169
    %s184 = sphi 0, %s170
    %s188 = sphi 0, %s188
    %s190 = sphi 0, %s188
    %s191 = sphi 0, %s190
    %s205 = sphi 0, %s191
    %s209 = sphi 0, %s209
    %s211 = sphi 0, %s209
    %s212 = sphi 0, %s211
    %s226 = sphi 0, %s212
    %s230 = sphi 0, %s230
    %s232 = sphi 0, %s230
    %s233 = sphi 0, %s232
    %s247 = sphi 0, %s233
    %s251 = sphi 0, %s251
    %s253 = sphi 0, %s251
    %s254 = sphi 0, %s253
    %s268 = sphi 0, %s254
    %s272 = sphi 0, %s272
    %s274 = sphi 0, %s272
    %s275 = sphi 0, %s274
    %s289 = sphi 0, %s275
    %s293 = sphi 0, %s293
    %s295 = sphi 0, %s293
    %s296 = sphi 0, %s295
    %s310 = sphi 0, %s296
    %s314 = sphi 0, %s314
    %s316 = sphi 0, %s314
    %s317 = sphi 0, %s316
    %s331 = sphi 0, %s317
    %s335 = sphi 0, %s335
    %s337 = sphi 0, %s335
    %s338 = sphi 0, %s337
    %s352 = sphi 0, %s338
    %s358 = sphi 0, %s360
    %s361 = sphi 0, %s358
    %s362 = sphi 0, %s361
    %s378 = sphi 0, %s362
  $region4: #{text_encoder_forward.3} parent=0 // loop_header_branch
    %31 = sbr.rel (%p29) target = $region8
  $region5: #{text_encoder_forward.3} parent=0 // loop_body
    %s33 = ssub.s32 %s28, 1
    %s34 = ssub.s32 %s28, 2
    %s35 = sadd.s32 %s28, 1
    %s36 = ssub.s32 %s28, %s35
    %p37 = scmp.eq.s32.totalorder %s36, 0
    %s39 = sadd.s32 %s38, 1
    %s40 = scalar_select %p37, %s38, %s39
    %p43 = pneg %p37
    %p44 = scmp.eq.s32.totalorder %s28, 1
    %p45 = por %p43, %p44
    %p46 = scmp.ne.s32.totalorder %s38, %s41
    %p47 = scmp.eq.s32.totalorder %s28, 0
    %p48 = por %p46, %p47
    %p49 = scmp.ne.s32.totalorder %s38, %s41
    %p50 = scmp.eq.s32.totalorder %s33, 1
    %p51 = por %p49, %p50
    %p52 = scmp.ne.s32.totalorder %s41, %s42
    %p53 = scmp.eq.s32.totalorder %s33, 0
    %p54 = por %p52, %p53
    %p55 = scmp.ne.s32.totalorder %s41, %s42
    %p56 = scmp.eq.s32.totalorder %s34, 1
    %p57 = por %p55, %p56
    %p59 = scmp.ne.s32.totalorder %s42, %s58
    %p60 = scmp.eq.s32.totalorder %s34, 0
    %p61 = por %p59, %p60
    %s63 = sadd.s32 %s62, 1
    %p66 = scmp.eq.s32.totalorder %s28, 1
    %p67 = scmp.ne.s32.totalorder %s62, %s64
    %p68 = scmp.eq.s32.totalorder %s28, 0
    %p69 = por %p67, %p68
    %p70 = scmp.ne.s32.totalorder %s62, %s64
    %p71 = scmp.eq.s32.totalorder %s33, 1
    %p72 = por %p70, %p71
    %p73 = scmp.ne.s32.totalorder %s64, %s65
    %p74 = scmp.eq.s32.totalorder %s33, 0
    %p75 = por %p73, %p74
    %p76 = scmp.ne.s32.totalorder %s64, %s65
    %p77 = scmp.eq.s32.totalorder %s34, 1
    %p78 = por %p76, %p77
    %p80 = scmp.ne.s32.totalorder %s65, %s79
    %p81 = scmp.eq.s32.totalorder %s34, 0
    %p82 = por %p80, %p81
    %s84 = sadd.s32 %s83, 1
    %p87 = scmp.eq.s32.totalorder %s28, 1
    %p88 = scmp.ne.s32.totalorder %s83, %s85
    %p89 = scmp.eq.s32.totalorder %s28, 0
    %p90 = por %p88, %p89
    %p91 = scmp.ne.s32.totalorder %s83, %s85
    %p92 = scmp.eq.s32.totalorder %s33, 1
    %p93 = por %p91, %p92
    %p94 = scmp.ne.s32.totalorder %s85, %s86
    %p95 = scmp.eq.s32.totalorder %s33, 0
    %p96 = por %p94, %p95
    %p97 = scmp.ne.s32.totalorder %s85, %s86
    %p98 = scmp.eq.s32.totalorder %s34, 1
    %p99 = por %p97, %p98
    %p101 = scmp.ne.s32.totalorder %s86, %s100
    %p102 = scmp.eq.s32.totalorder %s34, 0
    %p103 = por %p101, %p102
    %s105 = sadd.s32 %s104, 1
    %p108 = scmp.eq.s32.totalorder %s28, 1
    %p109 = scmp.ne.s32.totalorder %s104, %s106
    %p110 = scmp.eq.s32.totalorder %s28, 0
    %p111 = por %p109, %p110
    %p112 = scmp.ne.s32.totalorder %s104, %s106
    %p113 = scmp.eq.s32.totalorder %s33, 1
    %p114 = por %p112, %p113
    %p115 = scmp.ne.s32.totalorder %s106, %s107
    %p116 = scmp.eq.s32.totalorder %s33, 0
    %p117 = por %p115, %p116
    %p118 = scmp.ne.s32.totalorder %s106, %s107
    %p119 = scmp.eq.s32.totalorder %s34, 1
    %p120 = por %p118, %p119
    %p122 = scmp.ne.s32.totalorder %s107, %s121
    %p123 = scmp.eq.s32.totalorder %s34, 0
    %p124 = por %p122, %p123
    %s126 = sadd.s32 %s125, 1
    %p129 = scmp.eq.s32.totalorder %s28, 1
    %p130 = scmp.ne.s32.totalorder %s125, %s127
    %p131 = scmp.eq.s32.totalorder %s28, 0
    %p132 = por %p130, %p131
    %p133 = scmp.ne.s32.totalorder %s125, %s127
    %p134 = scmp.eq.s32.totalorder %s33, 1
    %p135 = por %p133, %p134
    %p136 = scmp.ne.s32.totalorder %s127, %s128
    %p137 = scmp.eq.s32.totalorder %s33, 0
    %p138 = por %p136, %p137
    %p139 = scmp.ne.s32.totalorder %s127, %s128
    %p140 = scmp.eq.s32.totalorder %s34, 1
    %p141 = por %p139, %p140
    %p143 = scmp.ne.s32.totalorder %s128, %s142
    %p144 = scmp.eq.s32.totalorder %s34, 0
    %p145 = por %p143, %p144
    %s147 = sadd.s32 %s146, 1
    %p150 = scmp.eq.s32.totalorder %s28, 1
    %p151 = scmp.ne.s32.totalorder %s146, %s148
    %p152 = scmp.eq.s32.totalorder %s28, 0
    %p153 = por %p151, %p152
    %p154 = scmp.ne.s32.totalorder %s146, %s148
    %p155 = scmp.eq.s32.totalorder %s33, 1
    %p156 = por %p154, %p155
    %p157 = scmp.ne.s32.totalorder %s148, %s149
    %p158 = scmp.eq.s32.totalorder %s33, 0
    %p159 = por %p157, %p158
    %p160 = scmp.ne.s32.totalorder %s148, %s149
    %p161 = scmp.eq.s32.totalorder %s34, 1
    %p162 = por %p160, %p161
    %p164 = scmp.ne.s32.totalorder %s149, %s163
    %p165 = scmp.eq.s32.totalorder %s34, 0
    %p166 = por %p164, %p165
    %s168 = sadd.s32 %s167, 1
    %p171 = scmp.eq.s32.totalorder %s28, 1
    %p172 = scmp.ne.s32.totalorder %s167, %s169
    %p173 = scmp.eq.s32.totalorder %s28, 0
    %p174 = por %p172, %p173
    %p175 = scmp.ne.s32.totalorder %s167, %s169
    %p176 = scmp.eq.s32.totalorder %s33, 1
    %p177 = por %p175, %p176
    %p178 = scmp.ne.s32.totalorder %s169, %s170
    %p179 = scmp.eq.s32.totalorder %s33, 0
    %p180 = por %p178, %p179
    %p181 = scmp.ne.s32.totalorder %s169, %s170
    %p182 = scmp.eq.s32.totalorder %s34, 1
    %p183 = por %p181, %p182
    %p185 = scmp.ne.s32.totalorder %s170, %s184
    %p186 = scmp.eq.s32.totalorder %s34, 0
    %p187 = por %p185, %p186
    %s189 = sadd.s32 %s188, 1
    %p192 = scmp.eq.s32.totalorder %s28, 1
    %p193 = scmp.ne.s32.totalorder %s188, %s190
    %p194 = scmp.eq.s32.totalorder %s28, 0
    %p195 = por %p193, %p194
    %p196 = scmp.ne.s32.totalorder %s188, %s190
    %p197 = scmp.eq.s32.totalorder %s33, 1
    %p198 = por %p196, %p197
    %p199 = scmp.ne.s32.totalorder %s190, %s191
    %p200 = scmp.eq.s32.totalorder %s33, 0
    %p201 = por %p199, %p200
    %p202 = scmp.ne.s32.totalorder %s190, %s191
    %p203 = scmp.eq.s32.totalorder %s34, 1
    %p204 = por %p202, %p203
    %p206 = scmp.ne.s32.totalorder %s191, %s205
    %p207 = scmp.eq.s32.totalorder %s34, 0
    %p208 = por %p206, %p207
    %s210 = sadd.s32 %s209, 1
    %p213 = scmp.eq.s32.totalorder %s28, 1
    %p214 = scmp.ne.s32.totalorder %s209, %s211
    %p215 = scmp.eq.s32.totalorder %s28, 0
    %p216 = por %p214, %p215
    %p217 = scmp.ne.s32.totalorder %s209, %s211
    %p218 = scmp.eq.s32.totalorder %s33, 1
    %p219 = por %p217, %p218
    %p220 = scmp.ne.s32.totalorder %s211, %s212
    %p221 = scmp.eq.s32.totalorder %s33, 0
    %p222 = por %p220, %p221
    %p223 = scmp.ne.s32.totalorder %s211, %s212
    %p224 = scmp.eq.s32.totalorder %s34, 1
    %p225 = por %p223, %p224
    %p227 = scmp.ne.s32.totalorder %s212, %s226
    %p228 = scmp.eq.s32.totalorder %s34, 0
    %p229 = por %p227, %p228
    %s231 = sadd.s32 %s230, 1
    %p234 = scmp.eq.s32.totalorder %s28, 1
    %p235 = scmp.ne.s32.totalorder %s230, %s232
    %p236 = scmp.eq.s32.totalorder %s28, 0
    %p237 = por %p235, %p236
    %p238 = scmp.ne.s32.totalorder %s230, %s232
    %p239 = scmp.eq.s32.totalorder %s33, 1
    %p240 = por %p238, %p239
    %p241 = scmp.ne.s32.totalorder %s232, %s233
    %p242 = scmp.eq.s32.totalorder %s33, 0
    %p243 = por %p241, %p242
    %p244 = scmp.ne.s32.totalorder %s232, %s233
    %p245 = scmp.eq.s32.totalorder %s34, 1
    %p246 = por %p244, %p245
    %p248 = scmp.ne.s32.totalorder %s233, %s247
    %p249 = scmp.eq.s32.totalorder %s34, 0
    %p250 = por %p248, %p249
    %s252 = sadd.s32 %s251, 1
    %p255 = scmp.eq.s32.totalorder %s28, 1
    %p256 = scmp.ne.s32.totalorder %s251, %s253
    %p257 = scmp.eq.s32.totalorder %s28, 0
    %p258 = por %p256, %p257
    %p259 = scmp.ne.s32.totalorder %s251, %s253
    %p260 = scmp.eq.s32.totalorder %s33, 1
    %p261 = por %p259, %p260
    %p262 = scmp.ne.s32.totalorder %s253, %s254
    %p263 = scmp.eq.s32.totalorder %s33, 0
    %p264 = por %p262, %p263
    %p265 = scmp.ne.s32.totalorder %s253, %s254
    %p266 = scmp.eq.s32.totalorder %s34, 1
    %p267 = por %p265, %p266
    %p269 = scmp.ne.s32.totalorder %s254, %s268
    %p270 = scmp.eq.s32.totalorder %s34, 0
    %p271 = por %p269, %p270
    %s273 = sadd.s32 %s272, 1
    %p276 = scmp.eq.s32.totalorder %s28, 1
    %p277 = scmp.ne.s32.totalorder %s272, %s274
    %p278 = scmp.eq.s32.totalorder %s28, 0
    %p279 = por %p277, %p278
    %p280 = scmp.ne.s32.totalorder %s272, %s274
    %p281 = scmp.eq.s32.totalorder %s33, 1
    %p282 = por %p280, %p281
    %p283 = scmp.ne.s32.totalorder %s274, %s275
    %p284 = scmp.eq.s32.totalorder %s33, 0
    %p285 = por %p283, %p284
    %p286 = scmp.ne.s32.totalorder %s274, %s275
    %p287 = scmp.eq.s32.totalorder %s34, 1
    %p288 = por %p286, %p287
    %p290 = scmp.ne.s32.totalorder %s275, %s289
    %p291 = scmp.eq.s32.totalorder %s34, 0
    %p292 = por %p290, %p291
    %s294 = sadd.s32 %s293, 1
    %p297 = scmp.eq.s32.totalorder %s28, 1
    %p298 = scmp.ne.s32.totalorder %s293, %s295
    %p299 = scmp.eq.s32.totalorder %s28, 0
    %p300 = por %p298, %p299
    %p301 = scmp.ne.s32.totalorder %s293, %s295
    %p302 = scmp.eq.s32.totalorder %s33, 1
    %p303 = por %p301, %p302
    %p304 = scmp.ne.s32.totalorder %s295, %s296
    %p305 = scmp.eq.s32.totalorder %s33, 0
    %p306 = por %p304, %p305
    %p307 = scmp.ne.s32.totalorder %s295, %s296
    %p308 = scmp.eq.s32.totalorder %s34, 1
    %p309 = por %p307, %p308
    %p311 = scmp.ne.s32.totalorder %s296, %s310
    %p312 = scmp.eq.s32.totalorder %s34, 0
    %p313 = por %p311, %p312
    %s315 = sadd.s32 %s314, 1
    %p318 = scmp.eq.s32.totalorder %s28, 1
    %p319 = scmp.ne.s32.totalorder %s314, %s316
    %p320 = scmp.eq.s32.totalorder %s28, 0
    %p321 = por %p319, %p320
    %p322 = scmp.ne.s32.totalorder %s314, %s316
    %p323 = scmp.eq.s32.totalorder %s33, 1
    %p324 = por %p322, %p323
    %p325 = scmp.ne.s32.totalorder %s316, %s317
    %p326 = scmp.eq.s32.totalorder %s33, 0
    %p327 = por %p325, %p326
    %p328 = scmp.ne.s32.totalorder %s316, %s317
    %p329 = scmp.eq.s32.totalorder %s34, 1
    %p330 = por %p328, %p329
    %p332 = scmp.ne.s32.totalorder %s317, %s331
    %p333 = scmp.eq.s32.totalorder %s34, 0
    %p334 = por %p332, %p333
    %s336 = sadd.s32 %s335, 1
    %p339 = scmp.eq.s32.totalorder %s28, 1
    %p340 = scmp.ne.s32.totalorder %s335, %s337
    %p341 = scmp.eq.s32.totalorder %s28, 0
    %p342 = por %p340, %p341
    %p343 = scmp.ne.s32.totalorder %s335, %s337
    %p344 = scmp.eq.s32.totalorder %s33, 1
    %p345 = por %p343, %p344
    %p346 = scmp.ne.s32.totalorder %s337, %s338
    %p347 = scmp.eq.s32.totalorder %s33, 0
    %p348 = por %p346, %p347
    %p349 = scmp.ne.s32.totalorder %s337, %s338
    %p350 = scmp.eq.s32.totalorder %s34, 1
    %p351 = por %p349, %p350
    %p353 = scmp.ne.s32.totalorder %s338, %s352
    %p354 = scmp.eq.s32.totalorder %s34, 0
    %p355 = por %p353, %p354
    %s356 = ssub.s32 %s28, %s35
    %p357 = scmp.eq.s32.totalorder %s356, 0
    %s359 = sadd.s32 %s358, 1
    %s360 = scalar_select %p357, %s358, %s359
    %p363 = pneg %p357
    %p364 = scmp.eq.s32.totalorder %s28, 1
    %p365 = por %p363, %p364
    %p366 = scmp.ne.s32.totalorder %s358, %s361
    %p367 = scmp.eq.s32.totalorder %s28, 0
    %p368 = por %p366, %p367
    %p369 = scmp.ne.s32.totalorder %s358, %s361
    %p370 = scmp.eq.s32.totalorder %s33, 1
    %p371 = por %p369, %p370
    %p372 = scmp.ne.s32.totalorder %s361, %s362
    %p373 = scmp.eq.s32.totalorder %s33, 0
    %p374 = por %p372, %p373
    %p375 = scmp.ne.s32.totalorder %s361, %s362
    %p376 = scmp.eq.s32.totalorder %s34, 1
    %p377 = por %p375, %p376
    %p379 = scmp.ne.s32.totalorder %s362, %s378
    %p380 = scmp.eq.s32.totalorder %s34, 0
    %p381 = por %p379, %p380
    %p382 = scmp.le.s32.totalorder 1, %s28
    %p383 = scmp.lt.s32.totalorder %s28, 3
    %p384 = pnand %p382, %p383
    %p385 = pneg %p384
    // Predicated region
    $region9: #{text_encoder_forward.3} parent=5 // pred_check
      _
    $region10: #{text_encoder_forward.3} parent=5 // pred_check_branch
      %387 = sbr.rel (%p384) target = $region12
    $region11: #{text_encoder_forward.3} parent=5 // pred_region
      %s388 = ssub.s32 %s28, 1
      // Predicated region
      $region13: #{text_encoder_forward.3} parent=11 // pred_check
        %p389 = pneg %p75
      $region14: #{text_encoder_forward.3} parent=11 // pred_check_branch
        %391 = sbr.rel (%p389) target = $region16
      $region15: #{text_encoder_forward.3} parent=11 // pred_region
        _
      $region16: #{text_encoder_forward.3} parent=11 // pred_fallthru
        _
      // Predicated region
      $region17: #{text_encoder_forward.3} parent=11 // pred_check
        %p392 = pneg %p96
      $region18: #{text_encoder_forward.3} parent=11 // pred_check_branch
        %394 = sbr.rel (%p392) target = $region20
      $region19: #{text_encoder_forward.3} parent=11 // pred_region
        _
      $region20: #{text_encoder_forward.3} parent=11 // pred_fallthru
        _
      // Predicated region
      $region21: #{text_encoder_forward.3} parent=11 // pred_check
        %p395 = pneg %p117
      $region22: #{text_encoder_forward.3} parent=11 // pred_check_branch
        %397 = sbr.rel (%p395) target = $region24
      $region23: #{text_encoder_forward.3} parent=11 // pred_region
        _
      $region24: #{text_encoder_forward.3} parent=11 // pred_fallthru
        _
      // Predicated region
      $region25: #{text_encoder_forward.3} parent=11 // pred_check
        %p398 = pneg %p138
      $region26: #{text_encoder_forward.3} parent=11 // pred_check_branch
        %400 = sbr.rel (%p398) target = $region28
      $region27: #{text_encoder_forward.3} parent=11 // pred_region
        _
      $region28: #{text_encoder_forward.3} parent=11 // pred_fallthru
        _
      // Predicated region
      $region29: #{text_encoder_forward.3} parent=11 // pred_check
        %p401 = pneg %p159
      $region30: #{text_encoder_forward.3} parent=11 // pred_check_branch
        %403 = sbr.rel (%p401) target = $region32
      $region31: #{text_encoder_forward.3} parent=11 // pred_region
        _
      $region32: #{text_encoder_forward.3} parent=11 // pred_fallthru
        _
      // Predicated region
      $region33: #{text_encoder_forward.3} parent=11 // pred_check
        %p404 = pneg %p180
      $region34: #{text_encoder_forward.3} parent=11 // pred_check_branch
        %406 = sbr.rel (%p404) target = $region36
      $region35: #{text_encoder_forward.3} parent=11 // pred_region
        _
      $region36: #{text_encoder_forward.3} parent=11 // pred_fallthru
        _
      // Predicated region
      $region37: #{text_encoder_forward.3} parent=11 // pred_check
        %p407 = pneg %p201
      $region38: #{text_encoder_forward.3} parent=11 // pred_check_branch
        %409 = sbr.rel (%p407) target = $region40
      $region39: #{text_encoder_forward.3} parent=11 // pred_region
        _
      $region40: #{text_encoder_forward.3} parent=11 // pred_fallthru
        _
      // Predicated region
      $region41: #{text_encoder_forward.3} parent=11 // pred_check
        %p410 = pneg %p222
      $region42: #{text_encoder_forward.3} parent=11 // pred_check_branch
        %412 = sbr.rel (%p410) target = $region44
      $region43: #{text_encoder_forward.3} parent=11 // pred_region
        _
      $region44: #{text_encoder_forward.3} parent=11 // pred_fallthru
        _
      // Predicated region
      $region45: #{text_encoder_forward.3} parent=11 // pred_check
        %p413 = pneg %p243
      $region46: #{text_encoder_forward.3} parent=11 // pred_check_branch
        %415 = sbr.rel (%p413) target = $region48
      $region47: #{text_encoder_forward.3} parent=11 // pred_region
        _
      $region48: #{text_encoder_forward.3} parent=11 // pred_fallthru
        _
      // Predicated region
      $region49: #{text_encoder_forward.3} parent=11 // pred_check
        %p416 = pneg %p264
      $region50: #{text_encoder_forward.3} parent=11 // pred_check_branch
        %418 = sbr.rel (%p416) target = $region52
      $region51: #{text_encoder_forward.3} parent=11 // pred_region
        _
      $region52: #{text_encoder_forward.3} parent=11 // pred_fallthru
        _
      // Predicated region
      $region53: #{text_encoder_forward.3} parent=11 // pred_check
        %p419 = pneg %p285
      $region54: #{text_encoder_forward.3} parent=11 // pred_check_branch
        %421 = sbr.rel (%p419) target = $region56
      $region55: #{text_encoder_forward.3} parent=11 // pred_region
        _
      $region56: #{text_encoder_forward.3} parent=11 // pred_fallthru
        _
      // Predicated region
      $region57: #{text_encoder_forward.3} parent=11 // pred_check
        %p422 = pneg %p306
      $region58: #{text_encoder_forward.3} parent=11 // pred_check_branch
        %424 = sbr.rel (%p422) target = $region60
      $region59: #{text_encoder_forward.3} parent=11 // pred_region
        _
      $region60: #{text_encoder_forward.3} parent=11 // pred_fallthru
        _
      // Predicated region
      $region61: #{text_encoder_forward.3} parent=11 // pred_check
        %p425 = pneg %p327
      $region62: #{text_encoder_forward.3} parent=11 // pred_check_branch
        %427 = sbr.rel (%p425) target = $region64
      $region63: #{text_encoder_forward.3} parent=11 // pred_region
        _
      $region64: #{text_encoder_forward.3} parent=11 // pred_fallthru
        _
      // Predicated region
      $region65: #{text_encoder_forward.3} parent=11 // pred_check
        %p428 = pneg %p348
      $region66: #{text_encoder_forward.3} parent=11 // pred_check_branch
        %430 = sbr.rel (%p428) target = $region68
      $region67: #{text_encoder_forward.3} parent=11 // pred_region
        _
      $region68: #{text_encoder_forward.3} parent=11 // pred_fallthru
        _
    $region12: #{text_encoder_forward.3} parent=5 // pred_fallthru
      _
    %p431 = scmp.lt.s32.totalorder %s28, 2
    // Predicated region
    $region69: #{text_encoder_forward.3} parent=5 // pred_check
      %p432 = pneg %p431
    $region70: #{text_encoder_forward.3} parent=5 // pred_check_branch
      %434 = sbr.rel (%p432) target = $region72
    $region71: #{text_encoder_forward.3} parent=5 // pred_region
      // Predicated region
      $region73: #{text_encoder_forward.3} parent=71 // pred_check
        %p435 = pneg %p48
      $region74: #{text_encoder_forward.3} parent=71 // pred_check_branch
        %437 = sbr.rel (%p435) target = $region76
      $region75: #{text_encoder_forward.3} parent=71 // pred_region
        %p438 = scmp.lt.s32.totalorder %s28, 1
        %s439 = scalar_select %p438, %s28, 1
        %s440 = smul.addr %s439, 2
        %s441 = smul.addr %s440, 4
        %s442 = scalar_lea.vmem %s1, %s441
      $region76: #{text_encoder_forward.3} parent=71 // pred_fallthru
        _
    $region72: #{text_encoder_forward.3} parent=5 // pred_fallthru
      _
    %p443 = scmp.le.s32.totalorder 1, %s28
    %p444 = scmp.lt.s32.totalorder %s28, 3
    %p445 = pnand %p443, %p444
    %p446 = pneg %p445
    // Predicated region
    $region77: #{text_encoder_forward.3} parent=5 // pred_check
      _
    $region78: #{text_encoder_forward.3} parent=5 // pred_check_branch
      %448 = sbr.rel (%p445) target = $region80
    $region79: #{text_encoder_forward.3} parent=5 // pred_region
      %s449 = ssub.s32 %s28, 1
      %p450 = scmp.lt.s32.totalorder %s33, 1
      %s451 = scalar_select %p450, %s33, 1
      %s452 = smul.addr %s451, 2
      %s453 = smul.addr %s452, 4
      %s454 = scalar_lea.vmem %s1, %s453
      %p455 = pneg %p54
      %p456 = pneg %p51
      %p457 = pneg %p75
      %p458 = pneg %p72
      %p459 = pneg %p96
      %p460 = pneg %p93
      %p461 = pneg %p117
      %p462 = pneg %p114
      %p463 = pneg %p138
      %p464 = pneg %p135
      %p465 = pneg %p159
      %p466 = pneg %p156
      %p467 = pneg %p180
      %p468 = pneg %p177
      %p469 = pneg %p201
      %p470 = pneg %p198
      %p471 = pneg %p222
      %p472 = pneg %p219
      %p473 = pneg %p243
      %p474 = pneg %p240
      %p475 = pneg %p264
      %p476 = pneg %p261
      %p477 = pneg %p285
      %p478 = pneg %p282
      %p479 = pneg %p306
      %p480 = pneg %p303
      %p481 = pneg %p327
      %p482 = pneg %p324
      %p483 = pneg %p348
      %p484 = pneg %p345
      %p485 = pneg %p374
      %p486 = pneg %p371
      %p487 = scmp.lt.s32.totalorder %s33, 1
      %s488 = scalar_select %p487, %s33, 1
      %s489 = smul.addr %s488, 2
      %s490 = smul.addr %s489, 4
      %s491 = scalar_lea.vmem %s16, %s490
      %p492 = scmp.lt.s32.totalorder %s33, 1
      %s493 = scalar_select %p492, %s33, 1
      %s494 = smul.addr %s493, 2
      %s495 = smul.addr %s494, 4
      %s496 = scalar_lea.vmem %s1, %s495
      %p497 = scmp.lt.s32.totalorder %s33, 1
      %s498 = scalar_select %p497, %s33, 1
      %s499 = smul.addr %s498, 2
      %s500 = smul.addr %s499, 4
      %s501 = scalar_lea.vmem %s16, %s500
      %s503 = sld [smem:[#allocation3 + %s33]]
      %v504 = vld [vmem:[%s496] sm:$0xf]
      %v505 = vld [vmem:[%s496 + $0x4] sm:$0xf]
      %v506 = vunpack.c.l.bf16 %v504
      %v507 = vunpack.c.l.bf16 %v505
      %v508 = vld [vmem:[%s2] sm:$0xff]
      %v509 = vld [vmem:[%s2 + $0x8] sm:$0xff]
      %v510 = vld [vmem:[%s2 + $0x10] sm:$0xff]
      %v511 = vld [vmem:[%s2 + $0x18] sm:$0xff]
      %v512 = vld [vmem:[%s2 + $0x20] sm:$0xff]
      %v513 = vld [vmem:[%s2 + $0x28] sm:$0xff]
      %v514 = vld [vmem:[%s2 + $0x30] sm:$0xff]
      %v515 = vld [vmem:[%s2 + $0x38] sm:$0xff]
      %v516 = vld [vmem:[%s2 + $0x40] sm:$0xff]
      %v517 = vld [vmem:[%s2 + $0x48] sm:$0xff]
      %v518 = vld [vmem:[%s2 + $0x50] sm:$0xff]
      %v519 = vld [vmem:[%s2 + $0x58] sm:$0xff]
      %v520 = vld [vmem:[%s3] sm:$0x3f]
      %v522 = vlaneseq
      %v523 = vshrl.u32 %v522, 7
      %v524 = vsub.s32 0, %v523
      %v525 = vrot.slane %v520, %v524
      %v526 = vlaneseq
      %v527 = vshrl.u32 %v526, 7
      %v528 = vsub.s32 1, %v527
      %v529 = vrot.slane %v520, %v528
      %v530 = vlaneseq
      %v531 = vshrl.u32 %v530, 7
      %v532 = vsub.s32 2, %v531
      %v533 = vrot.slane %v520, %v532
      %v534 = vlaneseq
      %v535 = vshrl.u32 %v534, 7
      %v536 = vsub.s32 3, %v535
      %v537 = vrot.slane %v520, %v536
      %v538 = vlaneseq
      %v539 = vshrl.u32 %v538, 7
      %v540 = vsub.s32 4, %v539
      %v541 = vrot.slane %v520, %v540
      %v542 = vlaneseq
      %v543 = vshrl.u32 %v542, 7
      %v544 = vsub.s32 5, %v543
      %v545 = vrot.slane %v520, %v544
      %v554 = vunpack.c.l.b16 %v504
      %v555 = vunpack.c.l.b16 %v505
      %v556 = vpack.c.b16 %v555, %v554
      %v569 = vunpack.c.l.b16 %v508
      %v570 = vunpack.c.h.b16 %v508
      %v571 = vunpack.c.l.b16 %v509
      %v572 = vunpack.c.h.b16 %v509
      %v573 = vunpack.c.l.b16 %v510
      %v574 = vunpack.c.h.b16 %v510
      %v575 = vunpack.c.l.b16 %v511
      %v576 = vunpack.c.h.b16 %v511
      %v577 = vunpack.c.l.b16 %v512
      %v578 = vunpack.c.h.b16 %v512
      %v579 = vunpack.c.l.b16 %v513
      %v580 = vunpack.c.h.b16 %v513
      %v581 = vunpack.c.l.b16 %v514
      %v582 = vunpack.c.h.b16 %v514
      %v583 = vunpack.c.l.b16 %v515
      %v584 = vunpack.c.h.b16 %v515
      %v585 = vunpack.c.l.b16 %v516
      %v586 = vunpack.c.h.b16 %v516
      %v587 = vunpack.c.l.b16 %v517
      %v588 = vunpack.c.h.b16 %v517
      %v589 = vunpack.c.l.b16 %v518
      %v590 = vunpack.c.h.b16 %v518
      %v591 = vunpack.c.l.b16 %v519
      %v592 = vunpack.c.h.b16 %v519
      %v593 = vpack.c.b16 %v575, %v569
      %v594 = vpack.c.b16 %v576, %v570
      %v595 = vpack.c.b16 %v577, %v571
      %v596 = vpack.c.b16 %v578, %v572
      %v597 = vpack.c.b16 %v579, %v573
      %v598 = vpack.c.b16 %v580, %v574
      %v599 = vpack.c.b16 %v587, %v581
      %v600 = vpack.c.b16 %v588, %v582
      %v601 = vpack.c.b16 %v589, %v583
      %v602 = vpack.c.b16 %v590, %v584
      %v603 = vpack.c.b16 %v591, %v585
      %v604 = vpack.c.b16 %v592, %v586
      %vm617 = vcmask 261120
      %v619 = vsel %vm617, %v556, 0
      %621 = vmatprep.subr.bf16.mxu0 0
      %622 = vmatpush1.bf16.msra.mxu0 0
      %623 = vmatprep.subr.bf16.mxu0 0
      %624 = vmatpush1.bf16.msra.mxu0 0
      %625 = vmatprep.subr.bf16.mxu0 0
      %626 = vmatpush1.bf16.msra.mxu0 0
      %627 = vmatprep.subr.bf16.mxu0 0
      %628 = vmatpush1.bf16.msra.mxu0 0
      %629 = vmatprep.subr.bf16.mxu0 0
      %630 = vmatpush1.bf16.msra.mxu0 0
      %631 = vmatprep.subr.bf16.mxu0 0
      %632 = vmatpush1.bf16.msra.mxu0 0
      %633 = vmatprep.subr.bf16.mxu0 %v600
      %634 = vmatpush1.bf16.msra.mxu0 %v599
      %635 = vmatprep.subr.bf16.mxu0 %v594
      %636 = vmatpush1.bf16.msra.mxu0 %v593
      %637 = vmatprep.subr.bf16.mxu0 0
      %638 = vmatpush2.bf16.msra.mxu0 0
      %639 = vmatprep.subr.bf16.mxu0 0
      %640 = vmatpush2.bf16.msra.mxu0 0
      %641 = vmatprep.subr.bf16.mxu0 0
      %642 = vmatpush2.bf16.msra.mxu0 0
      %643 = vmatprep.subr.bf16.mxu0 0
      %644 = vmatpush2.bf16.msra.mxu0 0
      %645 = vmatprep.subr.bf16.mxu0 0
      %646 = vmatpush2.bf16.msra.mxu0 0
      %647 = vmatprep.subr.bf16.mxu0 0
      %648 = vmatpush2.bf16.msra.mxu0 0
      %649 = vmatprep.subr.bf16.mxu0 0
      %650 = vmatpush2.bf16.msra.mxu0 0
      %651 = vmatprep.subr.bf16.mxu0 0
      %652 = vmatpush2.bf16.msra.mxu0 0
      %653 = vmatprep.mubr.bf16.mxu0 0
      %654 = vmatmul.mubr.bf16.gmra.mxu0 %v619
      %v655 = vpop.f32.mrf.mxu0
      %v656 = vadd.f32 %v525, %v655
      %v657 = vpop.f32.mrf.mxu0
      %v658 = vadd.f32 %v529, %v657
      %v659 = vpop.f32.mrf.mxu0
      %v660 = vadd.f32 %v525, %v659
      %v661 = vpop.f32.mrf.mxu0
      %v662 = vadd.f32 %v529, %v661
      %663 = vdwg.mxu0
      %664 = vmatprep.subr.bf16.mxu0 0
      %665 = vmatpush1.bf16.msra.mxu0 0
      %666 = vmatprep.subr.bf16.mxu0 0
      %667 = vmatpush1.bf16.msra.mxu0 0
      %668 = vmatprep.subr.bf16.mxu0 0
      %669 = vmatpush1.bf16.msra.mxu0 0
      %670 = vmatprep.subr.bf16.mxu0 0
      %671 = vmatpush1.bf16.msra.mxu0 0
      %672 = vmatprep.subr.bf16.mxu0 0
      %673 = vmatpush1.bf16.msra.mxu0 0
      %674 = vmatprep.subr.bf16.mxu0 0
      %675 = vmatpush1.bf16.msra.mxu0 0
      %676 = vmatprep.subr.bf16.mxu0 %v602
      %677 = vmatpush1.bf16.msra.mxu0 %v601
      %678 = vmatprep.subr.bf16.mxu0 %v596
      %679 = vmatpush1.bf16.msra.mxu0 %v595
      %680 = vmatprep.subr.bf16.mxu0 0
      %681 = vmatpush2.bf16.msra.mxu0 0
      %682 = vmatprep.subr.bf16.mxu0 0
      %683 = vmatpush2.bf16.msra.mxu0 0
      %684 = vmatprep.subr.bf16.mxu0 0
      %685 = vmatpush2.bf16.msra.mxu0 0
      %686 = vmatprep.subr.bf16.mxu0 0
      %687 = vmatpush2.bf16.msra.mxu0 0
      %688 = vmatprep.subr.bf16.mxu0 0
      %689 = vmatpush2.bf16.msra.mxu0 0
      %690 = vmatprep.subr.bf16.mxu0 0
      %691 = vmatpush2.bf16.msra.mxu0 0
      %692 = vmatprep.subr.bf16.mxu0 0
      %693 = vmatpush2.bf16.msra.mxu0 0
      %694 = vmatprep.subr.bf16.mxu0 0
      %695 = vmatpush2.bf16.msra.mxu0 0
      %696 = vmatprep.mubr.bf16.mxu0 0
      %697 = vmatmul.mubr.bf16.gmra.mxu0 %v619
      %v698 = vpop.f32.mrf.mxu0
      %v699 = vadd.f32 %v533, %v698
      %v700 = vpop.f32.mrf.mxu0
      %v701 = vadd.f32 %v537, %v700
      %v702 = vpop.f32.mrf.mxu0
      %v703 = vadd.f32 %v533, %v702
      %v704 = vpop.f32.mrf.mxu0
      %v705 = vadd.f32 %v537, %v704
      %706 = vdwg.mxu0
      %707 = vmatprep.subr.bf16.mxu0 0
      %708 = vmatpush1.bf16.msra.mxu0 0
      %709 = vmatprep.subr.bf16.mxu0 0
      %710 = vmatpush1.bf16.msra.mxu0 0
      %711 = vmatprep.subr.bf16.mxu0 0
      %712 = vmatpush1.bf16.msra.mxu0 0
      %713 = vmatprep.subr.bf16.mxu0 0
      %714 = vmatpush1.bf16.msra.mxu0 0
      %715 = vmatprep.subr.bf16.mxu0 0
      %716 = vmatpush1.bf16.msra.mxu0 0
      %717 = vmatprep.subr.bf16.mxu0 0
      %718 = vmatpush1.bf16.msra.mxu0 0
      %719 = vmatprep.subr.bf16.mxu0 %v604
      %720 = vmatpush1.bf16.msra.mxu0 %v603
      %721 = vmatprep.subr.bf16.mxu0 %v598
      %722 = vmatpush1.bf16.msra.mxu0 %v597
      %723 = vmatprep.subr.bf16.mxu0 0
      %724 = vmatpush2.bf16.msra.mxu0 0
      %725 = vmatprep.subr.bf16.mxu0 0
      %726 = vmatpush2.bf16.msra.mxu0 0
      %727 = vmatprep.subr.bf16.mxu0 0
      %728 = vmatpush2.bf16.msra.mxu0 0
      %729 = vmatprep.subr.bf16.mxu0 0
      %730 = vmatpush2.bf16.msra.mxu0 0
      %731 = vmatprep.subr.bf16.mxu0 0
      %732 = vmatpush2.bf16.msra.mxu0 0
      %733 = vmatprep.subr.bf16.mxu0 0
      %734 = vmatpush2.bf16.msra.mxu0 0
      %735 = vmatprep.subr.bf16.mxu0 0
      %736 = vmatpush2.bf16.msra.mxu0 0
      %737 = vmatprep.subr.bf16.mxu0 0
      %738 = vmatpush2.bf16.msra.mxu0 0
      %739 = vmatprep.mubr.bf16.mxu0 0
      %740 = vmatmul.mubr.bf16.gmra.mxu0 %v619
      %v741 = vpop.f32.mrf.mxu0
      %v742 = vadd.f32 %v541, %v741
      %v743 = vpop.f32.mrf.mxu0
      %v744 = vadd.f32 %v545, %v743
      %v745 = vpop.f32.mrf.mxu0
      %v746 = vadd.f32 %v541, %v745
      %v747 = vpop.f32.mrf.mxu0
      %v748 = vadd.f32 %v545, %v747
      %749 = vdwg.mxu0
      %v750 = vpack.c.bf16 %v660, %v656
      %v751 = vpack.c.bf16 %v662, %v658
      %v752 = vpack.c.bf16 %v703, %v699
      %v753 = vpack.c.bf16 %v705, %v701
      %v754 = vpack.c.bf16 %v746, %v742
      %v755 = vpack.c.bf16 %v748, %v744
      %v756 = vlaneseq
      %v757 = vand.u32 %v756, 127
      %v758 = vlaneseq
      %v759 = vshrl.u32 %v758, 7
      %v760 = vadd.s32 %v759, 8
      %v761 = vsub.s32 %v757, %v759
      %v762 = vsub.s32 %v757, %v760
      %v763 = vstv %s503
      %vm764 = vcmp.lt.s32.totalorder %v757, %v763
      %vm765 = vcmp.eq.s32.totalorder %v761, 4294967292
      %vm766 = vcmp.eq.s32.totalorder %v762, 4294967292
      %vm767 = vcmp.eq.s32.totalorder %v761, 4294967293
      %vm768 = vcmp.eq.s32.totalorder %v762, 4294967293
      %vm769 = vcmp.eq.s32.totalorder %v761, 4294967294
      %vm770 = vcmp.eq.s32.totalorder %v762, 4294967294
      %vm771 = vcmp.eq.s32.totalorder %v761, 4294967295
      %vm772 = vcmp.eq.s32.totalorder %v762, 4294967295
      %vm773 = vcmp.eq.s32.totalorder %v761, 0
      %vm774 = vcmp.eq.s32.totalorder %v762, 0
      %vm775 = vcmp.eq.s32.totalorder %v761, 1
      %vm776 = vcmp.eq.s32.totalorder %v762, 1
      %vm777 = vcmp.eq.s32.totalorder %v761, 2
      %vm778 = vcmp.eq.s32.totalorder %v762, 2
      %vm779 = vcmp.eq.s32.totalorder %v761, 3
      %vm780 = vcmp.eq.s32.totalorder %v762, 3
      %vm781 = vcmp.eq.s32.totalorder %v761, 4
      %vm782 = vcmp.eq.s32.totalorder %v762, 4
      %v783 = vld [vmem:[%s4] sm:$0xf]
      %v784 = vld [vmem:[%s4 + $0x4] sm:$0x1]
      %v785 = vld [vmem:[%s5] sm:$0xf]
      %v786 = vld [vmem:[%s5 + $0x4] sm:$0x1]
      %v789 = vunpack.c.l.b16 %v783
      %v790 = vunpack.c.l.b16 %v784
      %v791 = vpack.c.b16 %v790, %v789
      %793 = vmatprep.subr.bf16.mxu0 0
      %794 = vmatpush1.bf16.xpose.msra.mxu0 0
      %795 = vmatprep.subr.bf16.mxu0 0
      %796 = vmatpush1.bf16.xpose.msra.mxu0 0
      %797 = vmatprep.subr.bf16.mxu0 0
      %798 = vmatpush1.bf16.xpose.msra.mxu0 0
      %799 = vmatprep.subr.bf16.mxu0 0
      %800 = vmatpush1.bf16.xpose.msra.mxu0 0
      %801 = vmatprep.subr.bf16.mxu0 0
      %802 = vmatpush1.bf16.xpose.msra.mxu0 0
      %803 = vmatprep.subr.bf16.mxu0 0
      %804 = vmatpush1.bf16.xpose.msra.mxu0 0
      %805 = vmatprep.subr.bf16.mxu0 0
      %806 = vmatpush1.bf16.xpose.msra.mxu0 0
      %807 = vmatprep.subr.bf16.mxu0 0
      %808 = vmatpush1.bf16.xpose.msra.mxu0 %v791
      %809 = vmatprep.subr.bf16.mxu0 0
      %810 = vmatpush2.bf16.xpose.msra.mxu0 0
      %811 = vmatprep.subr.bf16.mxu0 0
      %812 = vmatpush2.bf16.xpose.msra.mxu0 0
      %813 = vmatprep.subr.bf16.mxu0 0
      %814 = vmatpush2.bf16.xpose.msra.mxu0 0
      %815 = vmatprep.subr.bf16.mxu0 0
      %816 = vmatpush2.bf16.xpose.msra.mxu0 0
      %817 = vmatprep.subr.bf16.mxu0 0
      %818 = vmatpush2.bf16.xpose.msra.mxu0 0
      %819 = vmatprep.subr.bf16.mxu0 0
      %820 = vmatpush2.bf16.xpose.msra.mxu0 0
      %821 = vmatprep.subr.bf16.mxu0 0
      %822 = vmatpush2.bf16.xpose.msra.mxu0 0
      %823 = vmatprep.subr.bf16.mxu0 0
      %824 = vmatpush2.bf16.xpose.msra.mxu0 0
      %825 = vmatprep.mubr.bf16.mxu0 0
      %826 = vmatmul.mubr.bf16.gmra.mxu0 %v750
      %v827 = vpop.f32.mrf.mxu0
      %v828 = vadd.f32 0.0, %v827
      %v829 = vpop.f32.mrf.mxu0
      %v830 = vpop.f32.mrf.mxu0
      %v831 = vadd.f32 0.0, %v830
      %v832 = vpop.f32.mrf.mxu0
      %833 = vdwg.mxu0
      %835 = vset.pattern.permute.xlu0 0
      %836 = vperm.xlu0 %835, %v828
      %v837 = vpop.permute.xlu0 %836
      %840 = vset.pattern.permute.xlu0 0
      %841 = vperm.xlu0 %840, %v831
      %v842 = vpop.permute.xlu0 %841
      %v844 = vsel %vm765, %v837, 0.0
      %v845 = vsel %vm766, %v842, 0.0
      %846 = vmatprep.subr.bf16.mxu0 0
      %847 = vmatpush1.bf16.xpose.msra.mxu0 0
      %848 = vmatprep.subr.bf16.mxu0 0
      %849 = vmatpush1.bf16.xpose.msra.mxu0 0
      %850 = vmatprep.subr.bf16.mxu0 0
      %851 = vmatpush1.bf16.xpose.msra.mxu0 0
      %852 = vmatprep.subr.bf16.mxu0 0
      %853 = vmatpush1.bf16.xpose.msra.mxu0 0
      %854 = vmatprep.subr.bf16.mxu0 0
      %855 = vmatpush1.bf16.xpose.msra.mxu0 0
      %856 = vmatprep.subr.bf16.mxu0 0
      %857 = vmatpush1.bf16.xpose.msra.mxu0 0
      %858 = vmatprep.subr.bf16.mxu0 0
      %859 = vmatpush1.bf16.xpose.msra.mxu0 0
      %860 = vmatprep.subr.bf16.mxu0 0
      %861 = vmatpush1.bf16.xpose.msra.mxu0 %v751
      %862 = vmatprep.subr.bf16.mxu0 0
      %863 = vmatpush2.bf16.xpose.msra.mxu0 0
      %864 = vmatprep.subr.bf16.mxu0 0
      %865 = vmatpush2.bf16.xpose.msra.mxu0 0
      %866 = vmatprep.subr.bf16.mxu0 0
      %867 = vmatpush2.bf16.xpose.msra.mxu0 0
      %868 = vmatprep.subr.bf16.mxu0 0
      %869 = vmatpush2.bf16.xpose.msra.mxu0 0
      %870 = vmatprep.subr.bf16.mxu0 0
      %871 = vmatpush2.bf16.xpose.msra.mxu0 0
      %872 = vmatprep.subr.bf16.mxu0 0
      %873 = vmatpush2.bf16.xpose.msra.mxu0 0
      %874 = vmatprep.subr.bf16.mxu0 0
      %875 = vmatpush2.bf16.xpose.msra.mxu0 0
      %876 = vmatprep.subr.bf16.mxu0 0
      %877 = vmatpush2.bf16.xpose.msra.mxu0 0
      %878 = vmatprep.mubr.bf16.mxu0 0
      %879 = vmatmul.mubr.bf16.gmra.mxu0 %v750
      %v880 = vpop.f32.mrf.mxu0
      %v881 = vadd.f32 %v844, %v880
      %v882 = vpop.f32.mrf.mxu0
      %v883 = vpop.f32.mrf.mxu0
      %v884 = vadd.f32 %v845, %v883
      %v885 = vpop.f32.mrf.mxu0
      %886 = vdwg.mxu0
      %887 = vset.pattern.permute.xlu0 1
      %888 = vperm.xlu0 %887, %v828
      %v889 = vpop.permute.xlu0 %888
      %891 = vset.pattern.permute.xlu0 1
      %892 = vperm.xlu0 %891, %v831
      %v893 = vpop.permute.xlu0 %892
      %v895 = vsel %vm767, %v889, 0.0
      %v896 = vsel %vm768, %v893, 0.0
      %v897 = vadd.f32 %v881, %v895
      %v898 = vadd.f32 %v884, %v896
      %899 = vset.pattern.permute.xlu0 2
      %900 = vperm.xlu0 %899, %v828
      %v901 = vpop.permute.xlu0 %900
      %903 = vset.pattern.permute.xlu0 2
      %904 = vperm.xlu0 %903, %v831
      %v905 = vpop.permute.xlu0 %904
      %v907 = vsel %vm769, %v901, 0.0
      %v908 = vsel %vm770, %v905, 0.0
      %v909 = vadd.f32 %v897, %v907
      %v910 = vadd.f32 %v898, %v908
      %911 = vset.pattern.permute.xlu0 3
      %912 = vperm.xlu0 %911, %v828
      %v913 = vpop.permute.xlu0 %912
      %915 = vset.pattern.permute.xlu0 3
      %916 = vperm.xlu0 %915, %v831
      %v917 = vpop.permute.xlu0 %916
      %v919 = vsel %vm771, %v913, 0.0
      %v920 = vsel %vm772, %v917, 0.0
      %v921 = vadd.f32 %v909, %v919
      %v922 = vadd.f32 %v910, %v920
      %923 = vset.pattern.permute.xlu0 4
      %924 = vperm.xlu0 %923, %v828
      %v925 = vpop.permute.xlu0 %924
      %927 = vset.pattern.permute.xlu0 4
      %928 = vperm.xlu0 %927, %v831
      %v929 = vpop.permute.xlu0 %928
      %v931 = vsel %vm773, %v925, 0.0
      %v932 = vsel %vm774, %v929, 0.0
      %v933 = vadd.f32 %v921, %v931
      %v934 = vadd.f32 %v922, %v932
      %935 = vset.pattern.permute.xlu0 5
      %936 = vperm.xlu0 %935, %v828
      %v937 = vpop.permute.xlu0 %936
      %939 = vset.pattern.permute.xlu0 5
      %940 = vperm.xlu0 %939, %v831
      %v941 = vpop.permute.xlu0 %940
      %v943 = vsel %vm775, %v937, 0.0
      %v944 = vsel %vm776, %v941, 0.0
      %v945 = vadd.f32 %v933, %v943
      %v946 = vadd.f32 %v934, %v944
      %947 = vset.pattern.permute.xlu0 6
      %948 = vperm.xlu0 %947, %v828
      %v949 = vpop.permute.xlu0 %948
      %951 = vset.pattern.permute.xlu0 6
      %952 = vperm.xlu0 %951, %v831
      %v953 = vpop.permute.xlu0 %952
      %v955 = vsel %vm777, %v949, 0.0
      %v956 = vsel %vm778, %v953, 0.0
      %v957 = vadd.f32 %v945, %v955
      %v958 = vadd.f32 %v946, %v956
      %959 = vset.pattern.permute.xlu0 7
      %960 = vperm.xlu0 %959, %v828
      %v961 = vpop.permute.xlu0 %960
      %963 = vset.pattern.permute.xlu0 7
      %964 = vperm.xlu0 %963, %v831
      %v965 = vpop.permute.xlu0 %964
      %v967 = vsel %vm779, %v961, 0.0
      %v968 = vsel %vm780, %v965, 0.0
      %v969 = vadd.f32 %v957, %v967
      %v970 = vadd.f32 %v958, %v968
      %971 = vset.pattern.permute.xlu0 8
      %972 = vperm.xlu0 %971, %v828
      %v973 = vpop.permute.xlu0 %972
      %975 = vset.pattern.permute.xlu0 8
      %976 = vperm.xlu0 %975, %v831
      %v977 = vpop.permute.xlu0 %976
      %v979 = vsel %vm781, %v973, 0.0
      %v980 = vsel %vm782, %v977, 0.0
      %v981 = vadd.f32 %v969, %v979
      %v982 = vadd.f32 %v970, %v980
      %v983 = vsel %vm764, %v981, -10000.0
      %v984 = vsel %vm764, %v982, -10000.0
      %vm985 = vcmask 130048
      %v986 = vsel %vm985, %v983, -inf
      %987 = vmax.xlane.f32.xlu0 %v986
      %v988 = vpop.xlane.xlu0 %987
      %v989 = vsel %vm985, %v984, -inf
      %990 = vmax.xlane.f32.xlu0 %v989
      %v991 = vpop.xlane.xlu0 %990
      %v992 = vsub.f32 %v983, %v988
      %v993 = vsub.f32 %v984, %v991
      %v994 = vmul.f32 %v992, 1.442695
      %v995 = vpow.pop %v994
      %v996 = vmul.f32 %v993, 1.442695
      %v997 = vpow.pop %v996
      %v998 = vsel %vm985, %v995, 0.0
      %999 = vadd.xlane.f32.xlu0 %v998
      %v1000 = vpop.xlane.xlu0 %999
      %v1001 = vsel %vm985, %v997, 0.0
      %1002 = vadd.xlane.f32.xlu0 %v1001
      %v1003 = vpop.xlane.xlu0 %1002
      %v1004 = vrcp.pop %v1000
      %v1005 = vrcp.pop %v1003
      %v1006 = vmul.f32 %v995, %v1004
      %v1007 = vmul.f32 %v997, %v1005
      %v1008 = vpack.c.bf16 %v1007, %v1006
      %v1009 = vsel %vm765, %v1006, 0.0
      %v1010 = vsel %vm766, %v1007, 0.0
      %v1011 = vsel %vm985, %v1009, 0.0
      %1012 = vadd.xlane.f32.xlu0 %v1011
      %v1013 = vpop.xlane.xlu0 %1012
      %v1014 = vsel %vm985, %v1010, 0.0
      %1015 = vadd.xlane.f32.xlu0 %v1014
      %v1016 = vpop.xlane.xlu0 %1015
      %v1017 = vsel %vm767, %v1006, 0.0
      %v1018 = vsel %vm768, %v1007, 0.0
      %v1019 = vsel %vm985, %v1017, 0.0
      %1020 = vadd.xlane.f32.xlu0 %v1019
      %v1021 = vpop.xlane.xlu0 %1020
      %v1022 = vsel %vm985, %v1018, 0.0
      %1023 = vadd.xlane.f32.xlu0 %v1022
      %v1024 = vpop.xlane.xlu0 %1023
      %v1025 = vsel %vm769, %v1006, 0.0
      %v1026 = vsel %vm770, %v1007, 0.0
      %v1027 = vsel %vm985, %v1025, 0.0
      %1028 = vadd.xlane.f32.xlu0 %v1027
      %v1029 = vpop.xlane.xlu0 %1028
      %v1030 = vsel %vm985, %v1026, 0.0
      %1031 = vadd.xlane.f32.xlu0 %v1030
      %v1032 = vpop.xlane.xlu0 %1031
      %v1033 = vsel %vm771, %v1006, 0.0
      %v1034 = vsel %vm772, %v1007, 0.0
      %v1035 = vsel %vm985, %v1033, 0.0
      %1036 = vadd.xlane.f32.xlu0 %v1035
      %v1037 = vpop.xlane.xlu0 %1036
      %v1038 = vsel %vm985, %v1034, 0.0
      %1039 = vadd.xlane.f32.xlu0 %v1038
      %v1040 = vpop.xlane.xlu0 %1039
      %v1041 = vsel %vm773, %v1006, 0.0
      %v1042 = vsel %vm774, %v1007, 0.0
      %v1043 = vsel %vm985, %v1041, 0.0
      %1044 = vadd.xlane.f32.xlu0 %v1043
      %v1045 = vpop.xlane.xlu0 %1044
      %v1046 = vsel %vm985, %v1042, 0.0
      %1047 = vadd.xlane.f32.xlu0 %v1046
      %v1048 = vpop.xlane.xlu0 %1047
      %v1049 = vsel %vm775, %v1006, 0.0
      %v1050 = vsel %vm776, %v1007, 0.0
      %v1051 = vsel %vm985, %v1049, 0.0
      %1052 = vadd.xlane.f32.xlu0 %v1051
      %v1053 = vpop.xlane.xlu0 %1052
      %v1054 = vsel %vm985, %v1050, 0.0
      %1055 = vadd.xlane.f32.xlu0 %v1054
      %v1056 = vpop.xlane.xlu0 %1055
      %v1057 = vsel %vm777, %v1006, 0.0
      %v1058 = vsel %vm778, %v1007, 0.0
      %v1059 = vsel %vm985, %v1057, 0.0
      %1060 = vadd.xlane.f32.xlu0 %v1059
      %v1061 = vpop.xlane.xlu0 %1060
      %v1062 = vsel %vm985, %v1058, 0.0
      %1063 = vadd.xlane.f32.xlu0 %v1062
      %v1064 = vpop.xlane.xlu0 %1063
      %v1065 = vsel %vm779, %v1006, 0.0
      %v1066 = vsel %vm780, %v1007, 0.0
      %v1067 = vsel %vm985, %v1065, 0.0
      %1068 = vadd.xlane.f32.xlu0 %v1067
      %v1069 = vpop.xlane.xlu0 %1068
      %v1070 = vsel %vm985, %v1066, 0.0
      %1071 = vadd.xlane.f32.xlu0 %v1070
      %v1072 = vpop.xlane.xlu0 %1071
      %v1073 = vsel %vm781, %v1006, 0.0
      %v1074 = vsel %vm782, %v1007, 0.0
      %v1075 = vsel %vm985, %v1073, 0.0
      %1076 = vadd.xlane.f32.xlu0 %v1075
      %v1077 = vpop.xlane.xlu0 %1076
      %v1078 = vsel %vm985, %v1074, 0.0
      %1079 = vadd.xlane.f32.xlu0 %v1078
      %v1080 = vpop.xlane.xlu0 %1079
      %vm1081 = vcmask 7168
      %v1082 = vsel %vm1081, %v1013, %v1021
      %v1083 = vsel %vm1081, %v1016, %v1024
      %vm1084 = vcmask 15360
      %v1085 = vsel %vm1084, %v1082, %v1029
      %v1086 = vsel %vm1084, %v1083, %v1032
      %vm1087 = vcmask 23552
      %v1088 = vsel %vm1087, %v1085, %v1037
      %v1089 = vsel %vm1087, %v1086, %v1040
      %vm1090 = vcmask 31744
      %v1091 = vsel %vm1090, %v1088, %v1045
      %v1092 = vsel %vm1090, %v1089, %v1048
      %vm1093 = vcmask 39936
      %v1094 = vsel %vm1093, %v1091, %v1053
      %v1095 = vsel %vm1093, %v1092, %v1056
      %vm1096 = vcmask 48128
      %v1097 = vsel %vm1096, %v1094, %v1061
      %v1098 = vsel %vm1096, %v1095, %v1064
      %vm1099 = vcmask 56320
      %v1100 = vsel %vm1099, %v1097, %v1069
      %v1101 = vsel %vm1099, %v1098, %v1072
      %vm1102 = vcmask 64512
      %v1103 = vsel %vm1102, %v1100, %v1077
      %v1104 = vsel %vm1102, %v1101, %v1080
      %v1105 = vpack.c.bf16 %v1104, %v1103
      %v1108 = vunpack.c.l.b16 %v785
      %v1109 = vunpack.c.l.b16 %v786
      %v1110 = vpack.c.b16 %v1109, %v1108
      %vm1111 = vcmask 72704
      %v1113 = vsel %vm1111, %v1105, 0
      %vm1115 = vcmask 1043456
      %vm1116 = vcmask 1044480
      %v1117 = vsel %vm1115, 4294967295, 65535
      %v1118 = vsel %vm1116, %v1117, 0
      %v1120 = vand.u32 %v1110, %v1118
      %1122 = vmatprep.subr.bf16.mxu0 0
      %1123 = vmatpush1.bf16.msra.mxu0 0
      %1124 = vmatprep.subr.bf16.mxu0 0
      %1125 = vmatpush1.bf16.msra.mxu0 0
      %1126 = vmatprep.subr.bf16.mxu0 0
      %1127 = vmatpush1.bf16.msra.mxu0 0
      %1128 = vmatprep.subr.bf16.mxu0 0
      %1129 = vmatpush1.bf16.msra.mxu0 0
      %1130 = vmatprep.subr.bf16.mxu0 0
      %1131 = vmatpush1.bf16.msra.mxu0 0
      %1132 = vmatprep.subr.bf16.mxu0 0
      %1133 = vmatpush1.bf16.msra.mxu0 0
      %1134 = vmatprep.subr.bf16.mxu0 0
      %1135 = vmatpush1.bf16.msra.mxu0 0
      %1136 = vmatprep.subr.bf16.mxu0 0
      %1137 = vmatpush1.bf16.msra.mxu0 %v1120
      %1138 = vmatprep.subr.bf16.mxu0 0
      %1139 = vmatpush2.bf16.msra.mxu0 0
      %1140 = vmatprep.subr.bf16.mxu0 0
      %1141 = vmatpush2.bf16.msra.mxu0 0
      %1142 = vmatprep.subr.bf16.mxu0 0
      %1143 = vmatpush2.bf16.msra.mxu0 0
      %1144 = vmatprep.subr.bf16.mxu0 0
      %1145 = vmatpush2.bf16.msra.mxu0 0
      %1146 = vmatprep.subr.bf16.mxu0 0
      %1147 = vmatpush2.bf16.msra.mxu0 0
      %1148 = vmatprep.subr.bf16.mxu0 0
      %1149 = vmatpush2.bf16.msra.mxu0 0
      %1150 = vmatprep.subr.bf16.mxu0 0
      %1151 = vmatpush2.bf16.msra.mxu0 0
      %1152 = vmatprep.subr.bf16.mxu0 0
      %1153 = vmatpush2.bf16.msra.mxu0 0
      %1154 = vmatprep.mubr.bf16.mxu0 0
      %1155 = vmatmul.mubr.bf16.gmra.mxu0 %v1113
      %v1156 = vpop.f32.mrf.mxu0
      %v1157 = vadd.f32 0.0, %v1156
      %v1158 = vpop.f32.mrf.mxu0
      %v1159 = vpop.f32.mrf.mxu0
      %v1160 = vadd.f32 0.0, %v1159
      %v1161 = vpop.f32.mrf.mxu0
      %1162 = vdwg.mxu0
      %v1164 = vsel %vm985, %v1008, 0
      %1166 = vmatprep.subr.bf16.mxu0 0
      %1167 = vmatpush1.bf16.msra.mxu0 0
      %1168 = vmatprep.subr.bf16.mxu0 0
      %1169 = vmatpush1.bf16.msra.mxu0 0
      %1170 = vmatprep.subr.bf16.mxu0 0
      %1171 = vmatpush1.bf16.msra.mxu0 0
      %1172 = vmatprep.subr.bf16.mxu0 0
      %1173 = vmatpush1.bf16.msra.mxu0 0
      %1174 = vmatprep.subr.bf16.mxu0 0
      %1175 = vmatpush1.bf16.msra.mxu0 0
      %1176 = vmatprep.subr.bf16.mxu0 0
      %1177 = vmatpush1.bf16.msra.mxu0 0
      %1178 = vmatprep.subr.bf16.mxu0 0
      %1179 = vmatpush1.bf16.msra.mxu0 0
      %1180 = vmatprep.subr.bf16.mxu0 0
      %1181 = vmatpush1.bf16.msra.mxu0 %v752
      %1182 = vmatprep.subr.bf16.mxu0 0
      %1183 = vmatpush2.bf16.msra.mxu0 0
      %1184 = vmatprep.subr.bf16.mxu0 0
      %1185 = vmatpush2.bf16.msra.mxu0 0
      %1186 = vmatprep.subr.bf16.mxu0 0
      %1187 = vmatpush2.bf16.msra.mxu0 0
      %1188 = vmatprep.subr.bf16.mxu0 0
      %1189 = vmatpush2.bf16.msra.mxu0 0
      %1190 = vmatprep.subr.bf16.mxu0 0
      %1191 = vmatpush2.bf16.msra.mxu0 0
      %1192 = vmatprep.subr.bf16.mxu0 0
      %1193 = vmatpush2.bf16.msra.mxu0 0
      %1194 = vmatprep.subr.bf16.mxu0 0
      %1195 = vmatpush2.bf16.msra.mxu0 0
      %1196 = vmatprep.subr.bf16.mxu0 0
      %1197 = vmatpush2.bf16.msra.mxu0 0
      %1198 = vmatprep.mubr.bf16.mxu0 0
      %1199 = vmatmul.mubr.bf16.gmra.mxu0 %v1164
      %v1200 = vpop.f32.mrf.mxu0
      %v1201 = vadd.f32 %v1157, %v1200
      %v1202 = vpop.f32.mrf.mxu0
      %v1203 = vpop.f32.mrf.mxu0
      %v1204 = vadd.f32 %v1160, %v1203
      %v1205 = vpop.f32.mrf.mxu0
      %1206 = vdwg.mxu0
      %v1207 = vpack.c.bf16 %v1204, %v1201
      %1208 = vmatprep.subr.bf16.mxu0 0
      %1209 = vmatpush1.bf16.xpose.msra.mxu0 0
      %1210 = vmatprep.subr.bf16.mxu0 0
      %1211 = vmatpush1.bf16.xpose.msra.mxu0 0
      %1212 = vmatprep.subr.bf16.mxu0 0
      %1213 = vmatpush1.bf16.xpose.msra.mxu0 0
      %1214 = vmatprep.subr.bf16.mxu0 0
      %1215 = vmatpush1.bf16.xpose.msra.mxu0 0
      %1216 = vmatprep.subr.bf16.mxu0 0
      %1217 = vmatpush1.bf16.xpose.msra.mxu0 0
      %1218 = vmatprep.subr.bf16.mxu0 0
      %1219 = vmatpush1.bf16.xpose.msra.mxu0 0
      %1220 = vmatprep.subr.bf16.mxu0 0
      %1221 = vmatpush1.bf16.xpose.msra.mxu0 0
      %1222 = vmatprep.subr.bf16.mxu0 0
      %1223 = vmatpush1.bf16.xpose.msra.mxu0 %v791
      %1224 = vmatprep.subr.bf16.mxu0 0
      %1225 = vmatpush2.bf16.xpose.msra.mxu0 0
      %1226 = vmatprep.subr.bf16.mxu0 0
      %1227 = vmatpush2.bf16.xpose.msra.mxu0 0
      %1228 = vmatprep.subr.bf16.mxu0 0
      %1229 = vmatpush2.bf16.xpose.msra.mxu0 0
      %1230 = vmatprep.subr.bf16.mxu0 0
      %1231 = vmatpush2.bf16.xpose.msra.mxu0 0
      %1232 = vmatprep.subr.bf16.mxu0 0
      %1233 = vmatpush2.bf16.xpose.msra.mxu0 0
      %1234 = vmatprep.subr.bf16.mxu0 0
      %1235 = vmatpush2.bf16.xpose.msra.mxu0 0
      %1236 = vmatprep.subr.bf16.mxu0 0
      %1237 = vmatpush2.bf16.xpose.msra.mxu0 0
      %1238 = vmatprep.subr.bf16.mxu0 0
      %1239 = vmatpush2.bf16.xpose.msra.mxu0 0
      %1240 = vmatprep.mubr.bf16.mxu0 0
      %1241 = vmatmul.mubr.bf16.gmra.mxu0 %v753
      %v1242 = vpop.f32.mrf.mxu0
      %v1243 = vadd.f32 0.0, %v1242
      %v1244 = vpop.f32.mrf.mxu0
      %v1245 = vpop.f32.mrf.mxu0
      %v1246 = vadd.f32 0.0, %v1245
      %v1247 = vpop.f32.mrf.mxu0
      %1248 = vdwg.mxu0
      %1250 = vset.pattern.permute.xlu0 0
      %1251 = vperm.xlu0 %1250, %v1243
      %v1252 = vpop.permute.xlu0 %1251
      %1255 = vset.pattern.permute.xlu0 0
      %1256 = vperm.xlu0 %1255, %v1246
      %v1257 = vpop.permute.xlu0 %1256
      %v1259 = vsel %vm765, %v1252, 0.0
      %v1260 = vsel %vm766, %v1257, 0.0
      %1261 = vmatprep.subr.bf16.mxu0 0
      %1262 = vmatpush1.bf16.xpose.msra.mxu0 0
      %1263 = vmatprep.subr.bf16.mxu0 0
      %1264 = vmatpush1.bf16.xpose.msra.mxu0 0
      %1265 = vmatprep.subr.bf16.mxu0 0
      %1266 = vmatpush1.bf16.xpose.msra.mxu0 0
      %1267 = vmatprep.subr.bf16.mxu0 0
      %1268 = vmatpush1.bf16.xpose.msra.mxu0 0
      %1269 = vmatprep.subr.bf16.mxu0 0
      %1270 = vmatpush1.bf16.xpose.msra.mxu0 0
      %1271 = vmatprep.subr.bf16.mxu0 0
      %1272 = vmatpush1.bf16.xpose.msra.mxu0 0
      %1273 = vmatprep.subr.bf16.mxu0 0
      %1274 = vmatpush1.bf16.xpose.msra.mxu0 0
      %1275 = vmatprep.subr.bf16.mxu0 0
      %1276 = vmatpush1.bf16.xpose.msra.mxu0 %v754
      %1277 = vmatprep.subr.bf16.mxu0 0
      %1278 = vmatpush2.bf16.xpose.msra.mxu0 0
      %1279 = vmatprep.subr.bf16.mxu0 0
      %1280 = vmatpush2.bf16.xpose.msra.mxu0 0
      %1281 = vmatprep.subr.bf16.mxu0 0
      %1282 = vmatpush2.bf16.xpose.msra.mxu0 0
      %1283 = vmatprep.subr.bf16.mxu0 0
      %1284 = vmatpush2.bf16.xpose.msra.mxu0 0
      %1285 = vmatprep.subr.bf16.mxu0 0
      %1286 = vmatpush2.bf16.xpose.msra.mxu0 0
      %1287 = vmatprep.subr.bf16.mxu0 0
      %1288 = vmatpush2.bf16.xpose.msra.mxu0 0
      %1289 = vmatprep.subr.bf16.mxu0 0
      %1290 = vmatpush2.bf16.xpose.msra.mxu0 0
      %1291 = vmatprep.subr.bf16.mxu0 0
      %1292 = vmatpush2.bf16.xpose.msra.mxu0 0
      %1293 = vmatprep.mubr.bf16.mxu0 0
      %1294 = vmatmul.mubr.bf16.gmra.mxu0 %v753
      %v1295 = vpop.f32.mrf.mxu0
      %v1296 = vadd.f32 %v1259, %v1295
      %v1297 = vpop.f32.mrf.mxu0
      %v1298 = vpop.f32.mrf.mxu0
      %v1299 = vadd.f32 %v1260, %v1298
      %v1300 = vpop.f32.mrf.mxu0
      %1301 = vdwg.mxu0
      %1302 = vset.pattern.permute.xlu0 1
      %1303 = vperm.xlu0 %1302, %v1243
      %v1304 = vpop.permute.xlu0 %1303
      %1306 = vset.pattern.permute.xlu0 1
      %1307 = vperm.xlu0 %1306, %v1246
      %v1308 = vpop.permute.xlu0 %1307
      %v1310 = vsel %vm767, %v1304, 0.0
      %v1311 = vsel %vm768, %v1308, 0.0
      %v1312 = vadd.f32 %v1296, %v1310
      %v1313 = vadd.f32 %v1299, %v1311
      %1314 = vset.pattern.permute.xlu0 2
      %1315 = vperm.xlu0 %1314, %v1243
      %v1316 = vpop.permute.xlu0 %1315
      %1318 = vset.pattern.permute.xlu0 2
      %1319 = vperm.xlu0 %1318, %v1246
      %v1320 = vpop.permute.xlu0 %1319
      %v1322 = vsel %vm769, %v1316, 0.0
      %v1323 = vsel %vm770, %v1320, 0.0
      %v1324 = vadd.f32 %v1312, %v1322
      %v1325 = vadd.f32 %v1313, %v1323
      %1326 = vset.pattern.permute.xlu0 3
      %1327 = vperm.xlu0 %1326, %v1243
      %v1328 = vpop.permute.xlu0 %1327
      %1330 = vset.pattern.permute.xlu0 3
      %1331 = vperm.xlu0 %1330, %v1246
      %v1332 = vpop.permute.xlu0 %1331
      %v1334 = vsel %vm771, %v1328, 0.0
      %v1335 = vsel %vm772, %v1332, 0.0
      %v1336 = vadd.f32 %v1324, %v1334
      %v1337 = vadd.f32 %v1325, %v1335
      %1338 = vset.pattern.permute.xlu0 4
      %1339 = vperm.xlu0 %1338, %v1243
      %v1340 = vpop.permute.xlu0 %1339
      %1342 = vset.pattern.permute.xlu0 4
      %1343 = vperm.xlu0 %1342, %v1246
      %v1344 = vpop.permute.xlu0 %1343
      %v1346 = vsel %vm773, %v1340, 0.0
      %v1347 = vsel %vm774, %v1344, 0.0
      %v1348 = vadd.f32 %v1336, %v1346
      %v1349 = vadd.f32 %v1337, %v1347
      %1350 = vset.pattern.permute.xlu0 5
      %1351 = vperm.xlu0 %1350, %v1243
      %v1352 = vpop.permute.xlu0 %1351
      %1354 = vset.pattern.permute.xlu0 5
      %1355 = vperm.xlu0 %1354, %v1246
      %v1356 = vpop.permute.xlu0 %1355
      %v1358 = vsel %vm775, %v1352, 0.0
      %v1359 = vsel %vm776, %v1356, 0.0
      %v1360 = vadd.f32 %v1348, %v1358
      %v1361 = vadd.f32 %v1349, %v1359
      %1362 = vset.pattern.permute.xlu0 6
      %1363 = vperm.xlu0 %1362, %v1243
      %v1364 = vpop.permute.xlu0 %1363
      %1366 = vset.pattern.permute.xlu0 6
      %1367 = vperm.xlu0 %1366, %v1246
      %v1368 = vpop.permute.xlu0 %1367
      %v1370 = vsel %vm777, %v1364, 0.0
      %v1371 = vsel %vm778, %v1368, 0.0
      %v1372 = vadd.f32 %v1360, %v1370
      %v1373 = vadd.f32 %v1361, %v1371
      %1374 = vset.pattern.permute.xlu0 7
      %1375 = vperm.xlu0 %1374, %v1243
      %v1376 = vpop.permute.xlu0 %1375
      %1378 = vset.pattern.permute.xlu0 7
      %1379 = vperm.xlu0 %1378, %v1246
      %v1380 = vpop.permute.xlu0 %1379
      %v1382 = vsel %vm779, %v1376, 0.0
      %v1383 = vsel %vm780, %v1380, 0.0
      %v1384 = vadd.f32 %v1372, %v1382
      %v1385 = vadd.f32 %v1373, %v1383
      %1386 = vset.pattern.permute.xlu0 8
      %1387 = vperm.xlu0 %1386, %v1243
      %v1388 = vpop.permute.xlu0 %1387
      %1390 = vset.pattern.permute.xlu0 8
      %1391 = vperm.xlu0 %1390, %v1246
      %v1392 = vpop.permute.xlu0 %1391
      %v1394 = vsel %vm781, %v1388, 0.0
      %v1395 = vsel %vm782, %v1392, 0.0
      %v1396 = vadd.f32 %v1384, %v1394
      %v1397 = vadd.f32 %v1385, %v1395
      %v1398 = vsel %vm764, %v1396, -10000.0
      %v1399 = vsel %vm764, %v1397, -10000.0
      %v1400 = vsel %vm985, %v1398, -inf
      %1401 = vmax.xlane.f32.xlu0 %v1400
      %v1402 = vpop.xlane.xlu0 %1401
      %v1403 = vsel %vm985, %v1399, -inf
      %1404 = vmax.xlane.f32.xlu0 %v1403
      %v1405 = vpop.xlane.xlu0 %1404
      %v1406 = vsub.f32 %v1398, %v1402
      %v1407 = vsub.f32 %v1399, %v1405
      %v1408 = vmul.f32 %v1406, 1.442695
      %v1409 = vpow.pop %v1408
      %v1410 = vmul.f32 %v1407, 1.442695
      %v1411 = vpow.pop %v1410
      %v1412 = vsel %vm985, %v1409, 0.0
      %1413 = vadd.xlane.f32.xlu0 %v1412
      %v1414 = vpop.xlane.xlu0 %1413
      %v1415 = vsel %vm985, %v1411, 0.0
      %1416 = vadd.xlane.f32.xlu0 %v1415
      %v1417 = vpop.xlane.xlu0 %1416
      %v1418 = vrcp.pop %v1414
      %v1419 = vrcp.pop %v1417
      %v1420 = vmul.f32 %v1409, %v1418
      %v1421 = vmul.f32 %v1411, %v1419
      %v1422 = vpack.c.bf16 %v1421, %v1420
      %v1423 = vsel %vm765, %v1420, 0.0
      %v1424 = vsel %vm766, %v1421, 0.0
      %v1425 = vsel %vm985, %v1423, 0.0
      %1426 = vadd.xlane.f32.xlu0 %v1425
      %v1427 = vpop.xlane.xlu0 %1426
      %v1428 = vsel %vm985, %v1424, 0.0
      %1429 = vadd.xlane.f32.xlu0 %v1428
      %v1430 = vpop.xlane.xlu0 %1429
      %v1431 = vsel %vm767, %v1420, 0.0
      %v1432 = vsel %vm768, %v1421, 0.0
      %v1433 = vsel %vm985, %v1431, 0.0
      %1434 = vadd.xlane.f32.xlu0 %v1433
      %v1435 = vpop.xlane.xlu0 %1434
      %v1436 = vsel %vm985, %v1432, 0.0
      %1437 = vadd.xlane.f32.xlu0 %v1436
      %v1438 = vpop.xlane.xlu0 %1437
      %v1439 = vsel %vm769, %v1420, 0.0
      %v1440 = vsel %vm770, %v1421, 0.0
      %v1441 = vsel %vm985, %v1439, 0.0
      %1442 = vadd.xlane.f32.xlu0 %v1441
      %v1443 = vpop.xlane.xlu0 %1442
      %v1444 = vsel %vm985, %v1440, 0.0
      %1445 = vadd.xlane.f32.xlu0 %v1444
      %v1446 = vpop.xlane.xlu0 %1445
      %v1447 = vsel %vm771, %v1420, 0.0
      %v1448 = vsel %vm772, %v1421, 0.0
      %v1449 = vsel %vm985, %v1447, 0.0
      %1450 = vadd.xlane.f32.xlu0 %v1449
      %v1451 = vpop.xlane.xlu0 %1450
      %v1452 = vsel %vm985, %v1448, 0.0
      %1453 = vadd.xlane.f32.xlu0 %v1452
      %v1454 = vpop.xlane.xlu0 %1453
      %v1455 = vsel %vm773, %v1420, 0.0
      %v1456 = vsel %vm774, %v1421, 0.0
      %v1457 = vsel %vm985, %v1455, 0.0
      %1458 = vadd.xlane.f32.xlu0 %v1457
      %v1459 = vpop.xlane.xlu0 %1458
      %v1460 = vsel %vm985, %v1456, 0.0
      %1461 = vadd.xlane.f32.xlu0 %v1460
      %v1462 = vpop.xlane.xlu0 %1461
      %v1463 = vsel %vm775, %v1420, 0.0
      %v1464 = vsel %vm776, %v1421, 0.0
      %v1465 = vsel %vm985, %v1463, 0.0
      %1466 = vadd.xlane.f32.xlu0 %v1465
      %v1467 = vpop.xlane.xlu0 %1466
      %v1468 = vsel %vm985, %v1464, 0.0
      %1469 = vadd.xlane.f32.xlu0 %v1468
      %v1470 = vpop.xlane.xlu0 %1469
      %v1471 = vsel %vm777, %v1420, 0.0
      %v1472 = vsel %vm778, %v1421, 0.0
      %v1473 = vsel %vm985, %v1471, 0.0
      %1474 = vadd.xlane.f32.xlu0 %v1473
      %v1475 = vpop.xlane.xlu0 %1474
      %v1476 = vsel %vm985, %v1472, 0.0
      %1477 = vadd.xlane.f32.xlu0 %v1476
      %v1478 = vpop.xlane.xlu0 %1477
      %v1479 = vsel %vm779, %v1420, 0.0
      %v1480 = vsel %vm780, %v1421, 0.0
      %v1481 = vsel %vm985, %v1479, 0.0
      %1482 = vadd.xlane.f32.xlu0 %v1481
      %v1483 = vpop.xlane.xlu0 %1482
      %v1484 = vsel %vm985, %v1480, 0.0
      %1485 = vadd.xlane.f32.xlu0 %v1484
      %v1486 = vpop.xlane.xlu0 %1485
      %v1487 = vsel %vm781, %v1420, 0.0
      %v1488 = vsel %vm782, %v1421, 0.0
      %v1489 = vsel %vm985, %v1487, 0.0
      %1490 = vadd.xlane.f32.xlu0 %v1489
      %v1491 = vpop.xlane.xlu0 %1490
      %v1492 = vsel %vm985, %v1488, 0.0
      %1493 = vadd.xlane.f32.xlu0 %v1492
      %v1494 = vpop.xlane.xlu0 %1493
      %v1495 = vsel %vm1081, %v1427, %v1435
      %v1496 = vsel %vm1081, %v1430, %v1438
      %v1497 = vsel %vm1084, %v1495, %v1443
      %v1498 = vsel %vm1084, %v1496, %v1446
      %v1499 = vsel %vm1087, %v1497, %v1451
      %v1500 = vsel %vm1087, %v1498, %v1454
      %v1501 = vsel %vm1090, %v1499, %v1459
      %v1502 = vsel %vm1090, %v1500, %v1462
      %v1503 = vsel %vm1093, %v1501, %v1467
      %v1504 = vsel %vm1093, %v1502, %v1470
      %v1505 = vsel %vm1096, %v1503, %v1475
      %v1506 = vsel %vm1096, %v1504, %v1478
      %v1507 = vsel %vm1099, %v1505, %v1483
      %v1508 = vsel %vm1099, %v1506, %v1486
      %v1509 = vsel %vm1102, %v1507, %v1491
      %v1510 = vsel %vm1102, %v1508, %v1494
      %v1511 = vpack.c.bf16 %v1510, %v1509
      %v1513 = vsel %vm1111, %v1511, 0
      %1515 = vmatprep.subr.bf16.mxu0 0
      %1516 = vmatpush1.bf16.msra.mxu0 0
      %1517 = vmatprep.subr.bf16.mxu0 0
      %1518 = vmatpush1.bf16.msra.mxu0 0
      %1519 = vmatprep.subr.bf16.mxu0 0
      %1520 = vmatpush1.bf16.msra.mxu0 0
      %1521 = vmatprep.subr.bf16.mxu0 0
      %1522 = vmatpush1.bf16.msra.mxu0 0
      %1523 = vmatprep.subr.bf16.mxu0 0
      %1524 = vmatpush1.bf16.msra.mxu0 0
      %1525 = vmatprep.subr.bf16.mxu0 0
      %1526 = vmatpush1.bf16.msra.mxu0 0
      %1527 = vmatprep.subr.bf16.mxu0 0
      %1528 = vmatpush1.bf16.msra.mxu0 0
      %1529 = vmatprep.subr.bf16.mxu0 0
      %1530 = vmatpush1.bf16.msra.mxu0 %v1120
      %1531 = vmatprep.subr.bf16.mxu0 0
      %1532 = vmatpush2.bf16.msra.mxu0 0
      %1533 = vmatprep.subr.bf16.mxu0 0
      %1534 = vmatpush2.bf16.msra.mxu0 0
      %1535 = vmatprep.subr.bf16.mxu0 0
      %1536 = vmatpush2.bf16.msra.mxu0 0
      %1537 = vmatprep.subr.bf16.mxu0 0
      %1538 = vmatpush2.bf16.msra.mxu0 0
      %1539 = vmatprep.subr.bf16.mxu0 0
      %1540 = vmatpush2.bf16.msra.mxu0 0
      %1541 = vmatprep.subr.bf16.mxu0 0
      %1542 = vmatpush2.bf16.msra.mxu0 0
      %1543 = vmatprep.subr.bf16.mxu0 0
      %1544 = vmatpush2.bf16.msra.mxu0 0
      %1545 = vmatprep.subr.bf16.mxu0 0
      %1546 = vmatpush2.bf16.msra.mxu0 0
      %1547 = vmatprep.mubr.bf16.mxu0 0
      %1548 = vmatmul.mubr.bf16.gmra.mxu0 %v1513
      %v1549 = vpop.f32.mrf.mxu0
      %v1550 = vadd.f32 0.0, %v1549
      %v1551 = vpop.f32.mrf.mxu0
      %v1552 = vpop.f32.mrf.mxu0
      %v1553 = vadd.f32 0.0, %v1552
      %v1554 = vpop.f32.mrf.mxu0
      %1555 = vdwg.mxu0
      %v1557 = vsel %vm985, %v1422, 0
      %1559 = vmatprep.subr.bf16.mxu0 0
      %1560 = vmatpush1.bf16.msra.mxu0 0
      %1561 = vmatprep.subr.bf16.mxu0 0
      %1562 = vmatpush1.bf16.msra.mxu0 0
      %1563 = vmatprep.subr.bf16.mxu0 0
      %1564 = vmatpush1.bf16.msra.mxu0 0
      %1565 = vmatprep.subr.bf16.mxu0 0
      %1566 = vmatpush1.bf16.msra.mxu0 0
      %1567 = vmatprep.subr.bf16.mxu0 0
      %1568 = vmatpush1.bf16.msra.mxu0 0
      %1569 = vmatprep.subr.bf16.mxu0 0
      %1570 = vmatpush1.bf16.msra.mxu0 0
      %1571 = vmatprep.subr.bf16.mxu0 0
      %1572 = vmatpush1.bf16.msra.mxu0 0
      %1573 = vmatprep.subr.bf16.mxu0 0
      %1574 = vmatpush1.bf16.msra.mxu0 %v755
      %1575 = vmatprep.subr.bf16.mxu0 0
      %1576 = vmatpush2.bf16.msra.mxu0 0
      %1577 = vmatprep.subr.bf16.mxu0 0
      %1578 = vmatpush2.bf16.msra.mxu0 0
      %1579 = vmatprep.subr.bf16.mxu0 0
      %1580 = vmatpush2.bf16.msra.mxu0 0
      %1581 = vmatprep.subr.bf16.mxu0 0
      %1582 = vmatpush2.bf16.msra.mxu0 0
      %1583 = vmatprep.subr.bf16.mxu0 0
      %1584 = vmatpush2.bf16.msra.mxu0 0
      %1585 = vmatprep.subr.bf16.mxu0 0
      %1586 = vmatpush2.bf16.msra.mxu0 0
      %1587 = vmatprep.subr.bf16.mxu0 0
      %1588 = vmatpush2.bf16.msra.mxu0 0
      %1589 = vmatprep.subr.bf16.mxu0 0
      %1590 = vmatpush2.bf16.msra.mxu0 0
      %1591 = vmatprep.mubr.bf16.mxu0 0
      %1592 = vmatmul.mubr.bf16.gmra.mxu0 %v1557
      %v1593 = vpop.f32.mrf.mxu0
      %v1594 = vadd.f32 %v1550, %v1593
      %v1595 = vpop.f32.mrf.mxu0
      %v1596 = vpop.f32.mrf.mxu0
      %v1597 = vadd.f32 %v1553, %v1596
      %v1598 = vpop.f32.mrf.mxu0
      %1599 = vdwg.mxu0
      %v1600 = vpack.c.bf16 %v1597, %v1594
      %v1601 = vld [vmem:[%s6] sm:$0xf]
      %v1602 = vld [vmem:[%s6 + $0x4] sm:$0xf]
      %v1603 = vld [vmem:[%s6 + $0x8] sm:$0xf]
      %v1604 = vld [vmem:[%s6 + $0xc] sm:$0xf]
      %v1605 = vld [vmem:[%s6 + $0x10] sm:$0xf]
      %v1606 = vld [vmem:[%s6 + $0x14] sm:$0xf]
      %v1607 = vld [vmem:[%s6 + $0x18] sm:$0xf]
      %v1608 = vld [vmem:[%s6 + $0x1c] sm:$0xf]
      %v1609 = vld [vmem:[%s6 + $0x20] sm:$0xf]
      %v1610 = vld [vmem:[%s6 + $0x24] sm:$0xf]
      %v1611 = vld [vmem:[%s6 + $0x28] sm:$0xf]
      %v1612 = vld [vmem:[%s6 + $0x2c] sm:$0xf]
      %v1613 = vld [vmem:[%s6 + $0x30] sm:$0xf]
      %v1614 = vld [vmem:[%s6 + $0x34] sm:$0xf]
      %v1615 = vld [vmem:[%s6 + $0x38] sm:$0xf]
      %v1616 = vld [vmem:[%s6 + $0x3c] sm:$0xf]
      %v1617 = vld [vmem:[%s6 + $0x40] sm:$0xf]
      %v1618 = vld [vmem:[%s6 + $0x44] sm:$0xf]
      %v1619 = vld [vmem:[%s6 + $0x48] sm:$0xf]
      %v1620 = vld [vmem:[%s6 + $0x4c] sm:$0xf]
      %v1621 = vld [vmem:[%s6 + $0x50] sm:$0xf]
      %v1622 = vld [vmem:[%s6 + $0x54] sm:$0xf]
      %v1623 = vld [vmem:[%s6 + $0x58] sm:$0xf]
      %v1624 = vld [vmem:[%s6 + $0x5c] sm:$0xf]
      %v1625 = vld [vmem:[%s6 + $0x60] sm:$0xf]
      %v1626 = vld [vmem:[%s6 + $0x64] sm:$0xf]
      %v1627 = vld [vmem:[%s6 + $0x68] sm:$0xf]
      %v1628 = vld [vmem:[%s6 + $0x6c] sm:$0xf]
      %v1629 = vld [vmem:[%s6 + $0x70] sm:$0xf]
      %v1630 = vld [vmem:[%s6 + $0x74] sm:$0xf]
      %v1631 = vld [vmem:[%s6 + $0x78] sm:$0xf]
      %v1632 = vld [vmem:[%s6 + $0x7c] sm:$0xf]
      %v1633 = vld [vmem:[%s7] sm:$0x1]
      %v1635 = vlaneseq
      %v1636 = vshrl.u32 %v1635, 7
      %v1637 = vsub.s32 0, %v1636
      %v1638 = vrot.slane %v1633, %v1637
      %v1672 = vunpack.c.l.b16 %v1601
      %v1673 = vunpack.c.l.b16 %v1602
      %v1674 = vunpack.c.l.b16 %v1603
      %v1675 = vunpack.c.l.b16 %v1604
      %v1676 = vunpack.c.l.b16 %v1605
      %v1677 = vunpack.c.l.b16 %v1606
      %v1678 = vunpack.c.l.b16 %v1607
      %v1679 = vunpack.c.l.b16 %v1608
      %v1680 = vunpack.c.l.b16 %v1609
      %v1681 = vunpack.c.l.b16 %v1610
      %v1682 = vunpack.c.l.b16 %v1611
      %v1683 = vunpack.c.l.b16 %v1612
      %v1684 = vunpack.c.l.b16 %v1613
      %v1685 = vunpack.c.l.b16 %v1614
      %v1686 = vunpack.c.l.b16 %v1615
      %v1687 = vunpack.c.l.b16 %v1616
      %v1688 = vunpack.c.l.b16 %v1617
      %v1689 = vunpack.c.l.b16 %v1618
      %v1690 = vunpack.c.l.b16 %v1619
      %v1691 = vunpack.c.l.b16 %v1620
      %v1692 = vunpack.c.l.b16 %v1621
      %v1693 = vunpack.c.l.b16 %v1622
      %v1694 = vunpack.c.l.b16 %v1623
      %v1695 = vunpack.c.l.b16 %v1624
      %v1696 = vunpack.c.l.b16 %v1625
      %v1697 = vunpack.c.l.b16 %v1626
      %v1698 = vunpack.c.l.b16 %v1627
      %v1699 = vunpack.c.l.b16 %v1628
      %v1700 = vunpack.c.l.b16 %v1629
      %v1701 = vunpack.c.l.b16 %v1630
      %v1702 = vunpack.c.l.b16 %v1631
      %v1703 = vunpack.c.l.b16 %v1632
      %v1704 = vpack.c.b16 %v1673, %v1672
      %v1705 = vpack.c.b16 %v1675, %v1674
      %v1706 = vpack.c.b16 %v1677, %v1676
      %v1707 = vpack.c.b16 %v1679, %v1678
      %v1708 = vpack.c.b16 %v1681, %v1680
      %v1709 = vpack.c.b16 %v1683, %v1682
      %v1710 = vpack.c.b16 %v1685, %v1684
      %v1711 = vpack.c.b16 %v1687, %v1686
      %v1712 = vpack.c.b16 %v1689, %v1688
      %v1713 = vpack.c.b16 %v1691, %v1690
      %v1714 = vpack.c.b16 %v1693, %v1692
      %v1715 = vpack.c.b16 %v1695, %v1694
      %v1716 = vpack.c.b16 %v1697, %v1696
      %v1717 = vpack.c.b16 %v1699, %v1698
      %v1718 = vpack.c.b16 %v1701, %v1700
      %v1719 = vpack.c.b16 %v1703, %v1702
      %1736 = vmatprep.subr.bf16.mxu0 0
      %1737 = vmatpush1.bf16.msra.mxu0 %v1711
      %1738 = vmatprep.subr.bf16.mxu0 0
      %1739 = vmatpush1.bf16.msra.mxu0 %v1710
      %1740 = vmatprep.subr.bf16.mxu0 0
      %1741 = vmatpush1.bf16.msra.mxu0 %v1709
      %1742 = vmatprep.subr.bf16.mxu0 0
      %1743 = vmatpush1.bf16.msra.mxu0 %v1708
      %1744 = vmatprep.subr.bf16.mxu0 0
      %1745 = vmatpush1.bf16.msra.mxu0 %v1707
      %1746 = vmatprep.subr.bf16.mxu0 0
      %1747 = vmatpush1.bf16.msra.mxu0 %v1706
      %1748 = vmatprep.subr.bf16.mxu0 0
      %1749 = vmatpush1.bf16.msra.mxu0 %v1705
      %1750 = vmatprep.subr.bf16.mxu0 0
      %1751 = vmatpush1.bf16.msra.mxu0 %v1704
      %1752 = vmatprep.subr.bf16.mxu0 0
      %1753 = vmatpush2.bf16.msra.mxu0 %v1719
      %1754 = vmatprep.subr.bf16.mxu0 0
      %1755 = vmatpush2.bf16.msra.mxu0 %v1718
      %1756 = vmatprep.subr.bf16.mxu0 0
      %1757 = vmatpush2.bf16.msra.mxu0 %v1717
      %1758 = vmatprep.subr.bf16.mxu0 0
      %1759 = vmatpush2.bf16.msra.mxu0 %v1716
      %1760 = vmatprep.subr.bf16.mxu0 0
      %1761 = vmatpush2.bf16.msra.mxu0 %v1715
      %1762 = vmatprep.subr.bf16.mxu0 0
      %1763 = vmatpush2.bf16.msra.mxu0 %v1714
      %1764 = vmatprep.subr.bf16.mxu0 0
      %1765 = vmatpush2.bf16.msra.mxu0 %v1713
      %1766 = vmatprep.subr.bf16.mxu0 0
      %1767 = vmatpush2.bf16.msra.mxu0 %v1712
      %1768 = vmatprep.mubr.bf16.mxu0 %v1600
      %1769 = vmatmul.mubr.bf16.gmra.mxu0 %v1207
      %v1770 = vpop.f32.mrf.mxu0
      %v1771 = vadd.f32 %v1638, %v1770
      %v1772 = vpop.f32.mrf.mxu0
      %v1773 = vpop.f32.mrf.mxu0
      %v1774 = vadd.f32 %v1638, %v1773
      %v1775 = vpop.f32.mrf.mxu0
      %1776 = vdwg.mxu0
      %v1777 = vadd.f32 %v506, %v1771
      %v1778 = vadd.f32 %v507, %v1774
      %v1779 = vld [vmem:[%s8] sm:$0x1]
      %v1780 = vld [vmem:[%s9] sm:$0x1]
      %v1781 = vsel %vm617, %v1777, 0.0
      %1782 = vadd.xlane.f32.xlu0 %v1781
      %v1783 = vpop.xlane.xlu0 %1782
      %v1784 = vsel %vm617, %v1778, 0.0
      %1785 = vadd.xlane.f32.xlu0 %v1784
      %v1786 = vpop.xlane.xlu0 %1785
      %v1787 = vrcp.pop 32.0
      %v1788 = vmul.f32 %v1783, %v1787
      %v1789 = vmul.f32 %v1786, %v1787
      %v1790 = vsub.f32 %v1777, %v1788
      %v1791 = vsub.f32 %v1778, %v1789
      %v1792 = vmul.f32 %v1790, %v1790
      %v1793 = vmul.f32 %v1791, %v1791
      %v1794 = vsel %vm617, %v1792, 0.0
      %1795 = vadd.xlane.f32.xlu0 %v1794
      %v1796 = vpop.xlane.xlu0 %1795
      %v1797 = vsel %vm617, %v1793, 0.0
      %1798 = vadd.xlane.f32.xlu0 %v1797
      %v1799 = vpop.xlane.xlu0 %1798
      %v1800 = vmul.f32 %v1796, %v1787
      %v1801 = vmul.f32 %v1799, %v1787
      %v1802 = vadd.f32 %v1800, 1e-05
      %v1803 = vadd.f32 %v1801, 1e-05
      %v1804 = vrsqrt.pop %v1802
      %v1805 = vrsqrt.pop %v1803
      %v1806 = vmul.f32 %v1790, %v1804
      %v1807 = vmul.f32 %v1791, %v1805
      %v1809 = vlaneseq
      %v1810 = vshrl.u32 %v1809, 7
      %v1811 = vsub.s32 0, %v1810
      %v1812 = vrot.slane %v1779, %v1811
      %v1814 = vmul.f32 %v1806, %v1812
      %v1815 = vmul.f32 %v1807, %v1812
      %v1817 = vlaneseq
      %v1818 = vshrl.u32 %v1817, 7
      %v1819 = vsub.s32 0, %v1818
      %v1820 = vrot.slane %v1780, %v1819
      %v1822 = vadd.f32 %v1814, %v1820
      %v1823 = vadd.f32 %v1815, %v1820
      %vm1824 = vcmp.lt.s32.totalorder %v759, %v763
      %vm1825 = vcmp.lt.s32.totalorder %v760, %v763
      %v1826 = vsel %vm1824, 1, 0
      %v1827 = vsel %vm1825, 1, 0
      %vm1828 = vcmp.eq.s32.totalorder %v1826, 1
      %vm1829 = vcmp.eq.s32.totalorder %v1827, 1
      %v1830 = vsel %vm1828, %v1822, 0.0
      %v1831 = vsel %vm1829, %v1823, 0.0
      %v1832 = vrot.slane %v1830, 7
      %v1833 = vrot.slane %v1831, 7
      %vm1834 = vcmp.lt.s32.totalorder %v759, 1
      %v1835 = vsel %vm1834, %v1832, %v1833
      %v1836 = vsel %vm1834, %v1833, %v1832
      %v1837 = vadd.s32 %v759, 4294967295
      %v1838 = vadd.s32 %v760, 4294967295
      %vm1839 = vcmp.ge.s32.totalorder %v1837, 0
      %vm1840 = vcmp.ge.s32.totalorder %v1838, 0
      %vm1841 = vcmp.lt.s32.totalorder %v1837, 16
      %vm1842 = vcmp.lt.s32.totalorder %v1838, 16
      %vm1843 = vmand %vm1839, %vm1841
      %vm1844 = vmand %vm1840, %vm1842
      %v1845 = vsel %vm1843, 1, 0
      %v1846 = vsel %vm1844, 1, 0
      %vm1847 = vcmp.eq.s32.totalorder %v1845, 1
      %vm1848 = vcmp.eq.s32.totalorder %v1846, 1
      %v1849 = vsel %vm1847, %v1836, 0.0
      %v1850 = vsel %vm1848, %v1835, 0.0
      %v1851 = vrot.slane %v1830, 1
      %v1852 = vrot.slane %v1831, 1
      %vm1853 = vcmp.lt.s32.totalorder %v759, 7
      %v1854 = vsel %vm1853, %v1851, %v1852
      %v1855 = vsel %vm1853, %v1852, %v1851
      %v1856 = vadd.s32 %v759, 1
      %v1857 = vadd.s32 %v760, 1
      %vm1858 = vcmp.ge.s32.totalorder %v1856, 0
      %vm1859 = vcmp.ge.s32.totalorder %v1857, 0
      %vm1860 = vcmp.lt.s32.totalorder %v1856, 16
      %vm1861 = vcmp.lt.s32.totalorder %v1857, 16
      %vm1862 = vmand %vm1858, %vm1860
      %vm1863 = vmand %vm1859, %vm1861
      %v1864 = vsel %vm1862, 1, 0
      %v1865 = vsel %vm1863, 1, 0
      %vm1866 = vcmp.eq.s32.totalorder %v1864, 1
      %vm1867 = vcmp.eq.s32.totalorder %v1865, 1
      %v1868 = vsel %vm1866, %v1854, 0.0
      %v1869 = vsel %vm1867, %v1855, 0.0
      %1872 = vrot.lane.b32.xlu0 %v1830, 32
      %v1873 = vpop.permute.xlu0 %1872
      %1874 = vrot.lane.b32.xlu0 %v1831, 32
      %v1875 = vpop.permute.xlu0 %1874
      %1880 = vrot.lane.b32.xlu0 %v1868, 64
      %v1881 = vpop.permute.xlu0 %1880
      %1882 = vrot.lane.b32.xlu0 %v1869, 64
      %v1883 = vpop.permute.xlu0 %1882
      %v1886 = vsel %vm617, %v1849, %v1873
      %v1887 = vsel %vm617, %v1850, %v1875
      %vm1888 = vcmask 523264
      %v1889 = vsel %vm1888, %v1886, %v1881
      %v1890 = vsel %vm1888, %v1887, %v1883
      %v1891 = vpack.c.bf16 %v1890, %v1889
      %v1892 = vld [vmem:[%s10] sm:$0xf]
      %v1893 = vld [vmem:[%s10 + $0x4] sm:$0xf]
      %v1894 = vld [vmem:[%s10 + $0x8] sm:$0xf]
      %v1895 = vld [vmem:[%s10 + $0xc] sm:$0xf]
      %v1896 = vld [vmem:[%s10 + $0x10] sm:$0xf]
      %v1897 = vld [vmem:[%s10 + $0x14] sm:$0xf]
      %v1898 = vld [vmem:[%s10 + $0x18] sm:$0xf]
      %v1899 = vld [vmem:[%s10 + $0x1c] sm:$0xf]
      %v1900 = vld [vmem:[%s10 + $0x20] sm:$0xf]
      %v1901 = vld [vmem:[%s10 + $0x24] sm:$0xf]
      %v1902 = vld [vmem:[%s10 + $0x28] sm:$0xf]
      %v1903 = vld [vmem:[%s10 + $0x2c] sm:$0xf]
      %v1904 = vld [vmem:[%s11] sm:$0x1]
      %v1906 = vlaneseq
      %v1907 = vshrl.u32 %v1906, 7
      %v1908 = vsub.s32 0, %v1907
      %v1909 = vrot.slane %v1904, %v1908
      %v1923 = vunpack.c.l.b16 %v1892
      %v1924 = vunpack.c.l.b16 %v1893
      %v1925 = vunpack.c.l.b16 %v1894
      %v1926 = vunpack.c.l.b16 %v1895
      %v1927 = vunpack.c.l.b16 %v1896
      %v1928 = vunpack.c.l.b16 %v1897
      %v1929 = vunpack.c.l.b16 %v1898
      %v1930 = vunpack.c.l.b16 %v1899
      %v1931 = vunpack.c.l.b16 %v1900
      %v1932 = vunpack.c.l.b16 %v1901
      %v1933 = vunpack.c.l.b16 %v1902
      %v1934 = vunpack.c.l.b16 %v1903
      %v1935 = vpack.c.b16 %v1924, %v1923
      %v1936 = vpack.c.b16 %v1926, %v1925
      %v1937 = vpack.c.b16 %v1928, %v1927
      %v1938 = vpack.c.b16 %v1930, %v1929
      %v1939 = vpack.c.b16 %v1932, %v1931
      %v1940 = vpack.c.b16 %v1934, %v1933
      %vm1947 = vcmask 785408
      %v1949 = vsel %vm1947, %v1891, 0
      %1951 = vmatprep.subr.bf16.mxu0 0
      %1952 = vmatpush1.bf16.msra.mxu0 0
      %1953 = vmatprep.subr.bf16.mxu0 0
      %1954 = vmatpush1.bf16.msra.mxu0 0
      %1955 = vmatprep.subr.bf16.mxu0 0
      %1956 = vmatpush1.bf16.msra.mxu0 %v1940
      %1957 = vmatprep.subr.bf16.mxu0 0
      %1958 = vmatpush1.bf16.msra.mxu0 %v1939
      %1959 = vmatprep.subr.bf16.mxu0 0
      %1960 = vmatpush1.bf16.msra.mxu0 %v1938
      %1961 = vmatprep.subr.bf16.mxu0 0
      %1962 = vmatpush1.bf16.msra.mxu0 %v1937
      %1963 = vmatprep.subr.bf16.mxu0 0
      %1964 = vmatpush1.bf16.msra.mxu0 %v1936
      %1965 = vmatprep.subr.bf16.mxu0 0
      %1966 = vmatpush1.bf16.msra.mxu0 %v1935
      %1967 = vmatprep.subr.bf16.mxu0 0
      %1968 = vmatpush2.bf16.msra.mxu0 0
      %1969 = vmatprep.subr.bf16.mxu0 0
      %1970 = vmatpush2.bf16.msra.mxu0 0
      %1971 = vmatprep.subr.bf16.mxu0 0
      %1972 = vmatpush2.bf16.msra.mxu0 0
      %1973 = vmatprep.subr.bf16.mxu0 0
      %1974 = vmatpush2.bf16.msra.mxu0 0
      %1975 = vmatprep.subr.bf16.mxu0 0
      %1976 = vmatpush2.bf16.msra.mxu0 0
      %1977 = vmatprep.subr.bf16.mxu0 0
      %1978 = vmatpush2.bf16.msra.mxu0 0
      %1979 = vmatprep.subr.bf16.mxu0 0
      %1980 = vmatpush2.bf16.msra.mxu0 0
      %1981 = vmatprep.subr.bf16.mxu0 0
      %1982 = vmatpush2.bf16.msra.mxu0 0
      %1983 = vmatprep.mubr.bf16.mxu0 0
      %1984 = vmatmul.mubr.bf16.gmra.mxu0 %v1949
      %v1985 = vpop.f32.mrf.mxu0
      %v1986 = vadd.f32 %v1909, %v1985
      %v1987 = vpop.f32.mrf.mxu0
      %v1988 = vpop.f32.mrf.mxu0
      %v1989 = vadd.f32 %v1909, %v1988
      %v1990 = vpop.f32.mrf.mxu0
      %1991 = vdwg.mxu0
      %v1992 = vmax.f32 %v1986, 0.0
      %v1993 = vmax.f32 %v1989, 0.0
      %v1994 = vsel %vm1828, %v1992, 0.0
      %v1995 = vsel %vm1829, %v1993, 0.0
      %v1996 = vrot.slane %v1994, 7
      %v1997 = vrot.slane %v1995, 7
      %v1998 = vsel %vm1834, %v1996, %v1997
      %v1999 = vsel %vm1834, %v1997, %v1996
      %v2000 = vsel %vm1847, %v1999, 0.0
      %v2001 = vsel %vm1848, %v1998, 0.0
      %v2002 = vrot.slane %v1994, 1
      %v2003 = vrot.slane %v1995, 1
      %v2004 = vsel %vm1853, %v2002, %v2003
      %v2005 = vsel %vm1853, %v2003, %v2002
      %v2006 = vsel %vm1866, %v2004, 0.0
      %v2007 = vsel %vm1867, %v2005, 0.0
      %2010 = vrot.lane.b32.xlu0 %v1994, 64
      %v2011 = vpop.permute.xlu0 %2010
      %2012 = vrot.lane.b32.xlu0 %v1995, 64
      %v2013 = vpop.permute.xlu0 %2012
      %v2016 = vsel %vm1888, %v2000, %v2011
      %v2017 = vsel %vm1888, %v2001, %v2013
      %v2018 = vpack.c.bf16 %v2017, %v2016
      %v2019 = vpack.c.bf16 %v2007, %v2006
      %v2020 = vld [vmem:[%s12] sm:$0xf]
      %v2021 = vld [vmem:[%s12 + $0x4] sm:$0xf]
      %v2022 = vld [vmem:[%s12 + $0x8] sm:$0xf]
      %v2023 = vld [vmem:[%s12 + $0xc] sm:$0xf]
      %v2024 = vld [vmem:[%s12 + $0x10] sm:$0xf]
      %v2025 = vld [vmem:[%s12 + $0x14] sm:$0xf]
      %v2026 = vld [vmem:[%s12 + $0x18] sm:$0xf]
      %v2027 = vld [vmem:[%s12 + $0x1c] sm:$0xf]
      %v2028 = vld [vmem:[%s12 + $0x20] sm:$0xf]
      %v2029 = vld [vmem:[%s12 + $0x24] sm:$0xf]
      %v2030 = vld [vmem:[%s12 + $0x28] sm:$0xf]
      %v2031 = vld [vmem:[%s12 + $0x2c] sm:$0xf]
      %v2032 = vld [vmem:[%s12 + $0x30] sm:$0xf]
      %v2033 = vld [vmem:[%s12 + $0x34] sm:$0xf]
      %v2034 = vld [vmem:[%s12 + $0x38] sm:$0xf]
      %v2035 = vld [vmem:[%s12 + $0x3c] sm:$0xf]
      %v2036 = vld [vmem:[%s12 + $0x40] sm:$0xf]
      %v2037 = vld [vmem:[%s12 + $0x44] sm:$0xf]
      %v2038 = vld [vmem:[%s12 + $0x48] sm:$0xf]
      %v2039 = vld [vmem:[%s12 + $0x4c] sm:$0xf]
      %v2040 = vld [vmem:[%s12 + $0x50] sm:$0xf]
      %v2041 = vld [vmem:[%s12 + $0x54] sm:$0xf]
      %v2042 = vld [vmem:[%s12 + $0x58] sm:$0xf]
      %v2043 = vld [vmem:[%s12 + $0x5c] sm:$0xf]
      %v2044 = vld [vmem:[%s13] sm:$0x1]
      %v2046 = vlaneseq
      %v2047 = vshrl.u32 %v2046, 7
      %v2048 = vsub.s32 0, %v2047
      %v2049 = vrot.slane %v2044, %v2048
      %v2075 = vunpack.c.l.b16 %v2020
      %v2076 = vunpack.c.l.b16 %v2021
      %v2077 = vunpack.c.l.b16 %v2022
      %v2078 = vunpack.c.l.b16 %v2023
      %v2079 = vunpack.c.l.b16 %v2024
      %v2080 = vunpack.c.l.b16 %v2025
      %v2081 = vunpack.c.l.b16 %v2026
      %v2082 = vunpack.c.l.b16 %v2027
      %v2083 = vunpack.c.l.b16 %v2028
      %v2084 = vunpack.c.l.b16 %v2029
      %v2085 = vunpack.c.l.b16 %v2030
      %v2086 = vunpack.c.l.b16 %v2031
      %v2087 = vunpack.c.l.b16 %v2032
      %v2088 = vunpack.c.l.b16 %v2033
      %v2089 = vunpack.c.l.b16 %v2034
      %v2090 = vunpack.c.l.b16 %v2035
      %v2091 = vunpack.c.l.b16 %v2036
      %v2092 = vunpack.c.l.b16 %v2037
      %v2093 = vunpack.c.l.b16 %v2038
      %v2094 = vunpack.c.l.b16 %v2039
      %v2095 = vunpack.c.l.b16 %v2040
      %v2096 = vunpack.c.l.b16 %v2041
      %v2097 = vunpack.c.l.b16 %v2042
      %v2098 = vunpack.c.l.b16 %v2043
      %v2099 = vpack.c.b16 %v2076, %v2075
      %v2100 = vpack.c.b16 %v2078, %v2077
      %v2101 = vpack.c.b16 %v2080, %v2079
      %v2102 = vpack.c.b16 %v2082, %v2081
      %v2103 = vpack.c.b16 %v2084, %v2083
      %v2104 = vpack.c.b16 %v2086, %v2085
      %v2105 = vpack.c.b16 %v2088, %v2087
      %v2106 = vpack.c.b16 %v2090, %v2089
      %v2107 = vpack.c.b16 %v2092, %v2091
      %v2108 = vpack.c.b16 %v2094, %v2093
      %v2109 = vpack.c.b16 %v2096, %v2095
      %v2110 = vpack.c.b16 %v2098, %v2097
      %v2124 = vsel %vm1888, %v2019, 0
      %2126 = vmatprep.subr.bf16.mxu0 0
      %2127 = vmatpush1.bf16.msra.mxu0 %v2106
      %2128 = vmatprep.subr.bf16.mxu0 0
      %2129 = vmatpush1.bf16.msra.mxu0 %v2105
      %2130 = vmatprep.subr.bf16.mxu0 0
      %2131 = vmatpush1.bf16.msra.mxu0 %v2104
      %2132 = vmatprep.subr.bf16.mxu0 0
      %2133 = vmatpush1.bf16.msra.mxu0 %v2103
      %2134 = vmatprep.subr.bf16.mxu0 0
      %2135 = vmatpush1.bf16.msra.mxu0 %v2102
      %2136 = vmatprep.subr.bf16.mxu0 0
      %2137 = vmatpush1.bf16.msra.mxu0 %v2101
      %2138 = vmatprep.subr.bf16.mxu0 0
      %2139 = vmatpush1.bf16.msra.mxu0 %v2100
      %2140 = vmatprep.subr.bf16.mxu0 0
      %2141 = vmatpush1.bf16.msra.mxu0 %v2099
      %2142 = vmatprep.subr.bf16.mxu0 0
      %2143 = vmatpush2.bf16.msra.mxu0 0
      %2144 = vmatprep.subr.bf16.mxu0 0
      %2145 = vmatpush2.bf16.msra.mxu0 0
      %2146 = vmatprep.subr.bf16.mxu0 0
      %2147 = vmatpush2.bf16.msra.mxu0 0
      %2148 = vmatprep.subr.bf16.mxu0 0
      %2149 = vmatpush2.bf16.msra.mxu0 0
      %2150 = vmatprep.subr.bf16.mxu0 0
      %2151 = vmatpush2.bf16.msra.mxu0 %v2110
      %2152 = vmatprep.subr.bf16.mxu0 0
      %2153 = vmatpush2.bf16.msra.mxu0 %v2109
      %2154 = vmatprep.subr.bf16.mxu0 0
      %2155 = vmatpush2.bf16.msra.mxu0 %v2108
      %2156 = vmatprep.subr.bf16.mxu0 0
      %2157 = vmatpush2.bf16.msra.mxu0 %v2107
      %2158 = vmatprep.mubr.bf16.mxu0 %v2124
      %2159 = vmatmul.mubr.bf16.gmra.mxu0 %v2018
      %v2160 = vpop.f32.mrf.mxu0
      %v2161 = vadd.f32 %v2049, %v2160
      %v2162 = vpop.f32.mrf.mxu0
      %v2163 = vpop.f32.mrf.mxu0
      %v2164 = vadd.f32 %v2049, %v2163
      %v2165 = vpop.f32.mrf.mxu0
      %2166 = vdwg.mxu0
      %v2167 = vsel %vm1828, %v2161, 0.0
      %v2168 = vsel %vm1829, %v2164, 0.0
      %v2169 = vadd.f32 %v1822, %v2167
      %v2170 = vadd.f32 %v1823, %v2168
      %v2171 = vld [vmem:[%s14] sm:$0x1]
      %v2172 = vld [vmem:[%s15] sm:$0x1]
      %v2173 = vsel %vm617, %v2169, 0.0
      %2174 = vadd.xlane.f32.xlu0 %v2173
      %v2175 = vpop.xlane.xlu0 %2174
      %v2176 = vsel %vm617, %v2170, 0.0
      %2177 = vadd.xlane.f32.xlu0 %v2176
      %v2178 = vpop.xlane.xlu0 %2177
      %v2179 = vmul.f32 %v2175, %v1787
      %v2180 = vmul.f32 %v2178, %v1787
      %v2181 = vsub.f32 %v2169, %v2179
      %v2182 = vsub.f32 %v2170, %v2180
      %v2183 = vmul.f32 %v2181, %v2181
      %v2184 = vmul.f32 %v2182, %v2182
      %v2185 = vsel %vm617, %v2183, 0.0
      %2186 = vadd.xlane.f32.xlu0 %v2185
      %v2187 = vpop.xlane.xlu0 %2186
      %v2188 = vsel %vm617, %v2184, 0.0
      %2189 = vadd.xlane.f32.xlu0 %v2188
      %v2190 = vpop.xlane.xlu0 %2189
      %v2191 = vmul.f32 %v2187, %v1787
      %v2192 = vmul.f32 %v2190, %v1787
      %v2193 = vadd.f32 %v2191, 1e-05
      %v2194 = vadd.f32 %v2192, 1e-05
      %v2195 = vrsqrt.pop %v2193
      %v2196 = vrsqrt.pop %v2194
      %v2197 = vmul.f32 %v2181, %v2195
      %v2198 = vmul.f32 %v2182, %v2196
      %v2200 = vlaneseq
      %v2201 = vshrl.u32 %v2200, 7
      %v2202 = vsub.s32 0, %v2201
      %v2203 = vrot.slane %v2171, %v2202
      %v2205 = vmul.f32 %v2197, %v2203
      %v2206 = vmul.f32 %v2198, %v2203
      %v2208 = vlaneseq
      %v2209 = vshrl.u32 %v2208, 7
      %v2210 = vsub.s32 0, %v2209
      %v2211 = vrot.slane %v2172, %v2210
      %v2213 = vadd.f32 %v2205, %v2211
      %v2214 = vadd.f32 %v2206, %v2211
      %v2215 = vpack.c.bf16 %v2214, %v2213
      %v2217 = vunpack.c.l.b16 %v2215
      %v2218 = vunpack.c.h.b16 %v2215
      %v2219 = vpack.c.b16 %v2217, %v2217
      %v2220 = vpack.c.b16 %v2218, %v2218
      %vm2223 = vcmask 257024
      %2224 = vst.msk [vmem:[%s501] sm:$0xf] %vm2223, %v2219
      %2225 = vst.msk [vmem:[%s501 + $0x4] sm:$0xf] %vm2223, %v2220
      %p2226 = scmp.lt.s32.totalorder %s33, 1
      %s2227 = scalar_select %p2226, %s33, 1
      %s2228 = smul.addr %s2227, 2
      %s2229 = smul.addr %s2228, 4
      %s2230 = scalar_lea.vmem %s16, %s2229
      // Predicated region
      $region81: #{text_encoder_forward.3} parent=79 // pred_check
        %p2231 = pneg %p371
      $region82: #{text_encoder_forward.3} parent=79 // pred_check_branch
        %2233 = sbr.rel (%p2231) target = $region84
      $region83: #{text_encoder_forward.3} parent=79 // pred_region
        _
      $region84: #{text_encoder_forward.3} parent=79 // pred_fallthru
        _
    $region80: #{text_encoder_forward.3} parent=5 // pred_fallthru
      _
    %p2234 = scmp.le.s32.totalorder 2, %s28
    // Predicated region
    $region85: #{text_encoder_forward.3} parent=5 // pred_check
      %p2235 = pneg %p2234
    $region86: #{text_encoder_forward.3} parent=5 // pred_check_branch
      %2237 = sbr.rel (%p2235) target = $region88
    $region87: #{text_encoder_forward.3} parent=5 // pred_region
      %s2238 = ssub.s32 %s28, 2
      // Predicated region
      $region89: #{text_encoder_forward.3} parent=87 // pred_check
        %p2239 = pneg %p377
      $region90: #{text_encoder_forward.3} parent=87 // pred_check_branch
        %2241 = sbr.rel (%p2239) target = $region92
      $region91: #{text_encoder_forward.3} parent=87 // pred_region
        %p2242 = scmp.lt.s32.totalorder %s34, 1
        %s2243 = scalar_select %p2242, %s34, 1
        %s2244 = smul.addr %s2243, 2
        %s2245 = smul.addr %s2244, 4
        %s2246 = scalar_lea.vmem %s16, %s2245
      $region92: #{text_encoder_forward.3} parent=87 // pred_fallthru
        _
    $region88: #{text_encoder_forward.3} parent=5 // pred_fallthru
      _
  $region6: #{text_encoder_forward.3} parent=0 // loop_footer
    %s32 = sadd.s32 1, %s28
  $region7: #{text_encoder_forward.3} parent=0 // loop_footer_branch
    %27 = sbr.rel target = $region3
  $region8: #{text_encoder_forward.3} parent=0 // loop_exit
    _

</llo_original>
